<compile_context>
chip_gen: v7x
topology: tpu7x:2x2x1
jax: 0.10.0
libtpu: 0.0.40
codegen_flags: <defaults>
</compile_context>

<pallas_src>
import math
import jax
import jax.numpy as jnp
from jax.experimental import pallas as pl
from jax.experimental.pallas import tpu as pltpu


def _round_up(x, m):
    return ((x + m - 1) // m) * m


# ----------------------------------------------------------------------------
# Fused kernel: 4 x (3x3 conv stride-2 pad-1 + bias + ReLU), one batch element
# per grid step.  Activations stay in VMEM between layers.
# ----------------------------------------------------------------------------
def _make_fused_backbone_kernel(layer_dims):
    """layer_dims: list of (cin, h_in, w_in_pad, cout, oh, ow_pad)."""
    n_layers = len(layer_dims)

    def kernel(*refs):
        x_ref = refs[0]
        const_refs = refs[1:1 + 3 * n_layers]
        out_refs = refs[1 + 3 * n_layers:]

        a = x_ref[0]                                       # (Cin*H, Win) bf16
        for l, (cin, h_in, w_in, cout, oh, ow) in enumerate(layer_dims):
            sw_ref, wh_ref, b_ref = const_refs[3 * l:3 * l + 3]
            t = None
            for dx in range(3):                            # static unroll: 3 W-taps
                # W-axis stride-2 sample via 0/1 selection matmul (MXU).
                r = jnp.dot(a, sw_ref[dx],
                            preferred_element_type=jnp.float32)      # (Cin*H, OWp)
                r = r.astype(jnp.bfloat16)                 # exact: entries are bf16 activations
                # H-axis sample + (cin, dy) contraction folded into WH (MXU).
                p = jnp.dot(wh_ref[dx], r,
                            preferred_element_type=jnp.float32)      # (Cout*OH, OWp)
                t = p if t is None else t + p
            y = jnp.maximum(t + b_ref[...], 0.0)           # bias (Cout*OH,1) broadcast + ReLU
            out_refs[l][0] = y                             # f32 feature writeback
            a = y.astype(jnp.bfloat16)                     # next layer input (stays on-chip)

    return kernel


# ----------------------------------------------------------------------------
# Host-side constant construction for one layer (done once; a few KB each).
# ----------------------------------------------------------------------------
def _layer_constants(w, b, h_in, w_in_real, w_in_pad):
    """Build the selection / weight matrices for a stride-2 pad-1 3x3 conv.

    Returns (SW, WH, bias_col, (cout, oh, ow_real, ow_pad)):
      SW  (3, w_in_pad, ow_pad) bf16 : SW[dx, w, ox] = [w == 2*ox + dx - 1][ox < ow_real]
      WH  (3, cout*oh, cin*h_in) bf16: WH[dx, co*oh+oy, ci*h_in+h] = w[co,ci,h-2oy+1,dx]
      bias_col (cout*oh, 1) f32
    Zero padding of the conv is encoded as all-zero rows/columns.
    """
    cout, cin, kh, kw = w.shape
    assert (kh, kw) == (3, 3)
    oh = (h_in + 2 - 3) // 2 + 1
    ow_real = (w_in_real + 2 - 3) // 2 + 1
    ow_pad = _round_up(ow_real, 8)

    wb = w.astype(jnp.bfloat16).astype(jnp.float32)
    bb = b.astype(jnp.bfloat16).astype(jnp.float32)

    widx = jnp.arange(w_in_pad)[:, None]                    # (Wp, 1)
    ox = jnp.arange(ow_pad)[None, :]                        # (1, OWp)
    sw = jnp.stack(
        [((widx == 2 * ox + dx - 1) & (ox < ow_real)).astype(jnp.bfloat16)
         for dx in range(3)], axis=0)                       # (3, Wp, OWp)

    oy = jnp.arange(oh)[:, None]                            # (OH, 1)
    hh = jnp.arange(h_in)[None, :]                          # (1, H)
    dy = hh - 2 * oy + 1                                     # (OH, H)
    valid = (dy >= 0) & (dy <= 2)
    dyc = jnp.clip(dy, 0, 2)
    wh_parts = []
    for dx in range(3):
        wdx = wb[:, :, :, dx]                                # (Cout, Cin, 3)
        sel = jnp.where(valid[None, None], wdx[:, :, dyc], 0.0)  # (Cout, Cin, OH, H)
        sel = jnp.transpose(sel, (0, 2, 1, 3)).reshape(cout * oh, cin * h_in)
        wh_parts.append(sel)
    wh = jnp.stack(wh_parts, axis=0).astype(jnp.bfloat16)    # (3, Cout*OH, Cin*H)

    bias_col = jnp.repeat(bb, oh)[:, None]                   # (Cout*OH, 1) f32
    return sw, wh, bias_col, (cout, oh, ow_real, ow_pad)


# ----------------------------------------------------------------------------
# Fused backbone forward: ONE pallas_call for all layers.
# ----------------------------------------------------------------------------
def _backbone_fused_forward(params, x_nchw):
    B, cin0, H, W = x_nchw.shape

    consts, in_specs = [], []
    out_shapes, out_specs = [], []
    layer_dims, layer_real = [], []

    in_specs.append(pl.BlockSpec((1, cin0 * H, W), lambda b: (b, 0, 0)))

    c, h, w_real, w_pad = cin0, H, W, W
    for (wgt, bias) in params:
        sw, wh, bcol, (cout, oh, ow_real, ow_pad) = _layer_constants(
            wgt, bias, h, w_real, w_pad)
        consts += [sw, wh, bcol]
        in_specs += [
            pl.BlockSpec(sw.shape, lambda b: (0, 0, 0)),     # resident constants
            pl.BlockSpec(wh.shape, lambda b: (0, 0, 0)),
            pl.BlockSpec(bcol.shape, lambda b: (0, 0)),
        ]
        layer_dims.append((c, h, w_pad, cout, oh, ow_pad))
        layer_real.append((cout, oh, ow_real))
        out_shapes.append(jax.ShapeDtypeStruct((B, cout * oh, ow_pad), jnp.float32))
        out_specs.append(pl.BlockSpec((1, cout * oh, ow_pad), lambda b: (b, 0, 0)))
        c, h, w_real, w_pad = cout, oh, ow_real, ow_pad

    xin = x_nchw.astype(jnp.bfloat16).reshape(B, cin0 * H, W)

    outs = pl.pallas_call(
        _make_fused_backbone_kernel(layer_dims),
        grid=(B,),
        out_shape=tuple(out_shapes),
        in_specs=in_specs,
        out_specs=out_specs,
        compiler_params=pltpu.CompilerParams(
            dimension_semantics=("parallel",)),
    )(xin, *consts)

    feats = {}
    for i in range(len(params)):
        cout, oh, ow_real = layer_real[i]
        feats[f'layer{i + 1}'] = outs[i][:, :, :ow_real].reshape(B, cout, oh, ow_real)
    return feats


backbone_fused_forward = jax.jit(_backbone_fused_forward)


# ----------------------------------------------------------------------------
# Synthetic backbone parameters (deterministic; num_channels = 32)
# ----------------------------------------------------------------------------
def init_backbone_params(key, cin=3, widths=(8, 16, 32, 32)):
    params = []
    for cout in widths:
        key, kw_, kb_ = jax.random.split(key, 3)
        fan_in = cin * 9
        w = jax.random.normal(kw_, (cout, cin, 3, 3), jnp.float32) * math.sqrt(2.0 / fan_in)
        b = jax.random.normal(kb_, (cout,), jnp.float32) * 0.01
        params.append((w, b))
        cin = cout
    return params


# ----------------------------------------------------------------------------
# Mask resize: F.interpolate(m[None].float(), size).to(bool)[0], mode='nearest'
# (src = floor(dst * in / out)).  Tiny static bool gather -> JAX glue.
# ----------------------------------------------------------------------------
def _interpolate_mask_nearest(mask_bool, oh, ow):
    B, H, W = mask_bool.shape
    idx_h = (jnp.arange(oh) * H) // oh
    idx_w = (jnp.arange(ow) * W) // ow
    m = mask_bool.astype(jnp.float32)
    m = m[:, idx_h, :][:, :, idx_w]
    return m.astype(jnp.bool_)


# ----------------------------------------------------------------------------
# BackboneBase.forward equivalent
# ----------------------------------------------------------------------------
def backbone_base_forward(params, x_nchw, mask, return_interm_layers=False):
    feats = backbone_fused_forward(params, x_nchw)   # all layers, one kernel launch

    if return_interm_layers:
        return_layers = {'layer1': '0', 'layer2': '1', 'layer3': '2', 'layer4': '3'}
    else:
        return_layers = {'layer4': '0'}

    out = {}
    cur_mask = mask   # the spec re-assigns the local `mask`, so interpolations chain
    for lname, oname in return_layers.items():
        f = feats[lname]
        cur_mask = _interpolate_mask_nearest(cur_mask, f.shape[-2], f.shape[-1])
        out[oname] = (f, cur_mask)
    return out


# ----------------------------------------------------------------------------
# Reference for one layer: same arithmetic as the kernel path (bf16-rounded
# inputs/weights/bias, f32 accumulation), so per-layer diffs are only
# accumulation-order noise and a tight tolerance applies.
# ----------------------------------------------------------------------------
def _ref_conv_layer(x_nchw_f32, w, b):
    xb = x_nchw_f32.astype(jnp.bfloat16).astype(jnp.float32)
    wb = w.astype(jnp.bfloat16).astype(jnp.float32)
    bb = b.astype(jnp.bfloat16).astype(jnp.float32)
    y = jax.lax.conv_general_dilated(
        xb, wb, window_strides=(2, 2), padding=((1, 1), (1, 1)),
        dimension_numbers=('NCHW', 'OIHW', 'NCHW'),
        precision=jax.lax.Precision.HIGHEST)
    return jnp.maximum(y + bb[None, :, None, None], 0.0)


if __name__ == "__main__":
    key = jax.random.PRNGKey(0)
    kx, km, kp = jax.random.split(key, 3)

    B, C, H, W = 2, 3, 32, 32
    x = jax.random.normal(kx, (B, C, H, W), jnp.float32)          # NCHW image batch
    mask = jax.random.uniform(km, (B, H, W)) > 0.5                # bool padding mask
    params = init_backbone_params(kp)                             # num_channels = 32

    # Module-level forward (return_interm_layers=False -> {'layer4': '0'})
    out = backbone_base_forward(params, x, mask, return_interm_layers=False)
    feat, fmask = out['0']
    jax.block_until_ready(feat)
    jax.block_until_ready(fmask)

    # Correctness: chained per-layer check (each fused-kernel layer vs f32
    # lax.conv on the same inputs -> only accumulation-order differences).
    out_all = backbone_base_forward(params, x, mask, return_interm_layers=True)
    prev = x.astype(jnp.float32)
    for idx, (w, b) in enumerate(params):
        got = out_all[str(idx)][0]
        ref_l = _ref_conv_layer(prev, w, b)
        err = float(jnp.max(jnp.abs(got - ref_l)))
        assert jnp.allclose(got, ref_l, rtol=1e-4, atol=1e-4), (idx, err)
        prev = got

    assert feat.shape == (B, 32, 2, 2), feat.shape
    assert fmask.shape == (B, 2, 2) and fmask.dtype == jnp.bool_
    assert jnp.allclose(feat, out_all['3'][0], rtol=1e-5, atol=1e-6)

    print("KERNEL_OK")
</pallas_src>

<mosaic_0001>
module attributes {stable_mosaic.version = 11 : i64} {
  func.func @kernel(%arg0: i32, %arg1: memref<1x96x32xbf16, #tpu.memory_space<vmem>>, %arg2: memref<3x32x16xbf16, #tpu.memory_space<vmem>>, %arg3: memref<3x128x96xbf16, #tpu.memory_space<vmem>>, %arg4: memref<128x1xf32, #tpu.memory_space<vmem>>, %arg5: memref<3x16x8xbf16, #tpu.memory_space<vmem>>, %arg6: memref<3x128x128xbf16, #tpu.memory_space<vmem>>, %arg7: memref<128x1xf32, #tpu.memory_space<vmem>>, %arg8: memref<3x8x8xbf16, #tpu.memory_space<vmem>>, %arg9: memref<3x128x128xbf16, #tpu.memory_space<vmem>>, %arg10: memref<128x1xf32, #tpu.memory_space<vmem>>, %arg11: memref<3x8x8xbf16, #tpu.memory_space<vmem>>, %arg12: memref<3x64x128xbf16, #tpu.memory_space<vmem>>, %arg13: memref<64x1xf32, #tpu.memory_space<vmem>>, %arg14: memref<1x128x16xf32, #tpu.memory_space<vmem>>, %arg15: memref<1x128x8xf32, #tpu.memory_space<vmem>>, %arg16: memref<1x128x8xf32, #tpu.memory_space<vmem>>, %arg17: memref<1x64x8xf32, #tpu.memory_space<vmem>>) attributes {dimension_semantics = [#tpu.dimension_semantics<parallel>], iteration_bounds = array<i64: 2>, scalar_prefetch = 0 : i64, scratch_operands = 0 : i64, tpu.core_type = #tpu.core_type<tc>, window_params = [{transform_indices = @transform_0, window_bounds = array<i64: 1, 96, 32>}, {pipeline_mode = #tpu.pipeline_mode<synchronous>, transform_indices = @transform_1, window_bounds = array<i64: 3, 32, 16>}, {pipeline_mode = #tpu.pipeline_mode<synchronous>, transform_indices = @transform_2, window_bounds = array<i64: 3, 128, 96>}, {pipeline_mode = #tpu.pipeline_mode<synchronous>, transform_indices = @transform_3, window_bounds = array<i64: 128, 1>}, {pipeline_mode = #tpu.pipeline_mode<synchronous>, transform_indices = @transform_4, window_bounds = array<i64: 3, 16, 8>}, {pipeline_mode = #tpu.pipeline_mode<synchronous>, transform_indices = @transform_5, window_bounds = array<i64: 3, 128, 128>}, {pipeline_mode = #tpu.pipeline_mode<synchronous>, transform_indices = @transform_6, window_bounds = array<i64: 128, 1>}, {pipeline_mode = #tpu.pipeline_mode<synchronous>, transform_indices = @transform_7, window_bounds = array<i64: 3, 8, 8>}, {pipeline_mode = #tpu.pipeline_mode<synchronous>, transform_indices = @transform_8, window_bounds = array<i64: 3, 128, 128>}, {pipeline_mode = #tpu.pipeline_mode<synchronous>, transform_indices = @transform_9, window_bounds = array<i64: 128, 1>}, {pipeline_mode = #tpu.pipeline_mode<synchronous>, transform_indices = @transform_10, window_bounds = array<i64: 3, 8, 8>}, {pipeline_mode = #tpu.pipeline_mode<synchronous>, transform_indices = @transform_11, window_bounds = array<i64: 3, 64, 128>}, {pipeline_mode = #tpu.pipeline_mode<synchronous>, transform_indices = @transform_12, window_bounds = array<i64: 64, 1>}, {transform_indices = @transform_13, window_bounds = array<i64: 1, 128, 16>}, {transform_indices = @transform_14, window_bounds = array<i64: 1, 128, 8>}, {transform_indices = @transform_15, window_bounds = array<i64: 1, 128, 8>}, {transform_indices = @transform_16, window_bounds = array<i64: 1, 64, 8>}]} {
    %c0 = arith.constant 0 : index
    %c0_0 = arith.constant 0 : index
    %c0_1 = arith.constant 0 : index
    %0 = vector.load %arg1[%c0, %c0_0, %c0_1] : memref<1x96x32xbf16, #tpu.memory_space<vmem>>, vector<1x96x32xbf16>
    %1 = vector.shape_cast %0 : vector<1x96x32xbf16> to vector<96x32xbf16>
    %c0_2 = arith.constant 0 : index
    %c0_3 = arith.constant 0 : index
    %c0_4 = arith.constant 0 : index
    %2 = vector.load %arg2[%c0_2, %c0_3, %c0_4] : memref<3x32x16xbf16, #tpu.memory_space<vmem>>, vector<1x32x16xbf16>
    %3 = vector.shape_cast %2 : vector<1x32x16xbf16> to vector<32x16xbf16>
    %cst = arith.constant dense<0.000000e+00> : vector<96x16xf32>
    %4 = tpu.matmul %1, %3, %cst {dimension_numbers = #tpu.dot_dimension_numbers<[1], [0], [0], [1], [0, 0, 1, 1], [], []>} : vector<96x32xbf16>, vector<32x16xbf16>, vector<96x16xf32> -> vector<96x16xf32>
    %5 = arith.truncf %4 : vector<96x16xf32> to vector<96x16xbf16>
    %c0_5 = arith.constant 0 : index
    %c0_6 = arith.constant 0 : index
    %c0_7 = arith.constant 0 : index
    %6 = vector.load %arg3[%c0_5, %c0_6, %c0_7] : memref<3x128x96xbf16, #tpu.memory_space<vmem>>, vector<1x128x96xbf16>
    %7 = vector.shape_cast %6 : vector<1x128x96xbf16> to vector<128x96xbf16>
    %cst_8 = arith.constant dense<0.000000e+00> : vector<128x16xf32>
    %8 = tpu.matmul %7, %5, %cst_8 {dimension_numbers = #tpu.dot_dimension_numbers<[1], [0], [0], [1], [0, 0, 1, 1], [], []>} : vector<128x96xbf16>, vector<96x16xbf16>, vector<128x16xf32> -> vector<128x16xf32>
    %c1 = arith.constant 1 : index
    %c0_9 = arith.constant 0 : index
    %c0_10 = arith.constant 0 : index
    %9 = vector.load %arg2[%c1, %c0_9, %c0_10] : memref<3x32x16xbf16, #tpu.memory_space<vmem>>, vector<1x32x16xbf16>
    %10 = vector.shape_cast %9 : vector<1x32x16xbf16> to vector<32x16xbf16>
    %cst_11 = arith.constant dense<0.000000e+00> : vector<96x16xf32>
    %11 = tpu.matmul %1, %10, %cst_11 {dimension_numbers = #tpu.dot_dimension_numbers<[1], [0], [0], [1], [0, 0, 1, 1], [], []>} : vector<96x32xbf16>, vector<32x16xbf16>, vector<96x16xf32> -> vector<96x16xf32>
    %12 = arith.truncf %11 : vector<96x16xf32> to vector<96x16xbf16>
    %c1_12 = arith.constant 1 : index
    %c0_13 = arith.constant 0 : index
    %c0_14 = arith.constant 0 : index
    %13 = vector.load %arg3[%c1_12, %c0_13, %c0_14] : memref<3x128x96xbf16, #tpu.memory_space<vmem>>, vector<1x128x96xbf16>
    %14 = vector.shape_cast %13 : vector<1x128x96xbf16> to vector<128x96xbf16>
    %cst_15 = arith.constant dense<0.000000e+00> : vector<128x16xf32>
    %15 = tpu.matmul %14, %12, %cst_15 {dimension_numbers = #tpu.dot_dimension_numbers<[1], [0], [0], [1], [0, 0, 1, 1], [], []>} : vector<128x96xbf16>, vector<96x16xbf16>, vector<128x16xf32> -> vector<128x16xf32>
    %16 = arith.addf %8, %15 : vector<128x16xf32>
    %c2 = arith.constant 2 : index
    %c0_16 = arith.constant 0 : index
    %c0_17 = arith.constant 0 : index
    %17 = vector.load %arg2[%c2, %c0_16, %c0_17] : memref<3x32x16xbf16, #tpu.memory_space<vmem>>, vector<1x32x16xbf16>
    %18 = vector.shape_cast %17 : vector<1x32x16xbf16> to vector<32x16xbf16>
    %cst_18 = arith.constant dense<0.000000e+00> : vector<96x16xf32>
    %19 = tpu.matmul %1, %18, %cst_18 {dimension_numbers = #tpu.dot_dimension_numbers<[1], [0], [0], [1], [0, 0, 1, 1], [], []>} : vector<96x32xbf16>, vector<32x16xbf16>, vector<96x16xf32> -> vector<96x16xf32>
    %20 = arith.truncf %19 : vector<96x16xf32> to vector<96x16xbf16>
    %c2_19 = arith.constant 2 : index
    %c0_20 = arith.constant 0 : index
    %c0_21 = arith.constant 0 : index
    %21 = vector.load %arg3[%c2_19, %c0_20, %c0_21] : memref<3x128x96xbf16, #tpu.memory_space<vmem>>, vector<1x128x96xbf16>
    %22 = vector.shape_cast %21 : vector<1x128x96xbf16> to vector<128x96xbf16>
    %cst_22 = arith.constant dense<0.000000e+00> : vector<128x16xf32>
    %23 = tpu.matmul %22, %20, %cst_22 {dimension_numbers = #tpu.dot_dimension_numbers<[1], [0], [0], [1], [0, 0, 1, 1], [], []>} : vector<128x96xbf16>, vector<96x16xbf16>, vector<128x16xf32> -> vector<128x16xf32>
    %24 = arith.addf %16, %23 : vector<128x16xf32>
    %c0_23 = arith.constant 0 : index
    %c0_24 = arith.constant 0 : index
    %25 = vector.load %arg4[%c0_23, %c0_24] : memref<128x1xf32, #tpu.memory_space<vmem>>, vector<128x1xf32>
    %26 = vector.broadcast %25 : vector<128x1xf32> to vector<128x16xf32>
    %27 = arith.addf %24, %26 : vector<128x16xf32>
    %cst_25 = arith.constant 0.000000e+00 : f32
    %28 = vector.broadcast %cst_25 : f32 to vector<128x16xf32>
    %29 = arith.maximumf %27, %28 : vector<128x16xf32>
    %c0_26 = arith.constant 0 : index
    %c0_27 = arith.constant 0 : index
    %c0_28 = arith.constant 0 : index
    %30 = vector.load %arg14[%c0_26, %c0_27, %c0_28] : memref<1x128x16xf32, #tpu.memory_space<vmem>>, vector<1x128x16xf32>
    %31 = vector.shape_cast %30 : vector<1x128x16xf32> to vector<128x16xf32>
    %32 = vector.shape_cast %29 : vector<128x16xf32> to vector<1x128x16xf32>
    tpu.vector_store %arg14[%c0_26, %c0_27, %c0_28], %32 {strides = array<i32>} : memref<1x128x16xf32, #tpu.memory_space<vmem>>, vector<1x128x16xf32>,
    %33 = arith.truncf %29 : vector<128x16xf32> to vector<128x16xbf16>
    %c0_29 = arith.constant 0 : index
    %c0_30 = arith.constant 0 : index
    %c0_31 = arith.constant 0 : index
    %34 = vector.load %arg5[%c0_29, %c0_30, %c0_31] : memref<3x16x8xbf16, #tpu.memory_space<vmem>>, vector<1x16x8xbf16>
    %35 = vector.shape_cast %34 : vector<1x16x8xbf16> to vector<16x8xbf16>
    %cst_32 = arith.constant dense<0.000000e+00> : vector<128x8xf32>
    %36 = tpu.matmul %33, %35, %cst_32 {dimension_numbers = #tpu.dot_dimension_numbers<[1], [0], [0], [1], [0, 0, 1, 1], [], []>} : vector<128x16xbf16>, vector<16x8xbf16>, vector<128x8xf32> -> vector<128x8xf32>
    %37 = arith.truncf %36 : vector<128x8xf32> to vector<128x8xbf16>
    %c0_33 = arith.constant 0 : index
    %c0_34 = arith.constant 0 : index
    %c0_35 = arith.constant 0 : index
    %38 = vector.load %arg6[%c0_33, %c0_34, %c0_35] : memref<3x128x128xbf16, #tpu.memory_space<vmem>>, vector<1x128x128xbf16>
    %39 = vector.shape_cast %38 : vector<1x128x128xbf16> to vector<128x128xbf16>
    %cst_36 = arith.constant dense<0.000000e+00> : vector<128x8xf32>
    %40 = tpu.matmul %39, %37, %cst_36 {dimension_numbers = #tpu.dot_dimension_numbers<[1], [0], [0], [1], [0, 0, 1, 1], [], []>} : vector<128x128xbf16>, vector<128x8xbf16>, vector<128x8xf32> -> vector<128x8xf32>
    %c1_37 = arith.constant 1 : index
    %c0_38 = arith.constant 0 : index
    %c0_39 = arith.constant 0 : index
    %41 = vector.load %arg5[%c1_37, %c0_38, %c0_39] : memref<3x16x8xbf16, #tpu.memory_space<vmem>>, vector<1x16x8xbf16>
    %42 = vector.shape_cast %41 : vector<1x16x8xbf16> to vector<16x8xbf16>
    %cst_40 = arith.constant dense<0.000000e+00> : vector<128x8xf32>
    %43 = tpu.matmul %33, %42, %cst_40 {dimension_numbers = #tpu.dot_dimension_numbers<[1], [0], [0], [1], [0, 0, 1, 1], [], []>} : vector<128x16xbf16>, vector<16x8xbf16>, vector<128x8xf32> -> vector<128x8xf32>
    %44 = arith.truncf %43 : vector<128x8xf32> to vector<128x8xbf16>
    %c1_41 = arith.constant 1 : index
    %c0_42 = arith.constant 0 : index
    %c0_43 = arith.constant 0 : index
    %45 = vector.load %arg6[%c1_41, %c0_42, %c0_43] : memref<3x128x128xbf16, #tpu.memory_space<vmem>>, vector<1x128x128xbf16>
    %46 = vector.shape_cast %45 : vector<1x128x128xbf16> to vector<128x128xbf16>
    %cst_44 = arith.constant dense<0.000000e+00> : vector<128x8xf32>
    %47 = tpu.matmul %46, %44, %cst_44 {dimension_numbers = #tpu.dot_dimension_numbers<[1], [0], [0], [1], [0, 0, 1, 1], [], []>} : vector<128x128xbf16>, vector<128x8xbf16>, vector<128x8xf32> -> vector<128x8xf32>
    %48 = arith.addf %40, %47 : vector<128x8xf32>
    %c2_45 = arith.constant 2 : index
    %c0_46 = arith.constant 0 : index
    %c0_47 = arith.constant 0 : index
    %49 = vector.load %arg5[%c2_45, %c0_46, %c0_47] : memref<3x16x8xbf16, #tpu.memory_space<vmem>>, vector<1x16x8xbf16>
    %50 = vector.shape_cast %49 : vector<1x16x8xbf16> to vector<16x8xbf16>
    %cst_48 = arith.constant dense<0.000000e+00> : vector<128x8xf32>
    %51 = tpu.matmul %33, %50, %cst_48 {dimension_numbers = #tpu.dot_dimension_numbers<[1], [0], [0], [1], [0, 0, 1, 1], [], []>} : vector<128x16xbf16>, vector<16x8xbf16>, vector<128x8xf32> -> vector<128x8xf32>
    %52 = arith.truncf %51 : vector<128x8xf32> to vector<128x8xbf16>
    %c2_49 = arith.constant 2 : index
    %c0_50 = arith.constant 0 : index
    %c0_51 = arith.constant 0 : index
    %53 = vector.load %arg6[%c2_49, %c0_50, %c0_51] : memref<3x128x128xbf16, #tpu.memory_space<vmem>>, vector<1x128x128xbf16>
    %54 = vector.shape_cast %53 : vector<1x128x128xbf16> to vector<128x128xbf16>
    %cst_52 = arith.constant dense<0.000000e+00> : vector<128x8xf32>
    %55 = tpu.matmul %54, %52, %cst_52 {dimension_numbers = #tpu.dot_dimension_numbers<[1], [0], [0], [1], [0, 0, 1, 1], [], []>} : vector<128x128xbf16>, vector<128x8xbf16>, vector<128x8xf32> -> vector<128x8xf32>
    %56 = arith.addf %48, %55 : vector<128x8xf32>
    %c0_53 = arith.constant 0 : index
    %c0_54 = arith.constant 0 : index
    %57 = vector.load %arg7[%c0_53, %c0_54] : memref<128x1xf32, #tpu.memory_space<vmem>>, vector<128x1xf32>
    %58 = vector.broadcast %57 : vector<128x1xf32> to vector<128x8xf32>
    %59 = arith.addf %56, %58 : vector<128x8xf32>
    %cst_55 = arith.constant 0.000000e+00 : f32
    %60 = vector.broadcast %cst_55 : f32 to vector<128x8xf32>
    %61 = arith.maximumf %59, %60 : vector<128x8xf32>
    %c0_56 = arith.constant 0 : index
    %c0_57 = arith.constant 0 : index
    %c0_58 = arith.constant 0 : index
    %62 = vector.load %arg15[%c0_56, %c0_57, %c0_58] : memref<1x128x8xf32, #tpu.memory_space<vmem>>, vector<1x128x8xf32>
    %63 = vector.shape_cast %62 : vector<1x128x8xf32> to vector<128x8xf32>
    %64 = vector.shape_cast %61 : vector<128x8xf32> to vector<1x128x8xf32>
    tpu.vector_store %arg15[%c0_56, %c0_57, %c0_58], %64 {strides = array<i32>} : memref<1x128x8xf32, #tpu.memory_space<vmem>>, vector<1x128x8xf32>,
    %65 = arith.truncf %61 : vector<128x8xf32> to vector<128x8xbf16>
    %c0_59 = arith.constant 0 : index
    %c0_60 = arith.constant 0 : index
    %c0_61 = arith.constant 0 : index
    %66 = vector.load %arg8[%c0_59, %c0_60, %c0_61] : memref<3x8x8xbf16, #tpu.memory_space<vmem>>, vector<1x8x8xbf16>
    %67 = vector.shape_cast %66 : vector<1x8x8xbf16> to vector<8x8xbf16>
    %cst_62 = arith.constant dense<0.000000e+00> : vector<128x8xf32>
    %68 = tpu.matmul %65, %67, %cst_62 {dimension_numbers = #tpu.dot_dimension_numbers<[1], [0], [0], [1], [0, 0, 1, 1], [], []>} : vector<128x8xbf16>, vector<8x8xbf16>, vector<128x8xf32> -> vector<128x8xf32>
    %69 = arith.truncf %68 : vector<128x8xf32> to vector<128x8xbf16>
    %c0_63 = arith.constant 0 : index
    %c0_64 = arith.constant 0 : index
    %c0_65 = arith.constant 0 : index
    %70 = vector.load %arg9[%c0_63, %c0_64, %c0_65] : memref<3x128x128xbf16, #tpu.memory_space<vmem>>, vector<1x128x128xbf16>
    %71 = vector.shape_cast %70 : vector<1x128x128xbf16> to vector<128x128xbf16>
    %cst_66 = arith.constant dense<0.000000e+00> : vector<128x8xf32>
    %72 = tpu.matmul %71, %69, %cst_66 {dimension_numbers = #tpu.dot_dimension_numbers<[1], [0], [0], [1], [0, 0, 1, 1], [], []>} : vector<128x128xbf16>, vector<128x8xbf16>, vector<128x8xf32> -> vector<128x8xf32>
    %c1_67 = arith.constant 1 : index
    %c0_68 = arith.constant 0 : index
    %c0_69 = arith.constant 0 : index
    %73 = vector.load %arg8[%c1_67, %c0_68, %c0_69] : memref<3x8x8xbf16, #tpu.memory_space<vmem>>, vector<1x8x8xbf16>
    %74 = vector.shape_cast %73 : vector<1x8x8xbf16> to vector<8x8xbf16>
    %cst_70 = arith.constant dense<0.000000e+00> : vector<128x8xf32>
    %75 = tpu.matmul %65, %74, %cst_70 {dimension_numbers = #tpu.dot_dimension_numbers<[1], [0], [0], [1], [0, 0, 1, 1], [], []>} : vector<128x8xbf16>, vector<8x8xbf16>, vector<128x8xf32> -> vector<128x8xf32>
    %76 = arith.truncf %75 : vector<128x8xf32> to vector<128x8xbf16>
    %c1_71 = arith.constant 1 : index
    %c0_72 = arith.constant 0 : index
    %c0_73 = arith.constant 0 : index
    %77 = vector.load %arg9[%c1_71, %c0_72, %c0_73] : memref<3x128x128xbf16, #tpu.memory_space<vmem>>, vector<1x128x128xbf16>
    %78 = vector.shape_cast %77 : vector<1x128x128xbf16> to vector<128x128xbf16>
    %cst_74 = arith.constant dense<0.000000e+00> : vector<128x8xf32>
    %79 = tpu.matmul %78, %76, %cst_74 {dimension_numbers = #tpu.dot_dimension_numbers<[1], [0], [0], [1], [0, 0, 1, 1], [], []>} : vector<128x128xbf16>, vector<128x8xbf16>, vector<128x8xf32> -> vector<128x8xf32>
    %80 = arith.addf %72, %79 : vector<128x8xf32>
    %c2_75 = arith.constant 2 : index
    %c0_76 = arith.constant 0 : index
    %c0_77 = arith.constant 0 : index
    %81 = vector.load %arg8[%c2_75, %c0_76, %c0_77] : memref<3x8x8xbf16, #tpu.memory_space<vmem>>, vector<1x8x8xbf16>
    %82 = vector.shape_cast %81 : vector<1x8x8xbf16> to vector<8x8xbf16>
    %cst_78 = arith.constant dense<0.000000e+00> : vector<128x8xf32>
    %83 = tpu.matmul %65, %82, %cst_78 {dimension_numbers = #tpu.dot_dimension_numbers<[1], [0], [0], [1], [0, 0, 1, 1], [], []>} : vector<128x8xbf16>, vector<8x8xbf16>, vector<128x8xf32> -> vector<128x8xf32>
    %84 = arith.truncf %83 : vector<128x8xf32> to vector<128x8xbf16>
    %c2_79 = arith.constant 2 : index
    %c0_80 = arith.constant 0 : index
    %c0_81 = arith.constant 0 : index
    %85 = vector.load %arg9[%c2_79, %c0_80, %c0_81] : memref<3x128x128xbf16, #tpu.memory_space<vmem>>, vector<1x128x128xbf16>
    %86 = vector.shape_cast %85 : vector<1x128x128xbf16> to vector<128x128xbf16>
    %cst_82 = arith.constant dense<0.000000e+00> : vector<128x8xf32>
    %87 = tpu.matmul %86, %84, %cst_82 {dimension_numbers = #tpu.dot_dimension_numbers<[1], [0], [0], [1], [0, 0, 1, 1], [], []>} : vector<128x128xbf16>, vector<128x8xbf16>, vector<128x8xf32> -> vector<128x8xf32>
    %88 = arith.addf %80, %87 : vector<128x8xf32>
    %c0_83 = arith.constant 0 : index
    %c0_84 = arith.constant 0 : index
    %89 = vector.load %arg10[%c0_83, %c0_84] : memref<128x1xf32, #tpu.memory_space<vmem>>, vector<128x1xf32>
    %90 = vector.broadcast %89 : vector<128x1xf32> to vector<128x8xf32>
    %91 = arith.addf %88, %90 : vector<128x8xf32>
    %cst_85 = arith.constant 0.000000e+00 : f32
    %92 = vector.broadcast %cst_85 : f32 to vector<128x8xf32>
    %93 = arith.maximumf %91, %92 : vector<128x8xf32>
    %c0_86 = arith.constant 0 : index
    %c0_87 = arith.constant 0 : index
    %c0_88 = arith.constant 0 : index
    %94 = vector.load %arg16[%c0_86, %c0_87, %c0_88] : memref<1x128x8xf32, #tpu.memory_space<vmem>>, vector<1x128x8xf32>
    %95 = vector.shape_cast %94 : vector<1x128x8xf32> to vector<128x8xf32>
    %96 = vector.shape_cast %93 : vector<128x8xf32> to vector<1x128x8xf32>
    tpu.vector_store %arg16[%c0_86, %c0_87, %c0_88], %96 {strides = array<i32>} : memref<1x128x8xf32, #tpu.memory_space<vmem>>, vector<1x128x8xf32>,
    %97 = arith.truncf %93 : vector<128x8xf32> to vector<128x8xbf16>
    %c0_89 = arith.constant 0 : index
    %c0_90 = arith.constant 0 : index
    %c0_91 = arith.constant 0 : index
    %98 = vector.load %arg11[%c0_89, %c0_90, %c0_91] : memref<3x8x8xbf16, #tpu.memory_space<vmem>>, vector<1x8x8xbf16>
    %99 = vector.shape_cast %98 : vector<1x8x8xbf16> to vector<8x8xbf16>
    %cst_92 = arith.constant dense<0.000000e+00> : vector<128x8xf32>
    %100 = tpu.matmul %97, %99, %cst_92 {dimension_numbers = #tpu.dot_dimension_numbers<[1], [0], [0], [1], [0, 0, 1, 1], [], []>} : vector<128x8xbf16>, vector<8x8xbf16>, vector<128x8xf32> -> vector<128x8xf32>
    %101 = arith.truncf %100 : vector<128x8xf32> to vector<128x8xbf16>
    %c0_93 = arith.constant 0 : index
    %c0_94 = arith.constant 0 : index
    %c0_95 = arith.constant 0 : index
    %102 = vector.load %arg12[%c0_93, %c0_94, %c0_95] : memref<3x64x128xbf16, #tpu.memory_space<vmem>>, vector<1x64x128xbf16>
    %103 = vector.shape_cast %102 : vector<1x64x128xbf16> to vector<64x128xbf16>
    %cst_96 = arith.constant dense<0.000000e+00> : vector<64x8xf32>
    %104 = tpu.matmul %103, %101, %cst_96 {dimension_numbers = #tpu.dot_dimension_numbers<[1], [0], [0], [1], [0, 0, 1, 1], [], []>} : vector<64x128xbf16>, vector<128x8xbf16>, vector<64x8xf32> -> vector<64x8xf32>
    %c1_97 = arith.constant 1 : index
    %c0_98 = arith.constant 0 : index
    %c0_99 = arith.constant 0 : index
    %105 = vector.load %arg11[%c1_97, %c0_98, %c0_99] : memref<3x8x8xbf16, #tpu.memory_space<vmem>>, vector<1x8x8xbf16>
    %106 = vector.shape_cast %105 : vector<1x8x8xbf16> to vector<8x8xbf16>
    %cst_100 = arith.constant dense<0.000000e+00> : vector<128x8xf32>
    %107 = tpu.matmul %97, %106, %cst_100 {dimension_numbers = #tpu.dot_dimension_numbers<[1], [0], [0], [1], [0, 0, 1, 1], [], []>} : vector<128x8xbf16>, vector<8x8xbf16>, vector<128x8xf32> -> vector<128x8xf32>
    %108 = arith.truncf %107 : vector<128x8xf32> to vector<128x8xbf16>
    %c1_101 = arith.constant 1 : index
    %c0_102 = arith.constant 0 : index
    %c0_103 = arith.constant 0 : index
    %109 = vector.load %arg12[%c1_101, %c0_102, %c0_103] : memref<3x64x128xbf16, #tpu.memory_space<vmem>>, vector<1x64x128xbf16>
    %110 = vector.shape_cast %109 : vector<1x64x128xbf16> to vector<64x128xbf16>
    %cst_104 = arith.constant dense<0.000000e+00> : vector<64x8xf32>
    %111 = tpu.matmul %110, %108, %cst_104 {dimension_numbers = #tpu.dot_dimension_numbers<[1], [0], [0], [1], [0, 0, 1, 1], [], []>} : vector<64x128xbf16>, vector<128x8xbf16>, vector<64x8xf32> -> vector<64x8xf32>
    %112 = arith.addf %104, %111 : vector<64x8xf32>
    %c2_105 = arith.constant 2 : index
    %c0_106 = arith.constant 0 : index
    %c0_107 = arith.constant 0 : index
    %113 = vector.load %arg11[%c2_105, %c0_106, %c0_107] : memref<3x8x8xbf16, #tpu.memory_space<vmem>>, vector<1x8x8xbf16>
    %114 = vector.shape_cast %113 : vector<1x8x8xbf16> to vector<8x8xbf16>
    %cst_108 = arith.constant dense<0.000000e+00> : vector<128x8xf32>
    %115 = tpu.matmul %97, %114, %cst_108 {dimension_numbers = #tpu.dot_dimension_numbers<[1], [0], [0], [1], [0, 0, 1, 1], [], []>} : vector<128x8xbf16>, vector<8x8xbf16>, vector<128x8xf32> -> vector<128x8xf32>
    %116 = arith.truncf %115 : vector<128x8xf32> to vector<128x8xbf16>
    %c2_109 = arith.constant 2 : index
    %c0_110 = arith.constant 0 : index
    %c0_111 = arith.constant 0 : index
    %117 = vector.load %arg12[%c2_109, %c0_110, %c0_111] : memref<3x64x128xbf16, #tpu.memory_space<vmem>>, vector<1x64x128xbf16>
    %118 = vector.shape_cast %117 : vector<1x64x128xbf16> to vector<64x128xbf16>
    %cst_112 = arith.constant dense<0.000000e+00> : vector<64x8xf32>
    %119 = tpu.matmul %118, %116, %cst_112 {dimension_numbers = #tpu.dot_dimension_numbers<[1], [0], [0], [1], [0, 0, 1, 1], [], []>} : vector<64x128xbf16>, vector<128x8xbf16>, vector<64x8xf32> -> vector<64x8xf32>
    %120 = arith.addf %112, %119 : vector<64x8xf32>
    %c0_113 = arith.constant 0 : index
    %c0_114 = arith.constant 0 : index
    %121 = vector.load %arg13[%c0_113, %c0_114] : memref<64x1xf32, #tpu.memory_space<vmem>>, vector<64x1xf32>
    %122 = vector.broadcast %121 : vector<64x1xf32> to vector<64x8xf32>
    %123 = arith.addf %120, %122 : vector<64x8xf32>
    %cst_115 = arith.constant 0.000000e+00 : f32
    %124 = vector.broadcast %cst_115 : f32 to vector<64x8xf32>
    %125 = arith.maximumf %123, %124 : vector<64x8xf32>
    %c0_116 = arith.constant 0 : index
    %c0_117 = arith.constant 0 : index
    %c0_118 = arith.constant 0 : index
    %126 = vector.load %arg17[%c0_116, %c0_117, %c0_118] : memref<1x64x8xf32, #tpu.memory_space<vmem>>, vector<1x64x8xf32>
    %127 = vector.shape_cast %126 : vector<1x64x8xf32> to vector<64x8xf32>
    %128 = vector.shape_cast %125 : vector<64x8xf32> to vector<1x64x8xf32>
    tpu.vector_store %arg17[%c0_116, %c0_117, %c0_118], %128 {strides = array<i32>} : memref<1x64x8xf32, #tpu.memory_space<vmem>>, vector<1x64x8xf32>,
    return
  }
  func.func @transform_0(%arg0: i32) -> (i32, i32, i32) {
    %c0_i32 = arith.constant 0 : i32
    %c0_i32_0 = arith.constant 0 : i32
    %c0_i32_1 = arith.constant 0 : i32
    return %arg0, %c0_i32, %c0_i32_0 : i32, i32, i32
  }
  func.func @transform_1(%arg0: i32) -> (i32, i32, i32) {
    %c0_i32 = arith.constant 0 : i32
    %c0_i32_0 = arith.constant 0 : i32
    %c0_i32_1 = arith.constant 0 : i32
    %c0_i32_2 = arith.constant 0 : i32
    return %c0_i32, %c0_i32_0, %c0_i32_1 : i32, i32, i32
  }
  func.func @transform_2(%arg0: i32) -> (i32, i32, i32) {
    %c0_i32 = arith.constant 0 : i32
    %c0_i32_0 = arith.constant 0 : i32
    %c0_i32_1 = arith.constant 0 : i32
    %c0_i32_2 = arith.constant 0 : i32
    return %c0_i32, %c0_i32_0, %c0_i32_1 : i32, i32, i32
  }
  func.func @transform_3(%arg0: i32) -> (i32, i32) {
    %c0_i32 = arith.constant 0 : i32
    %c0_i32_0 = arith.constant 0 : i32
    %c0_i32_1 = arith.constant 0 : i32
    return %c0_i32, %c0_i32_0 : i32, i32
  }
  func.func @transform_4(%arg0: i32) -> (i32, i32, i32) {
    %c0_i32 = arith.constant 0 : i32
    %c0_i32_0 = arith.constant 0 : i32
    %c0_i32_1 = arith.constant 0 : i32
    %c0_i32_2 = arith.constant 0 : i32
    return %c0_i32, %c0_i32_0, %c0_i32_1 : i32, i32, i32
  }
  func.func @transform_5(%arg0: i32) -> (i32, i32, i32) {
    %c0_i32 = arith.constant 0 : i32
    %c0_i32_0 = arith.constant 0 : i32
    %c0_i32_1 = arith.constant 0 : i32
    %c0_i32_2 = arith.constant 0 : i32
    return %c0_i32, %c0_i32_0, %c0_i32_1 : i32, i32, i32
  }
  func.func @transform_6(%arg0: i32) -> (i32, i32) {
    %c0_i32 = arith.constant 0 : i32
    %c0_i32_0 = arith.constant 0 : i32
    %c0_i32_1 = arith.constant 0 : i32
    return %c0_i32, %c0_i32_0 : i32, i32
  }
  func.func @transform_7(%arg0: i32) -> (i32, i32, i32) {
    %c0_i32 = arith.constant 0 : i32
    %c0_i32_0 = arith.constant 0 : i32
    %c0_i32_1 = arith.constant 0 : i32
    %c0_i32_2 = arith.constant 0 : i32
    return %c0_i32, %c0_i32_0, %c0_i32_1 : i32, i32, i32
  }
  func.func @transform_8(%arg0: i32) -> (i32, i32, i32) {
    %c0_i32 = arith.constant 0 : i32
    %c0_i32_0 = arith.constant 0 : i32
    %c0_i32_1 = arith.constant 0 : i32
    %c0_i32_2 = arith.constant 0 : i32
    return %c0_i32, %c0_i32_0, %c0_i32_1 : i32, i32, i32
  }
  func.func @transform_9(%arg0: i32) -> (i32, i32) {
    %c0_i32 = arith.constant 0 : i32
    %c0_i32_0 = arith.constant 0 : i32
    %c0_i32_1 = arith.constant 0 : i32
    return %c0_i32, %c0_i32_0 : i32, i32
  }
  func.func @transform_10(%arg0: i32) -> (i32, i32, i32) {
    %c0_i32 = arith.constant 0 : i32
    %c0_i32_0 = arith.constant 0 : i32
    %c0_i32_1 = arith.constant 0 : i32
    %c0_i32_2 = arith.constant 0 : i32
    return %c0_i32, %c0_i32_0, %c0_i32_1 : i32, i32, i32
  }
  func.func @transform_11(%arg0: i32) -> (i32, i32, i32) {
    %c0_i32 = arith.constant 0 : i32
    %c0_i32_0 = arith.constant 0 : i32
    %c0_i32_1 = arith.constant 0 : i32
    %c0_i32_2 = arith.constant 0 : i32
    return %c0_i32, %c0_i32_0, %c0_i32_1 : i32, i32, i32
  }
  func.func @transform_12(%arg0: i32) -> (i32, i32) {
    %c0_i32 = arith.constant 0 : i32
    %c0_i32_0 = arith.constant 0 : i32
    %c0_i32_1 = arith.constant 0 : i32
    return %c0_i32, %c0_i32_0 : i32, i32
  }
  func.func @transform_13(%arg0: i32) -> (i32, i32, i32) {
    %c0_i32 = arith.constant 0 : i32
    %c0_i32_0 = arith.constant 0 : i32
    %c0_i32_1 = arith.constant 0 : i32
    return %arg0, %c0_i32, %c0_i32_0 : i32, i32, i32
  }
  func.func @transform_14(%arg0: i32) -> (i32, i32, i32) {
    %c0_i32 = arith.constant 0 : i32
    %c0_i32_0 = arith.constant 0 : i32
    %c0_i32_1 = arith.constant 0 : i32
    return %arg0, %c0_i32, %c0_i32_0 : i32, i32, i32
  }
  func.func @transform_15(%arg0: i32) -> (i32, i32, i32) {
    %c0_i32 = arith.constant 0 : i32
    %c0_i32_0 = arith.constant 0 : i32
    %c0_i32_1 = arith.constant 0 : i32
    return %arg0, %c0_i32, %c0_i32_0 : i32, i32, i32
  }
  func.func @transform_16(%arg0: i32) -> (i32, i32, i32) {
    %c0_i32 = arith.constant 0 : i32
    %c0_i32_0 = arith.constant 0 : i32
    %c0_i32_1 = arith.constant 0 : i32
    return %arg0, %c0_i32, %c0_i32_0 : i32, i32, i32
  }
}

</mosaic_0001>

<llo_original>
// kernel: _backbone_fused_forward.1
$region0: #{_backbone_fused_forward.1}
  #allocation0 [shape = 'u32[]', space=smem, size = 0x4, offset = 0x4, fixed_abs, tag = 'smem constant byte address 0x4 - core index']
  #allocation1 [shape = 'u32[144,128]{1,0:T(1,128)}', space=vmem, size = 0x12000, scoped, tag = 'internal scratch']
  %s0 = inlined_call_operand.vmem [shape: bf16[2,96,32], index: 0, kind: input, shape index: {}]
  %s1 = inlined_call_operand.vmem [shape: bf16[3,32,16], index: 1, kind: input, shape index: {}]
  %s2 = inlined_call_operand.vmem [shape: bf16[3,128,96], index: 2, kind: input, shape index: {}]
  %s3 = inlined_call_operand.vmem [shape: f32[128,1], index: 3, kind: input, shape index: {}]
  %s4 = inlined_call_operand.vmem [shape: bf16[3,16,8], index: 4, kind: input, shape index: {}]
  %s5 = inlined_call_operand.vmem [shape: bf16[3,128,128], index: 5, kind: input, shape index: {}]
  %s6 = inlined_call_operand.vmem [shape: f32[128,1], index: 6, kind: input, shape index: {}]
  %s7 = inlined_call_operand.vmem [shape: bf16[3,8,8], index: 7, kind: input, shape index: {}]
  %s8 = inlined_call_operand.vmem [shape: bf16[3,128,128], index: 8, kind: input, shape index: {}]
  %s9 = inlined_call_operand.vmem [shape: f32[128,1], index: 9, kind: input, shape index: {}]
  %s10 = inlined_call_operand.vmem [shape: bf16[3,8,8], index: 10, kind: input, shape index: {}]
  %s11 = inlined_call_operand.vmem [shape: bf16[3,64,128], index: 11, kind: input, shape index: {}]
  %s12 = inlined_call_operand.vmem [shape: f32[64,1], index: 12, kind: input, shape index: {}]
  %s13 = inlined_call_operand.hbm [shape: f32[2,128,16], index: 13, kind: output, shape index: {0}]
  %s14 = inlined_call_operand.vmem [shape: f32[2,128,8], index: 14, kind: output, shape index: {1}]
  %s15 = inlined_call_operand.vmem [shape: f32[2,128,8], index: 15, kind: output, shape index: {2}]
  %s16 = inlined_call_operand.vmem [shape: f32[2,64,8], index: 16, kind: output, shape index: {3}]
  %17 = xla_tuple %s13, %s14, %s15, %s16
  %s18 = sld [smem:[#allocation0]]
  $region109: #{_backbone_fused_forward.1} parent=0
    _
  %s20 = ssub.s32 1, %s18
  %s21 = scalar_select 0, %s20, %s18
  $region1: #{_backbone_fused_forward.1} parent=0
    #allocation2 [shape = 'u8[131072]{0}', space=vmem, size = 0x20000, scoped, tag = 'output window, operand 0']
    #allocation3 [shape = 's32[2]{0}', space=sflag, size = 0x8, scoped, tag = 'scoped memory for _backbone_fused_forward.1']
    %22 = vsyncpa [#allocation3], 0
    %s23 = scalar_lea.sflag [#allocation3], 1
    %24 = vsyncpa %s23, 0
    loop: start=0, step=1, limit=4
    $region2: #{_backbone_fused_forward.1} parent=1 // loop_pre_header
      _
    $region3: #{_backbone_fused_forward.1} parent=1 // loop_header
      %s26 = sphi 0, %s30
      %p27 = scmp.ge.s32.totalorder %s26, 4
      %s36 = sphi 0, %s38
      %s39 = sphi 0, %s36
      %s40 = sphi 0, %s39
      %s56 = sphi 0, %s40
      %s60 = sphi 0, %s60
      %s62 = sphi 0, %s60
      %s63 = sphi 0, %s62
      %s77 = sphi 0, %s63
      %s81 = sphi 0, %s81
      %s83 = sphi 0, %s81
      %s84 = sphi 0, %s83
      %s98 = sphi 0, %s84
      %s102 = sphi 0, %s102
      %s104 = sphi 0, %s102
      %s105 = sphi 0, %s104
      %s119 = sphi 0, %s105
      %s123 = sphi 0, %s123
      %s125 = sphi 0, %s123
      %s126 = sphi 0, %s125
      %s140 = sphi 0, %s126
      %s144 = sphi 0, %s144
      %s146 = sphi 0, %s144
      %s147 = sphi 0, %s146
      %s161 = sphi 0, %s147
      %s165 = sphi 0, %s165
      %s167 = sphi 0, %s165
      %s168 = sphi 0, %s167
      %s182 = sphi 0, %s168
      %s186 = sphi 0, %s186
      %s188 = sphi 0, %s186
      %s189 = sphi 0, %s188
      %s203 = sphi 0, %s189
      %s207 = sphi 0, %s207
      %s209 = sphi 0, %s207
      %s210 = sphi 0, %s209
      %s224 = sphi 0, %s210
      %s228 = sphi 0, %s228
      %s230 = sphi 0, %s228
      %s231 = sphi 0, %s230
      %s245 = sphi 0, %s231
      %s249 = sphi 0, %s249
      %s251 = sphi 0, %s249
      %s252 = sphi 0, %s251
      %s266 = sphi 0, %s252
      %s270 = sphi 0, %s270
      %s272 = sphi 0, %s270
      %s273 = sphi 0, %s272
      %s287 = sphi 0, %s273
      %s291 = sphi 0, %s291
      %s293 = sphi 0, %s291
      %s294 = sphi 0, %s293
      %s308 = sphi 0, %s294
      %s314 = sphi 0, %s316
      %s317 = sphi 0, %s314
      %s318 = sphi 0, %s317
      %s334 = sphi 0, %s318
      %s340 = sphi 0, %s342
      %s343 = sphi 0, %s340
      %s344 = sphi 0, %s343
      %s360 = sphi 0, %s344
      %s366 = sphi 0, %s368
      %s369 = sphi 0, %s366
      %s370 = sphi 0, %s369
      %s386 = sphi 0, %s370
      %s392 = sphi 0, %s394
      %s395 = sphi 0, %s392
      %s396 = sphi 0, %s395
      %s412 = sphi 0, %s396
    $region4: #{_backbone_fused_forward.1} parent=1 // loop_header_branch
      %29 = sbr.rel (%p27) target = $region8
    $region5: #{_backbone_fused_forward.1} parent=1 // loop_body
      %s31 = ssub.s32 %s26, 1
      %s32 = ssub.s32 %s26, 2
      %s33 = sadd.s32 %s26, 1
      %s34 = ssub.s32 %s26, %s33
      %p35 = scmp.eq.s32.totalorder %s34, 0
      %s37 = sadd.s32 %s36, 1
      %s38 = scalar_select %p35, %s36, %s37
      %p41 = pneg %p35
      %p42 = scmp.eq.s32.totalorder %s26, 1
      %p43 = por %p41, %p42
      %p44 = scmp.ne.s32.totalorder %s36, %s39
      %p45 = scmp.eq.s32.totalorder %s26, 0
      %p46 = por %p44, %p45
      %p47 = scmp.ne.s32.totalorder %s36, %s39
      %p48 = scmp.eq.s32.totalorder %s31, 1
      %p49 = por %p47, %p48
      %p50 = scmp.ne.s32.totalorder %s39, %s40
      %p51 = scmp.eq.s32.totalorder %s31, 0
      %p52 = por %p50, %p51
      %p53 = scmp.ne.s32.totalorder %s39, %s40
      %p54 = scmp.eq.s32.totalorder %s32, 1
      %p55 = por %p53, %p54
      %p57 = scmp.ne.s32.totalorder %s40, %s56
      %p58 = scmp.eq.s32.totalorder %s32, 0
      %p59 = por %p57, %p58
      %s61 = sadd.s32 %s60, 1
      %p64 = scmp.eq.s32.totalorder %s26, 1
      %p65 = scmp.ne.s32.totalorder %s60, %s62
      %p66 = scmp.eq.s32.totalorder %s26, 0
      %p67 = por %p65, %p66
      %p68 = scmp.ne.s32.totalorder %s60, %s62
      %p69 = scmp.eq.s32.totalorder %s31, 1
      %p70 = por %p68, %p69
      %p71 = scmp.ne.s32.totalorder %s62, %s63
      %p72 = scmp.eq.s32.totalorder %s31, 0
      %p73 = por %p71, %p72
      %p74 = scmp.ne.s32.totalorder %s62, %s63
      %p75 = scmp.eq.s32.totalorder %s32, 1
      %p76 = por %p74, %p75
      %p78 = scmp.ne.s32.totalorder %s63, %s77
      %p79 = scmp.eq.s32.totalorder %s32, 0
      %p80 = por %p78, %p79
      %s82 = sadd.s32 %s81, 1
      %p85 = scmp.eq.s32.totalorder %s26, 1
      %p86 = scmp.ne.s32.totalorder %s81, %s83
      %p87 = scmp.eq.s32.totalorder %s26, 0
      %p88 = por %p86, %p87
      %p89 = scmp.ne.s32.totalorder %s81, %s83
      %p90 = scmp.eq.s32.totalorder %s31, 1
      %p91 = por %p89, %p90
      %p92 = scmp.ne.s32.totalorder %s83, %s84
      %p93 = scmp.eq.s32.totalorder %s31, 0
      %p94 = por %p92, %p93
      %p95 = scmp.ne.s32.totalorder %s83, %s84
      %p96 = scmp.eq.s32.totalorder %s32, 1
      %p97 = por %p95, %p96
      %p99 = scmp.ne.s32.totalorder %s84, %s98
      %p100 = scmp.eq.s32.totalorder %s32, 0
      %p101 = por %p99, %p100
      %s103 = sadd.s32 %s102, 1
      %p106 = scmp.eq.s32.totalorder %s26, 1
      %p107 = scmp.ne.s32.totalorder %s102, %s104
      %p108 = scmp.eq.s32.totalorder %s26, 0
      %p109 = por %p107, %p108
      %p110 = scmp.ne.s32.totalorder %s102, %s104
      %p111 = scmp.eq.s32.totalorder %s31, 1
      %p112 = por %p110, %p111
      %p113 = scmp.ne.s32.totalorder %s104, %s105
      %p114 = scmp.eq.s32.totalorder %s31, 0
      %p115 = por %p113, %p114
      %p116 = scmp.ne.s32.totalorder %s104, %s105
      %p117 = scmp.eq.s32.totalorder %s32, 1
      %p118 = por %p116, %p117
      %p120 = scmp.ne.s32.totalorder %s105, %s119
      %p121 = scmp.eq.s32.totalorder %s32, 0
      %p122 = por %p120, %p121
      %s124 = sadd.s32 %s123, 1
      %p127 = scmp.eq.s32.totalorder %s26, 1
      %p128 = scmp.ne.s32.totalorder %s123, %s125
      %p129 = scmp.eq.s32.totalorder %s26, 0
      %p130 = por %p128, %p129
      %p131 = scmp.ne.s32.totalorder %s123, %s125
      %p132 = scmp.eq.s32.totalorder %s31, 1
      %p133 = por %p131, %p132
      %p134 = scmp.ne.s32.totalorder %s125, %s126
      %p135 = scmp.eq.s32.totalorder %s31, 0
      %p136 = por %p134, %p135
      %p137 = scmp.ne.s32.totalorder %s125, %s126
      %p138 = scmp.eq.s32.totalorder %s32, 1
      %p139 = por %p137, %p138
      %p141 = scmp.ne.s32.totalorder %s126, %s140
      %p142 = scmp.eq.s32.totalorder %s32, 0
      %p143 = por %p141, %p142
      %s145 = sadd.s32 %s144, 1
      %p148 = scmp.eq.s32.totalorder %s26, 1
      %p149 = scmp.ne.s32.totalorder %s144, %s146
      %p150 = scmp.eq.s32.totalorder %s26, 0
      %p151 = por %p149, %p150
      %p152 = scmp.ne.s32.totalorder %s144, %s146
      %p153 = scmp.eq.s32.totalorder %s31, 1
      %p154 = por %p152, %p153
      %p155 = scmp.ne.s32.totalorder %s146, %s147
      %p156 = scmp.eq.s32.totalorder %s31, 0
      %p157 = por %p155, %p156
      %p158 = scmp.ne.s32.totalorder %s146, %s147
      %p159 = scmp.eq.s32.totalorder %s32, 1
      %p160 = por %p158, %p159
      %p162 = scmp.ne.s32.totalorder %s147, %s161
      %p163 = scmp.eq.s32.totalorder %s32, 0
      %p164 = por %p162, %p163
      %s166 = sadd.s32 %s165, 1
      %p169 = scmp.eq.s32.totalorder %s26, 1
      %p170 = scmp.ne.s32.totalorder %s165, %s167
      %p171 = scmp.eq.s32.totalorder %s26, 0
      %p172 = por %p170, %p171
      %p173 = scmp.ne.s32.totalorder %s165, %s167
      %p174 = scmp.eq.s32.totalorder %s31, 1
      %p175 = por %p173, %p174
      %p176 = scmp.ne.s32.totalorder %s167, %s168
      %p177 = scmp.eq.s32.totalorder %s31, 0
      %p178 = por %p176, %p177
      %p179 = scmp.ne.s32.totalorder %s167, %s168
      %p180 = scmp.eq.s32.totalorder %s32, 1
      %p181 = por %p179, %p180
      %p183 = scmp.ne.s32.totalorder %s168, %s182
      %p184 = scmp.eq.s32.totalorder %s32, 0
      %p185 = por %p183, %p184
      %s187 = sadd.s32 %s186, 1
      %p190 = scmp.eq.s32.totalorder %s26, 1
      %p191 = scmp.ne.s32.totalorder %s186, %s188
      %p192 = scmp.eq.s32.totalorder %s26, 0
      %p193 = por %p191, %p192
      %p194 = scmp.ne.s32.totalorder %s186, %s188
      %p195 = scmp.eq.s32.totalorder %s31, 1
      %p196 = por %p194, %p195
      %p197 = scmp.ne.s32.totalorder %s188, %s189
      %p198 = scmp.eq.s32.totalorder %s31, 0
      %p199 = por %p197, %p198
      %p200 = scmp.ne.s32.totalorder %s188, %s189
      %p201 = scmp.eq.s32.totalorder %s32, 1
      %p202 = por %p200, %p201
      %p204 = scmp.ne.s32.totalorder %s189, %s203
      %p205 = scmp.eq.s32.totalorder %s32, 0
      %p206 = por %p204, %p205
      %s208 = sadd.s32 %s207, 1
      %p211 = scmp.eq.s32.totalorder %s26, 1
      %p212 = scmp.ne.s32.totalorder %s207, %s209
      %p213 = scmp.eq.s32.totalorder %s26, 0
      %p214 = por %p212, %p213
      %p215 = scmp.ne.s32.totalorder %s207, %s209
      %p216 = scmp.eq.s32.totalorder %s31, 1
      %p217 = por %p215, %p216
      %p218 = scmp.ne.s32.totalorder %s209, %s210
      %p219 = scmp.eq.s32.totalorder %s31, 0
      %p220 = por %p218, %p219
      %p221 = scmp.ne.s32.totalorder %s209, %s210
      %p222 = scmp.eq.s32.totalorder %s32, 1
      %p223 = por %p221, %p222
      %p225 = scmp.ne.s32.totalorder %s210, %s224
      %p226 = scmp.eq.s32.totalorder %s32, 0
      %p227 = por %p225, %p226
      %s229 = sadd.s32 %s228, 1
      %p232 = scmp.eq.s32.totalorder %s26, 1
      %p233 = scmp.ne.s32.totalorder %s228, %s230
      %p234 = scmp.eq.s32.totalorder %s26, 0
      %p235 = por %p233, %p234
      %p236 = scmp.ne.s32.totalorder %s228, %s230
      %p237 = scmp.eq.s32.totalorder %s31, 1
      %p238 = por %p236, %p237
      %p239 = scmp.ne.s32.totalorder %s230, %s231
      %p240 = scmp.eq.s32.totalorder %s31, 0
      %p241 = por %p239, %p240
      %p242 = scmp.ne.s32.totalorder %s230, %s231
      %p243 = scmp.eq.s32.totalorder %s32, 1
      %p244 = por %p242, %p243
      %p246 = scmp.ne.s32.totalorder %s231, %s245
      %p247 = scmp.eq.s32.totalorder %s32, 0
      %p248 = por %p246, %p247
      %s250 = sadd.s32 %s249, 1
      %p253 = scmp.eq.s32.totalorder %s26, 1
      %p254 = scmp.ne.s32.totalorder %s249, %s251
      %p255 = scmp.eq.s32.totalorder %s26, 0
      %p256 = por %p254, %p255
      %p257 = scmp.ne.s32.totalorder %s249, %s251
      %p258 = scmp.eq.s32.totalorder %s31, 1
      %p259 = por %p257, %p258
      %p260 = scmp.ne.s32.totalorder %s251, %s252
      %p261 = scmp.eq.s32.totalorder %s31, 0
      %p262 = por %p260, %p261
      %p263 = scmp.ne.s32.totalorder %s251, %s252
      %p264 = scmp.eq.s32.totalorder %s32, 1
      %p265 = por %p263, %p264
      %p267 = scmp.ne.s32.totalorder %s252, %s266
      %p268 = scmp.eq.s32.totalorder %s32, 0
      %p269 = por %p267, %p268
      %s271 = sadd.s32 %s270, 1
      %p274 = scmp.eq.s32.totalorder %s26, 1
      %p275 = scmp.ne.s32.totalorder %s270, %s272
      %p276 = scmp.eq.s32.totalorder %s26, 0
      %p277 = por %p275, %p276
      %p278 = scmp.ne.s32.totalorder %s270, %s272
      %p279 = scmp.eq.s32.totalorder %s31, 1
      %p280 = por %p278, %p279
      %p281 = scmp.ne.s32.totalorder %s272, %s273
      %p282 = scmp.eq.s32.totalorder %s31, 0
      %p283 = por %p281, %p282
      %p284 = scmp.ne.s32.totalorder %s272, %s273
      %p285 = scmp.eq.s32.totalorder %s32, 1
      %p286 = por %p284, %p285
      %p288 = scmp.ne.s32.totalorder %s273, %s287
      %p289 = scmp.eq.s32.totalorder %s32, 0
      %p290 = por %p288, %p289
      %s292 = sadd.s32 %s291, 1
      %p295 = scmp.eq.s32.totalorder %s26, 1
      %p296 = scmp.ne.s32.totalorder %s291, %s293
      %p297 = scmp.eq.s32.totalorder %s26, 0
      %p298 = por %p296, %p297
      %p299 = scmp.ne.s32.totalorder %s291, %s293
      %p300 = scmp.eq.s32.totalorder %s31, 1
      %p301 = por %p299, %p300
      %p302 = scmp.ne.s32.totalorder %s293, %s294
      %p303 = scmp.eq.s32.totalorder %s31, 0
      %p304 = por %p302, %p303
      %p305 = scmp.ne.s32.totalorder %s293, %s294
      %p306 = scmp.eq.s32.totalorder %s32, 1
      %p307 = por %p305, %p306
      %p309 = scmp.ne.s32.totalorder %s294, %s308
      %p310 = scmp.eq.s32.totalorder %s32, 0
      %p311 = por %p309, %p310
      %s312 = ssub.s32 %s26, %s33
      %p313 = scmp.eq.s32.totalorder %s312, 0
      %s315 = sadd.s32 %s314, 1
      %s316 = scalar_select %p313, %s314, %s315
      %p319 = pneg %p313
      %p320 = scmp.eq.s32.totalorder %s26, 1
      %p321 = por %p319, %p320
      %p322 = scmp.ne.s32.totalorder %s314, %s317
      %p323 = scmp.eq.s32.totalorder %s26, 0
      %p324 = por %p322, %p323
      %p325 = scmp.ne.s32.totalorder %s314, %s317
      %p326 = scmp.eq.s32.totalorder %s31, 1
      %p327 = por %p325, %p326
      %p328 = scmp.ne.s32.totalorder %s317, %s318
      %p329 = scmp.eq.s32.totalorder %s31, 0
      %p330 = por %p328, %p329
      %p331 = scmp.ne.s32.totalorder %s317, %s318
      %p332 = scmp.eq.s32.totalorder %s32, 1
      %p333 = por %p331, %p332
      %p335 = scmp.ne.s32.totalorder %s318, %s334
      %p336 = scmp.eq.s32.totalorder %s32, 0
      %p337 = por %p335, %p336
      %s338 = ssub.s32 %s26, %s33
      %p339 = scmp.eq.s32.totalorder %s338, 0
      %s341 = sadd.s32 %s340, 1
      %s342 = scalar_select %p339, %s340, %s341
      %p345 = pneg %p339
      %p346 = scmp.eq.s32.totalorder %s26, 1
      %p347 = por %p345, %p346
      %p348 = scmp.ne.s32.totalorder %s340, %s343
      %p349 = scmp.eq.s32.totalorder %s26, 0
      %p350 = por %p348, %p349
      %p351 = scmp.ne.s32.totalorder %s340, %s343
      %p352 = scmp.eq.s32.totalorder %s31, 1
      %p353 = por %p351, %p352
      %p354 = scmp.ne.s32.totalorder %s343, %s344
      %p355 = scmp.eq.s32.totalorder %s31, 0
      %p356 = por %p354, %p355
      %p357 = scmp.ne.s32.totalorder %s343, %s344
      %p358 = scmp.eq.s32.totalorder %s32, 1
      %p359 = por %p357, %p358
      %p361 = scmp.ne.s32.totalorder %s344, %s360
      %p362 = scmp.eq.s32.totalorder %s32, 0
      %p363 = por %p361, %p362
      %s364 = ssub.s32 %s26, %s33
      %p365 = scmp.eq.s32.totalorder %s364, 0
      %s367 = sadd.s32 %s366, 1
      %s368 = scalar_select %p365, %s366, %s367
      %p371 = pneg %p365
      %p372 = scmp.eq.s32.totalorder %s26, 1
      %p373 = por %p371, %p372
      %p374 = scmp.ne.s32.totalorder %s366, %s369
      %p375 = scmp.eq.s32.totalorder %s26, 0
      %p376 = por %p374, %p375
      %p377 = scmp.ne.s32.totalorder %s366, %s369
      %p378 = scmp.eq.s32.totalorder %s31, 1
      %p379 = por %p377, %p378
      %p380 = scmp.ne.s32.totalorder %s369, %s370
      %p381 = scmp.eq.s32.totalorder %s31, 0
      %p382 = por %p380, %p381
      %p383 = scmp.ne.s32.totalorder %s369, %s370
      %p384 = scmp.eq.s32.totalorder %s32, 1
      %p385 = por %p383, %p384
      %p387 = scmp.ne.s32.totalorder %s370, %s386
      %p388 = scmp.eq.s32.totalorder %s32, 0
      %p389 = por %p387, %p388
      %s390 = ssub.s32 %s26, %s33
      %p391 = scmp.eq.s32.totalorder %s390, 0
      %s393 = sadd.s32 %s392, 1
      %s394 = scalar_select %p391, %s392, %s393
      %p397 = pneg %p391
      %p398 = scmp.eq.s32.totalorder %s26, 1
      %p399 = por %p397, %p398
      %p400 = scmp.ne.s32.totalorder %s392, %s395
      %p401 = scmp.eq.s32.totalorder %s26, 0
      %p402 = por %p400, %p401
      %p403 = scmp.ne.s32.totalorder %s392, %s395
      %p404 = scmp.eq.s32.totalorder %s31, 1
      %p405 = por %p403, %p404
      %p406 = scmp.ne.s32.totalorder %s395, %s396
      %p407 = scmp.eq.s32.totalorder %s31, 0
      %p408 = por %p406, %p407
      %p409 = scmp.ne.s32.totalorder %s395, %s396
      %p410 = scmp.eq.s32.totalorder %s32, 1
      %p411 = por %p409, %p410
      %p413 = scmp.ne.s32.totalorder %s396, %s412
      %p414 = scmp.eq.s32.totalorder %s32, 0
      %p415 = por %p413, %p414
      %p416 = scmp.le.s32.totalorder 1, %s26
      %p417 = scmp.lt.s32.totalorder %s26, 3
      %p418 = pnand %p416, %p417
      %p419 = pneg %p418
      // Predicated region
      $region9: #{_backbone_fused_forward.1} parent=5 // pred_check
        _
      $region10: #{_backbone_fused_forward.1} parent=5 // pred_check_branch
        %421 = sbr.rel (%p418) target = $region12
      $region11: #{_backbone_fused_forward.1} parent=5 // pred_region
        %s422 = ssub.s32 %s26, 1
        // Predicated region
        $region13: #{_backbone_fused_forward.1} parent=11 // pred_check
          %p423 = pneg %p73
        $region14: #{_backbone_fused_forward.1} parent=11 // pred_check_branch
          %425 = sbr.rel (%p423) target = $region16
        $region15: #{_backbone_fused_forward.1} parent=11 // pred_region
          _
        $region16: #{_backbone_fused_forward.1} parent=11 // pred_fallthru
          _
        // Predicated region
        $region17: #{_backbone_fused_forward.1} parent=11 // pred_check
          %p426 = pneg %p94
        $region18: #{_backbone_fused_forward.1} parent=11 // pred_check_branch
          %428 = sbr.rel (%p426) target = $region20
        $region19: #{_backbone_fused_forward.1} parent=11 // pred_region
          _
        $region20: #{_backbone_fused_forward.1} parent=11 // pred_fallthru
          _
        // Predicated region
        $region21: #{_backbone_fused_forward.1} parent=11 // pred_check
          %p429 = pneg %p115
        $region22: #{_backbone_fused_forward.1} parent=11 // pred_check_branch
          %431 = sbr.rel (%p429) target = $region24
        $region23: #{_backbone_fused_forward.1} parent=11 // pred_region
          _
        $region24: #{_backbone_fused_forward.1} parent=11 // pred_fallthru
          _
        // Predicated region
        $region25: #{_backbone_fused_forward.1} parent=11 // pred_check
          %p432 = pneg %p136
        $region26: #{_backbone_fused_forward.1} parent=11 // pred_check_branch
          %434 = sbr.rel (%p432) target = $region28
        $region27: #{_backbone_fused_forward.1} parent=11 // pred_region
          _
        $region28: #{_backbone_fused_forward.1} parent=11 // pred_fallthru
          _
        // Predicated region
        $region29: #{_backbone_fused_forward.1} parent=11 // pred_check
          %p435 = pneg %p157
        $region30: #{_backbone_fused_forward.1} parent=11 // pred_check_branch
          %437 = sbr.rel (%p435) target = $region32
        $region31: #{_backbone_fused_forward.1} parent=11 // pred_region
          _
        $region32: #{_backbone_fused_forward.1} parent=11 // pred_fallthru
          _
        // Predicated region
        $region33: #{_backbone_fused_forward.1} parent=11 // pred_check
          %p438 = pneg %p178
        $region34: #{_backbone_fused_forward.1} parent=11 // pred_check_branch
          %440 = sbr.rel (%p438) target = $region36
        $region35: #{_backbone_fused_forward.1} parent=11 // pred_region
          _
        $region36: #{_backbone_fused_forward.1} parent=11 // pred_fallthru
          _
        // Predicated region
        $region37: #{_backbone_fused_forward.1} parent=11 // pred_check
          %p441 = pneg %p199
        $region38: #{_backbone_fused_forward.1} parent=11 // pred_check_branch
          %443 = sbr.rel (%p441) target = $region40
        $region39: #{_backbone_fused_forward.1} parent=11 // pred_region
          _
        $region40: #{_backbone_fused_forward.1} parent=11 // pred_fallthru
          _
        // Predicated region
        $region41: #{_backbone_fused_forward.1} parent=11 // pred_check
          %p444 = pneg %p220
        $region42: #{_backbone_fused_forward.1} parent=11 // pred_check_branch
          %446 = sbr.rel (%p444) target = $region44
        $region43: #{_backbone_fused_forward.1} parent=11 // pred_region
          _
        $region44: #{_backbone_fused_forward.1} parent=11 // pred_fallthru
          _
        // Predicated region
        $region45: #{_backbone_fused_forward.1} parent=11 // pred_check
          %p447 = pneg %p241
        $region46: #{_backbone_fused_forward.1} parent=11 // pred_check_branch
          %449 = sbr.rel (%p447) target = $region48
        $region47: #{_backbone_fused_forward.1} parent=11 // pred_region
          _
        $region48: #{_backbone_fused_forward.1} parent=11 // pred_fallthru
          _
        // Predicated region
        $region49: #{_backbone_fused_forward.1} parent=11 // pred_check
          %p450 = pneg %p262
        $region50: #{_backbone_fused_forward.1} parent=11 // pred_check_branch
          %452 = sbr.rel (%p450) target = $region52
        $region51: #{_backbone_fused_forward.1} parent=11 // pred_region
          _
        $region52: #{_backbone_fused_forward.1} parent=11 // pred_fallthru
          _
        // Predicated region
        $region53: #{_backbone_fused_forward.1} parent=11 // pred_check
          %p453 = pneg %p283
        $region54: #{_backbone_fused_forward.1} parent=11 // pred_check_branch
          %455 = sbr.rel (%p453) target = $region56
        $region55: #{_backbone_fused_forward.1} parent=11 // pred_region
          _
        $region56: #{_backbone_fused_forward.1} parent=11 // pred_fallthru
          _
        // Predicated region
        $region57: #{_backbone_fused_forward.1} parent=11 // pred_check
          %p456 = pneg %p304
        $region58: #{_backbone_fused_forward.1} parent=11 // pred_check_branch
          %458 = sbr.rel (%p456) target = $region60
        $region59: #{_backbone_fused_forward.1} parent=11 // pred_region
          _
        $region60: #{_backbone_fused_forward.1} parent=11 // pred_fallthru
          _
      $region12: #{_backbone_fused_forward.1} parent=5 // pred_fallthru
        _
      %p459 = scmp.lt.s32.totalorder %s26, 2
      // Predicated region
      $region61: #{_backbone_fused_forward.1} parent=5 // pred_check
        %p460 = pneg %p459
      $region62: #{_backbone_fused_forward.1} parent=5 // pred_check_branch
        %462 = sbr.rel (%p460) target = $region64
      $region63: #{_backbone_fused_forward.1} parent=5 // pred_region
        // Predicated region
        $region65: #{_backbone_fused_forward.1} parent=63 // pred_check
          %p463 = pneg %p46
        $region66: #{_backbone_fused_forward.1} parent=63 // pred_check_branch
          %465 = sbr.rel (%p463) target = $region68
        $region67: #{_backbone_fused_forward.1} parent=63 // pred_region
          %p466 = scmp.lt.s32.totalorder %s26, 1
          %s467 = scalar_select %p466, %s26, 1
          %s468 = smul.addr %s467, 12
          %s469 = smul.addr %s468, 4
          %s470 = scalar_lea.vmem %s0, %s469
        $region68: #{_backbone_fused_forward.1} parent=63 // pred_fallthru
          _
      $region64: #{_backbone_fused_forward.1} parent=5 // pred_fallthru
        _
      %p471 = scmp.le.s32.totalorder 1, %s26
      %p472 = scmp.lt.s32.totalorder %s26, 3
      %p473 = pnand %p471, %p472
      %p474 = pneg %p473
      // Predicated region
      $region69: #{_backbone_fused_forward.1} parent=5 // pred_check
        _
      $region70: #{_backbone_fused_forward.1} parent=5 // pred_check_branch
        %476 = sbr.rel (%p473) target = $region72
      $region71: #{_backbone_fused_forward.1} parent=5 // pred_region
        %s477 = ssub.s32 %s26, 1
        %p478 = scmp.lt.s32.totalorder %s31, 1
        %s479 = scalar_select %p478, %s31, 1
        %s480 = smul.addr %s479, 12
        %s481 = smul.addr %s480, 4
        %s482 = scalar_lea.vmem %s0, %s481
        %p483 = pneg %p52
        %p484 = pneg %p49
        %p485 = pneg %p73
        %p486 = pneg %p70
        %p487 = pneg %p94
        %p488 = pneg %p91
        %p489 = pneg %p115
        %p490 = pneg %p112
        %p491 = pneg %p136
        %p492 = pneg %p133
        %p493 = pneg %p157
        %p494 = pneg %p154
        %p495 = pneg %p178
        %p496 = pneg %p175
        %p497 = pneg %p199
        %p498 = pneg %p196
        %p499 = pneg %p220
        %p500 = pneg %p217
        %p501 = pneg %p241
        %p502 = pneg %p238
        %p503 = pneg %p262
        %p504 = pneg %p259
        %p505 = pneg %p283
        %p506 = pneg %p280
        %p507 = pneg %p304
        %p508 = pneg %p301
        %p509 = pneg %p330
        %p510 = pneg %p327
        %s511 = sand.u32 %s317, 1
        %s512 = scalar_lea.sflag [#allocation3], %s511
        %s513 = sand.u32 %s317, 1
        %s514 = smul.addr %s513, 128
        %s515 = scalar_lea.vmem [#allocation2], %s514
        %p516 = pneg %p356
        %p517 = pneg %p353
        %p518 = scmp.lt.s32.totalorder %s31, 1
        %s519 = scalar_select %p518, %s31, 1
        %s520 = smul.addr %s519, 16
        %s521 = smul.addr %s520, 8
        %s522 = scalar_lea.vmem %s14, %s521
        %p523 = pneg %p382
        %p524 = pneg %p379
        %p525 = scmp.lt.s32.totalorder %s31, 1
        %s526 = scalar_select %p525, %s31, 1
        %s527 = smul.addr %s526, 16
        %s528 = smul.addr %s527, 8
        %s529 = scalar_lea.vmem %s15, %s528
        %p530 = pneg %p408
        %p531 = pneg %p405
        %p532 = scmp.lt.s32.totalorder %s31, 1
        %s533 = scalar_select %p532, %s31, 1
        %s534 = smul.addr %s533, 8
        %s535 = smul.addr %s534, 8
        %s536 = scalar_lea.vmem %s16, %s535
        %p537 = scmp.lt.s32.totalorder %s31, 1
        %s538 = scalar_select %p537, %s31, 1
        %s539 = smul.addr %s538, 12
        %s540 = smul.addr %s539, 4
        %s541 = scalar_lea.vmem %s0, %s540
        %p542 = scmp.lt.s32.totalorder %s31, 1
        %s543 = scalar_select %p542, %s31, 1
        %s544 = smul.addr %s543, 16
        %s545 = smul.addr %s544, 8
        %s546 = scalar_lea.vmem %s14, %s545
        %p547 = scmp.lt.s32.totalorder %s31, 1
        %s548 = scalar_select %p547, %s31, 1
        %s549 = smul.addr %s548, 16
        %s550 = smul.addr %s549, 8
        %s551 = scalar_lea.vmem %s15, %s550
        %p552 = scmp.lt.s32.totalorder %s31, 1
        %s553 = scalar_select %p552, %s31, 1
        %s554 = smul.addr %s553, 8
        %s555 = smul.addr %s554, 8
        %s556 = scalar_lea.vmem %s16, %s555
        %v558 = vld [vmem:[%s541] sm:$0xf]
        %v559 = vld [vmem:[%s541 + $0x4] sm:$0xf]
        %v560 = vld [vmem:[%s541 + $0x8] sm:$0xf]
        %v561 = vld [vmem:[%s541 + $0xc] sm:$0xf]
        %v562 = vld [vmem:[%s541 + $0x10] sm:$0xf]
        %v563 = vld [vmem:[%s541 + $0x14] sm:$0xf]
        %v564 = vld [vmem:[%s541 + $0x18] sm:$0xf]
        %v565 = vld [vmem:[%s541 + $0x1c] sm:$0xf]
        %v566 = vld [vmem:[%s541 + $0x20] sm:$0xf]
        %v567 = vld [vmem:[%s541 + $0x24] sm:$0xf]
        %v568 = vld [vmem:[%s541 + $0x28] sm:$0xf]
        %v569 = vld [vmem:[%s541 + $0x2c] sm:$0xf]
        %v570 = vld [vmem:[%s1] sm:$0xf]
        %v571 = vld [vmem:[%s1 + $0x4] sm:$0xf]
        %v572 = vld [vmem:[%s1 + $0x8] sm:$0xf]
        %v573 = vld [vmem:[%s1 + $0xc] sm:$0xf]
        %v586 = vunpack.c.l.b16 %v558
        %v587 = vunpack.c.l.b16 %v559
        %v588 = vunpack.c.l.b16 %v560
        %v589 = vunpack.c.l.b16 %v561
        %v590 = vunpack.c.l.b16 %v562
        %v591 = vunpack.c.l.b16 %v563
        %v592 = vunpack.c.l.b16 %v564
        %v593 = vunpack.c.l.b16 %v565
        %v594 = vunpack.c.l.b16 %v566
        %v595 = vunpack.c.l.b16 %v567
        %v596 = vunpack.c.l.b16 %v568
        %v597 = vunpack.c.l.b16 %v569
        %v598 = vpack.c.b16 %v587, %v586
        %v599 = vpack.c.b16 %v589, %v588
        %v600 = vpack.c.b16 %v591, %v590
        %v601 = vpack.c.b16 %v593, %v592
        %v602 = vpack.c.b16 %v595, %v594
        %v603 = vpack.c.b16 %v597, %v596
        %v608 = vunpack.c.l.b16 %v570
        %v609 = vunpack.c.l.b16 %v571
        %v610 = vunpack.c.l.b16 %v572
        %v611 = vunpack.c.l.b16 %v573
        %v612 = vpack.c.b16 %v609, %v608
        %v613 = vpack.c.b16 %v611, %v610
        %vm616 = vcmask 261120
        %v618 = vsel %vm616, %v598, 0
        %v621 = vsel %vm616, %v599, 0
        %v624 = vsel %vm616, %v600, 0
        %v627 = vsel %vm616, %v601, 0
        %v630 = vsel %vm616, %v602, 0
        %v633 = vsel %vm616, %v603, 0
        %635 = vmatprep.subr.bf16.mxu0 0
        %636 = vmatpush1.bf16.msra.mxu0 %v612
        %637 = vmatprep.subr.bf16.mxu0 0
        %638 = vmatpush1.bf16.msra.mxu0 %v613
        %639 = vmatprep.subr.bf16.mxu0 0
        %640 = vmatpush1.bf16.msra.mxu0 0
        %641 = vmatprep.subr.bf16.mxu0 0
        %642 = vmatpush1.bf16.msra.mxu0 0
        %643 = vmatprep.subr.bf16.mxu0 0
        %644 = vmatpush1.bf16.msra.mxu0 0
        %645 = vmatprep.subr.bf16.mxu0 0
        %646 = vmatpush1.bf16.msra.mxu0 0
        %647 = vmatprep.subr.bf16.mxu0 0
        %648 = vmatpush1.bf16.msra.mxu0 0
        %649 = vmatprep.subr.bf16.mxu0 0
        %650 = vmatpush1.bf16.msra.mxu0 0
        %651 = vmatprep.subr.bf16.mxu0 0
        %652 = vmatpush1.bf16.msra.mxu0 0
        %653 = vmatprep.subr.bf16.mxu0 0
        %654 = vmatpush1.bf16.msra.mxu0 0
        %655 = vmatprep.subr.bf16.mxu0 0
        %656 = vmatpush1.bf16.msra.mxu0 0
        %657 = vmatprep.subr.bf16.mxu0 0
        %658 = vmatpush1.bf16.msra.mxu0 0
        %659 = vmatprep.subr.bf16.mxu0 0
        %660 = vmatpush1.bf16.msra.mxu0 0
        %661 = vmatprep.subr.bf16.mxu0 0
        %662 = vmatpush1.bf16.msra.mxu0 0
        %663 = vmatprep.subr.bf16.mxu0 0
        %664 = vmatpush1.bf16.msra.mxu0 0
        %665 = vmatprep.subr.bf16.mxu0 0
        %666 = vmatpush1.bf16.msra.mxu0 0
        %667 = vmatprep.mubr.bf16.mxu0 0
        %668 = vmatmul.mubr.bf16.gmra.mrb[0].mxu0 %v618
        %v669 = vpop.f32.mrb[0].mxu0
        %v670 = vadd.f32 0.0, %v669
        %v671 = vpop.f32.mrb[0].mxu0
        %v672 = vpop.f32.mrb[0].mxu0
        %v673 = vadd.f32 0.0, %v672
        %v674 = vpop.f32.mrb[0].mxu0
        %675 = vmatprep.mubr.bf16.mxu0 0
        %676 = vmatmul.mubr.bf16.gmra.mrb[0].mxu0 %v621
        %v677 = vpop.f32.mrb[0].mxu0
        %v678 = vadd.f32 0.0, %v677
        %v679 = vpop.f32.mrb[0].mxu0
        %v680 = vpop.f32.mrb[0].mxu0
        %v681 = vadd.f32 0.0, %v680
        %v682 = vpop.f32.mrb[0].mxu0
        %683 = vmatprep.mubr.bf16.mxu0 0
        %684 = vmatmul.mubr.bf16.gmra.mrb[0].mxu0 %v624
        %v685 = vpop.f32.mrb[0].mxu0
        %v686 = vadd.f32 0.0, %v685
        %v687 = vpop.f32.mrb[0].mxu0
        %v688 = vpop.f32.mrb[0].mxu0
        %v689 = vadd.f32 0.0, %v688
        %v690 = vpop.f32.mrb[0].mxu0
        %691 = vmatprep.mubr.bf16.mxu0 0
        %692 = vmatmul.mubr.bf16.gmra.mrb[0].mxu0 %v627
        %v693 = vpop.f32.mrb[0].mxu0
        %v694 = vadd.f32 0.0, %v693
        %v695 = vpop.f32.mrb[0].mxu0
        %v696 = vpop.f32.mrb[0].mxu0
        %v697 = vadd.f32 0.0, %v696
        %v698 = vpop.f32.mrb[0].mxu0
        %699 = vmatprep.mubr.bf16.mxu0 0
        %700 = vmatmul.mubr.bf16.gmra.mrb[0].mxu0 %v630
        %v701 = vpop.f32.mrb[0].mxu0
        %v702 = vadd.f32 0.0, %v701
        %v703 = vpop.f32.mrb[0].mxu0
        %v704 = vpop.f32.mrb[0].mxu0
        %v705 = vadd.f32 0.0, %v704
        %v706 = vpop.f32.mrb[0].mxu0
        %707 = vmatprep.mubr.bf16.mxu0 0
        %708 = vmatmul.mubr.bf16.gmra.mrb[0].mxu0 %v633
        %v709 = vpop.f32.mrb[0].mxu0
        %v710 = vadd.f32 0.0, %v709
        %v711 = vpop.f32.mrb[0].mxu0
        %v712 = vpop.f32.mrb[0].mxu0
        %v713 = vadd.f32 0.0, %v712
        %v714 = vpop.f32.mrb[0].mxu0
        %715 = vdwg.mxu0
        %v716 = vpack.c.bf16 %v673, %v670
        %v717 = vpack.c.bf16 %v681, %v678
        %v718 = vpack.c.bf16 %v689, %v686
        %v719 = vpack.c.bf16 %v697, %v694
        %v720 = vpack.c.bf16 %v705, %v702
        %v721 = vpack.c.bf16 %v713, %v710
        %v722 = vld [vmem:[%s2] sm:$0xf]
        %v723 = vld [vmem:[%s2 + $0x4] sm:$0xf]
        %v724 = vld [vmem:[%s2 + $0x8] sm:$0xf]
        %v725 = vld [vmem:[%s2 + $0xc] sm:$0xf]
        %v726 = vld [vmem:[%s2 + $0x10] sm:$0xf]
        %v727 = vld [vmem:[%s2 + $0x14] sm:$0xf]
        %v728 = vld [vmem:[%s2 + $0x18] sm:$0xf]
        %v729 = vld [vmem:[%s2 + $0x1c] sm:$0xf]
        %v730 = vld [vmem:[%s2 + $0x20] sm:$0xf]
        %v731 = vld [vmem:[%s2 + $0x24] sm:$0xf]
        %v732 = vld [vmem:[%s2 + $0x28] sm:$0xf]
        %v733 = vld [vmem:[%s2 + $0x2c] sm:$0xf]
        %v734 = vld [vmem:[%s2 + $0x30] sm:$0xf]
        %v735 = vld [vmem:[%s2 + $0x34] sm:$0xf]
        %v736 = vld [vmem:[%s2 + $0x38] sm:$0xf]
        %v737 = vld [vmem:[%s2 + $0x3c] sm:$0xf]
        %s738 = scalar_lea.vmem %s1, 16
        %v739 = vld [vmem:[%s738] sm:$0xf]
        %v740 = vld [vmem:[%s738 + $0x4] sm:$0xf]
        %v741 = vld [vmem:[%s738 + $0x8] sm:$0xf]
        %v742 = vld [vmem:[%s738 + $0xc] sm:$0xf]
        %v747 = vunpack.c.l.b16 %v739
        %v748 = vunpack.c.l.b16 %v740
        %v749 = vunpack.c.l.b16 %v741
        %v750 = vunpack.c.l.b16 %v742
        %v751 = vpack.c.b16 %v748, %v747
        %v752 = vpack.c.b16 %v750, %v749
        %755 = vmatprep.subr.bf16.mxu0 0
        %756 = vmatpush1.bf16.msra.mxu0 %v751
        %757 = vmatprep.subr.bf16.mxu0 0
        %758 = vmatpush1.bf16.msra.mxu0 %v752
        %759 = vmatprep.subr.bf16.mxu0 0
        %760 = vmatpush1.bf16.msra.mxu0 0
        %761 = vmatprep.subr.bf16.mxu0 0
        %762 = vmatpush1.bf16.msra.mxu0 0
        %763 = vmatprep.subr.bf16.mxu0 0
        %764 = vmatpush1.bf16.msra.mxu0 0
        %765 = vmatprep.subr.bf16.mxu0 0
        %766 = vmatpush1.bf16.msra.mxu0 0
        %767 = vmatprep.subr.bf16.mxu0 0
        %768 = vmatpush1.bf16.msra.mxu0 0
        %769 = vmatprep.subr.bf16.mxu0 0
        %770 = vmatpush1.bf16.msra.mxu0 0
        %771 = vmatprep.subr.bf16.mxu0 0
        %772 = vmatpush1.bf16.msra.mxu0 0
        %773 = vmatprep.subr.bf16.mxu0 0
        %774 = vmatpush1.bf16.msra.mxu0 0
        %775 = vmatprep.subr.bf16.mxu0 0
        %776 = vmatpush1.bf16.msra.mxu0 0
        %777 = vmatprep.subr.bf16.mxu0 0
        %778 = vmatpush1.bf16.msra.mxu0 0
        %779 = vmatprep.subr.bf16.mxu0 0
        %780 = vmatpush1.bf16.msra.mxu0 0
        %781 = vmatprep.subr.bf16.mxu0 0
        %782 = vmatpush1.bf16.msra.mxu0 0
        %783 = vmatprep.subr.bf16.mxu0 0
        %784 = vmatpush1.bf16.msra.mxu0 0
        %785 = vmatprep.subr.bf16.mxu0 0
        %786 = vmatpush1.bf16.msra.mxu0 0
        %787 = vmatprep.mubr.bf16.mxu0 0
        %788 = vmatmul.mubr.bf16.gmra.mrb[0].mxu0 %v618
        %v789 = vpop.f32.mrb[0].mxu0
        %v790 = vadd.f32 0.0, %v789
        %v791 = vpop.f32.mrb[0].mxu0
        %v792 = vpop.f32.mrb[0].mxu0
        %v793 = vadd.f32 0.0, %v792
        %v794 = vpop.f32.mrb[0].mxu0
        %795 = vmatprep.mubr.bf16.mxu0 0
        %796 = vmatmul.mubr.bf16.gmra.mrb[0].mxu0 %v621
        %v797 = vpop.f32.mrb[0].mxu0
        %v798 = vadd.f32 0.0, %v797
        %v799 = vpop.f32.mrb[0].mxu0
        %v800 = vpop.f32.mrb[0].mxu0
        %v801 = vadd.f32 0.0, %v800
        %v802 = vpop.f32.mrb[0].mxu0
        %803 = vmatprep.mubr.bf16.mxu0 0
        %804 = vmatmul.mubr.bf16.gmra.mrb[0].mxu0 %v624
        %v805 = vpop.f32.mrb[0].mxu0
        %v806 = vadd.f32 0.0, %v805
        %v807 = vpop.f32.mrb[0].mxu0
        %v808 = vpop.f32.mrb[0].mxu0
        %v809 = vadd.f32 0.0, %v808
        %v810 = vpop.f32.mrb[0].mxu0
        %811 = vmatprep.mubr.bf16.mxu0 0
        %812 = vmatmul.mubr.bf16.gmra.mrb[0].mxu0 %v627
        %v813 = vpop.f32.mrb[0].mxu0
        %v814 = vadd.f32 0.0, %v813
        %v815 = vpop.f32.mrb[0].mxu0
        %v816 = vpop.f32.mrb[0].mxu0
        %v817 = vadd.f32 0.0, %v816
        %v818 = vpop.f32.mrb[0].mxu0
        %819 = vmatprep.mubr.bf16.mxu0 0
        %820 = vmatmul.mubr.bf16.gmra.mrb[0].mxu0 %v630
        %v821 = vpop.f32.mrb[0].mxu0
        %v822 = vadd.f32 0.0, %v821
        %v823 = vpop.f32.mrb[0].mxu0
        %v824 = vpop.f32.mrb[0].mxu0
        %v825 = vadd.f32 0.0, %v824
        %v826 = vpop.f32.mrb[0].mxu0
        %827 = vmatprep.mubr.bf16.mxu0 0
        %828 = vmatmul.mubr.bf16.gmra.mrb[0].mxu0 %v633
        %v829 = vpop.f32.mrb[0].mxu0
        %v830 = vadd.f32 0.0, %v829
        %v831 = vpop.f32.mrb[0].mxu0
        %v832 = vpop.f32.mrb[0].mxu0
        %v833 = vadd.f32 0.0, %v832
        %v834 = vpop.f32.mrb[0].mxu0
        %835 = vdwg.mxu0
        %v836 = vpack.c.bf16 %v793, %v790
        %v837 = vpack.c.bf16 %v801, %v798
        %v838 = vpack.c.bf16 %v809, %v806
        %v839 = vpack.c.bf16 %v817, %v814
        %v840 = vpack.c.bf16 %v825, %v822
        %v841 = vpack.c.bf16 %v833, %v830
        %s842 = scalar_lea.vmem %s2, 64
        %v843 = vld [vmem:[%s842] sm:$0xf]
        %v844 = vld [vmem:[%s842 + $0x4] sm:$0xf]
        %v845 = vld [vmem:[%s842 + $0x8] sm:$0xf]
        %v846 = vld [vmem:[%s842 + $0xc] sm:$0xf]
        %v847 = vld [vmem:[%s842 + $0x10] sm:$0xf]
        %v848 = vld [vmem:[%s842 + $0x14] sm:$0xf]
        %v849 = vld [vmem:[%s842 + $0x18] sm:$0xf]
        %v850 = vld [vmem:[%s842 + $0x1c] sm:$0xf]
        %v851 = vld [vmem:[%s842 + $0x20] sm:$0xf]
        %v852 = vld [vmem:[%s842 + $0x24] sm:$0xf]
        %v853 = vld [vmem:[%s842 + $0x28] sm:$0xf]
        %v854 = vld [vmem:[%s842 + $0x2c] sm:$0xf]
        %v855 = vld [vmem:[%s842 + $0x30] sm:$0xf]
        %v856 = vld [vmem:[%s842 + $0x34] sm:$0xf]
        %v857 = vld [vmem:[%s842 + $0x38] sm:$0xf]
        %v858 = vld [vmem:[%s842 + $0x3c] sm:$0xf]
        %v875 = vunpack.c.l.b16 %v843
        %v876 = vunpack.c.l.b16 %v844
        %v877 = vunpack.c.l.b16 %v845
        %v878 = vunpack.c.l.b16 %v846
        %v879 = vunpack.c.l.b16 %v847
        %v880 = vunpack.c.l.b16 %v848
        %v881 = vunpack.c.l.b16 %v849
        %v882 = vunpack.c.l.b16 %v850
        %v883 = vunpack.c.l.b16 %v851
        %v884 = vunpack.c.l.b16 %v852
        %v885 = vunpack.c.l.b16 %v853
        %v886 = vunpack.c.l.b16 %v854
        %v887 = vunpack.c.l.b16 %v855
        %v888 = vunpack.c.l.b16 %v856
        %v889 = vunpack.c.l.b16 %v857
        %v890 = vunpack.c.l.b16 %v858
        %v891 = vpack.c.b16 %v876, %v875
        %v892 = vpack.c.b16 %v878, %v877
        %v893 = vpack.c.b16 %v880, %v879
        %v894 = vpack.c.b16 %v882, %v881
        %v895 = vpack.c.b16 %v884, %v883
        %v896 = vpack.c.b16 %v886, %v885
        %v897 = vpack.c.b16 %v888, %v887
        %v898 = vpack.c.b16 %v890, %v889
        %vm899 = vcmask 785408
        %v901 = vsel %vm899, %v891, 0
        %v904 = vsel %vm899, %v892, 0
        %v907 = vsel %vm899, %v893, 0
        %v910 = vsel %vm899, %v894, 0
        %v913 = vsel %vm899, %v895, 0
        %v916 = vsel %vm899, %v896, 0
        %v919 = vsel %vm899, %v897, 0
        %v922 = vsel %vm899, %v898, 0
        %924 = vmatprep.subr.bf16.mxu0 0
        %925 = vmatpush1.bf16.msra.mxu0 %v836
        %926 = vmatprep.subr.bf16.mxu0 0
        %927 = vmatpush1.bf16.msra.mxu0 %v837
        %928 = vmatprep.subr.bf16.mxu0 0
        %929 = vmatpush1.bf16.msra.mxu0 %v838
        %930 = vmatprep.subr.bf16.mxu0 0
        %931 = vmatpush1.bf16.msra.mxu0 %v839
        %932 = vmatprep.subr.bf16.mxu0 0
        %933 = vmatpush1.bf16.msra.mxu0 %v840
        %934 = vmatprep.subr.bf16.mxu0 0
        %935 = vmatpush1.bf16.msra.mxu0 %v841
        %936 = vmatprep.subr.bf16.mxu0 0
        %937 = vmatpush1.bf16.msra.mxu0 0
        %938 = vmatprep.subr.bf16.mxu0 0
        %939 = vmatpush1.bf16.msra.mxu0 0
        %940 = vmatprep.subr.bf16.mxu0 0
        %941 = vmatpush1.bf16.msra.mxu0 0
        %942 = vmatprep.subr.bf16.mxu0 0
        %943 = vmatpush1.bf16.msra.mxu0 0
        %944 = vmatprep.subr.bf16.mxu0 0
        %945 = vmatpush1.bf16.msra.mxu0 0
        %946 = vmatprep.subr.bf16.mxu0 0
        %947 = vmatpush1.bf16.msra.mxu0 0
        %948 = vmatprep.subr.bf16.mxu0 0
        %949 = vmatpush1.bf16.msra.mxu0 0
        %950 = vmatprep.subr.bf16.mxu0 0
        %951 = vmatpush1.bf16.msra.mxu0 0
        %952 = vmatprep.subr.bf16.mxu0 0
        %953 = vmatpush1.bf16.msra.mxu0 0
        %954 = vmatprep.subr.bf16.mxu0 0
        %955 = vmatpush1.bf16.msra.mxu0 0
        %956 = vmatprep.mubr.bf16.mxu0 0
        %957 = vmatmul.mubr.bf16.gmra.mrb[0].mxu0 %v901
        %v958 = vpop.f32.mrb[0].mxu0
        %v959 = vadd.f32 0.0, %v958
        %v960 = vpop.f32.mrb[0].mxu0
        %v961 = vpop.f32.mrb[0].mxu0
        %v962 = vadd.f32 0.0, %v961
        %v963 = vpop.f32.mrb[0].mxu0
        %964 = vmatprep.mubr.bf16.mxu0 0
        %965 = vmatmul.mubr.bf16.gmra.mrb[0].mxu0 %v904
        %v966 = vpop.f32.mrb[0].mxu0
        %v967 = vadd.f32 0.0, %v966
        %v968 = vpop.f32.mrb[0].mxu0
        %v969 = vpop.f32.mrb[0].mxu0
        %v970 = vadd.f32 0.0, %v969
        %v971 = vpop.f32.mrb[0].mxu0
        %972 = vmatprep.mubr.bf16.mxu0 0
        %973 = vmatmul.mubr.bf16.gmra.mrb[0].mxu0 %v907
        %v974 = vpop.f32.mrb[0].mxu0
        %v975 = vadd.f32 0.0, %v974
        %v976 = vpop.f32.mrb[0].mxu0
        %v977 = vpop.f32.mrb[0].mxu0
        %v978 = vadd.f32 0.0, %v977
        %v979 = vpop.f32.mrb[0].mxu0
        %980 = vmatprep.mubr.bf16.mxu0 0
        %981 = vmatmul.mubr.bf16.gmra.mrb[0].mxu0 %v910
        %v982 = vpop.f32.mrb[0].mxu0
        %v983 = vadd.f32 0.0, %v982
        %v984 = vpop.f32.mrb[0].mxu0
        %v985 = vpop.f32.mrb[0].mxu0
        %v986 = vadd.f32 0.0, %v985
        %v987 = vpop.f32.mrb[0].mxu0
        %988 = vmatprep.mubr.bf16.mxu0 0
        %989 = vmatmul.mubr.bf16.gmra.mrb[0].mxu0 %v913
        %v990 = vpop.f32.mrb[0].mxu0
        %v991 = vadd.f32 0.0, %v990
        %v992 = vpop.f32.mrb[0].mxu0
        %v993 = vpop.f32.mrb[0].mxu0
        %v994 = vadd.f32 0.0, %v993
        %v995 = vpop.f32.mrb[0].mxu0
        %996 = vmatprep.mubr.bf16.mxu0 0
        %997 = vmatmul.mubr.bf16.gmra.mrb[0].mxu0 %v916
        %v998 = vpop.f32.mrb[0].mxu0
        %v999 = vadd.f32 0.0, %v998
        %v1000 = vpop.f32.mrb[0].mxu0
        %v1001 = vpop.f32.mrb[0].mxu0
        %v1002 = vadd.f32 0.0, %v1001
        %v1003 = vpop.f32.mrb[0].mxu0
        %1004 = vmatprep.mubr.bf16.mxu0 0
        %1005 = vmatmul.mubr.bf16.gmra.mrb[0].mxu0 %v919
        %v1006 = vpop.f32.mrb[0].mxu0
        %v1007 = vadd.f32 0.0, %v1006
        %v1008 = vpop.f32.mrb[0].mxu0
        %v1009 = vpop.f32.mrb[0].mxu0
        %v1010 = vadd.f32 0.0, %v1009
        %v1011 = vpop.f32.mrb[0].mxu0
        %1012 = vmatprep.mubr.bf16.mxu0 0
        %1013 = vmatmul.mubr.bf16.gmra.mrb[0].mxu0 %v922
        %v1014 = vpop.f32.mrb[0].mxu0
        %v1015 = vadd.f32 0.0, %v1014
        %v1016 = vpop.f32.mrb[0].mxu0
        %v1017 = vpop.f32.mrb[0].mxu0
        %v1018 = vadd.f32 0.0, %v1017
        %v1019 = vpop.f32.mrb[0].mxu0
        %1020 = vdwg.mxu0
        %v1037 = vunpack.c.l.b16 %v722
        %v1038 = vunpack.c.l.b16 %v723
        %v1039 = vunpack.c.l.b16 %v724
        %v1040 = vunpack.c.l.b16 %v725
        %v1041 = vunpack.c.l.b16 %v726
        %v1042 = vunpack.c.l.b16 %v727
        %v1043 = vunpack.c.l.b16 %v728
        %v1044 = vunpack.c.l.b16 %v729
        %v1045 = vunpack.c.l.b16 %v730
        %v1046 = vunpack.c.l.b16 %v731
        %v1047 = vunpack.c.l.b16 %v732
        %v1048 = vunpack.c.l.b16 %v733
        %v1049 = vunpack.c.l.b16 %v734
        %v1050 = vunpack.c.l.b16 %v735
        %v1051 = vunpack.c.l.b16 %v736
        %v1052 = vunpack.c.l.b16 %v737
        %v1053 = vpack.c.b16 %v1038, %v1037
        %v1054 = vpack.c.b16 %v1040, %v1039
        %v1055 = vpack.c.b16 %v1042, %v1041
        %v1056 = vpack.c.b16 %v1044, %v1043
        %v1057 = vpack.c.b16 %v1046, %v1045
        %v1058 = vpack.c.b16 %v1048, %v1047
        %v1059 = vpack.c.b16 %v1050, %v1049
        %v1060 = vpack.c.b16 %v1052, %v1051
        %v1062 = vsel %vm899, %v1053, 0
        %v1065 = vsel %vm899, %v1054, 0
        %v1068 = vsel %vm899, %v1055, 0
        %v1071 = vsel %vm899, %v1056, 0
        %v1074 = vsel %vm899, %v1057, 0
        %v1077 = vsel %vm899, %v1058, 0
        %v1080 = vsel %vm899, %v1059, 0
        %v1083 = vsel %vm899, %v1060, 0
        %1085 = vmatprep.subr.bf16.mxu0 0
        %1086 = vmatpush1.bf16.msra.mxu0 %v716
        %1087 = vmatprep.subr.bf16.mxu0 0
        %1088 = vmatpush1.bf16.msra.mxu0 %v717
        %1089 = vmatprep.subr.bf16.mxu0 0
        %1090 = vmatpush1.bf16.msra.mxu0 %v718
        %1091 = vmatprep.subr.bf16.mxu0 0
        %1092 = vmatpush1.bf16.msra.mxu0 %v719
        %1093 = vmatprep.subr.bf16.mxu0 0
        %1094 = vmatpush1.bf16.msra.mxu0 %v720
        %1095 = vmatprep.subr.bf16.mxu0 0
        %1096 = vmatpush1.bf16.msra.mxu0 %v721
        %1097 = vmatprep.subr.bf16.mxu0 0
        %1098 = vmatpush1.bf16.msra.mxu0 0
        %1099 = vmatprep.subr.bf16.mxu0 0
        %1100 = vmatpush1.bf16.msra.mxu0 0
        %1101 = vmatprep.subr.bf16.mxu0 0
        %1102 = vmatpush1.bf16.msra.mxu0 0
        %1103 = vmatprep.subr.bf16.mxu0 0
        %1104 = vmatpush1.bf16.msra.mxu0 0
        %1105 = vmatprep.subr.bf16.mxu0 0
        %1106 = vmatpush1.bf16.msra.mxu0 0
        %1107 = vmatprep.subr.bf16.mxu0 0
        %1108 = vmatpush1.bf16.msra.mxu0 0
        %1109 = vmatprep.subr.bf16.mxu0 0
        %1110 = vmatpush1.bf16.msra.mxu0 0
        %1111 = vmatprep.subr.bf16.mxu0 0
        %1112 = vmatpush1.bf16.msra.mxu0 0
        %1113 = vmatprep.subr.bf16.mxu0 0
        %1114 = vmatpush1.bf16.msra.mxu0 0
        %1115 = vmatprep.subr.bf16.mxu0 0
        %1116 = vmatpush1.bf16.msra.mxu0 0
        %1117 = vmatprep.mubr.bf16.mxu0 0
        %1118 = vmatmul.mubr.bf16.gmra.mrb[0].mxu0 %v1062
        %v1119 = vpop.f32.mrb[0].mxu0
        %v1120 = vadd.f32 %v959, %v1119
        %v1121 = vpop.f32.mrb[0].mxu0
        %v1122 = vpop.f32.mrb[0].mxu0
        %v1123 = vadd.f32 %v962, %v1122
        %v1124 = vpop.f32.mrb[0].mxu0
        %1125 = vmatprep.mubr.bf16.mxu0 0
        %1126 = vmatmul.mubr.bf16.gmra.mrb[0].mxu0 %v1065
        %v1127 = vpop.f32.mrb[0].mxu0
        %v1128 = vadd.f32 %v967, %v1127
        %v1129 = vpop.f32.mrb[0].mxu0
        %v1130 = vpop.f32.mrb[0].mxu0
        %v1131 = vadd.f32 %v970, %v1130
        %v1132 = vpop.f32.mrb[0].mxu0
        %1133 = vmatprep.mubr.bf16.mxu0 0
        %1134 = vmatmul.mubr.bf16.gmra.mrb[0].mxu0 %v1068
        %v1135 = vpop.f32.mrb[0].mxu0
        %v1136 = vadd.f32 %v975, %v1135
        %v1137 = vpop.f32.mrb[0].mxu0
        %v1138 = vpop.f32.mrb[0].mxu0
        %v1139 = vadd.f32 %v978, %v1138
        %v1140 = vpop.f32.mrb[0].mxu0
        %1141 = vmatprep.mubr.bf16.mxu0 0
        %1142 = vmatmul.mubr.bf16.gmra.mrb[0].mxu0 %v1071
        %v1143 = vpop.f32.mrb[0].mxu0
        %v1144 = vadd.f32 %v983, %v1143
        %v1145 = vpop.f32.mrb[0].mxu0
        %v1146 = vpop.f32.mrb[0].mxu0
        %v1147 = vadd.f32 %v986, %v1146
        %v1148 = vpop.f32.mrb[0].mxu0
        %1149 = vmatprep.mubr.bf16.mxu0 0
        %1150 = vmatmul.mubr.bf16.gmra.mrb[0].mxu0 %v1074
        %v1151 = vpop.f32.mrb[0].mxu0
        %v1152 = vadd.f32 %v991, %v1151
        %v1153 = vpop.f32.mrb[0].mxu0
        %v1154 = vpop.f32.mrb[0].mxu0
        %v1155 = vadd.f32 %v994, %v1154
        %v1156 = vpop.f32.mrb[0].mxu0
        %1157 = vmatprep.mubr.bf16.mxu0 0
        %1158 = vmatmul.mubr.bf16.gmra.mrb[0].mxu0 %v1077
        %v1159 = vpop.f32.mrb[0].mxu0
        %v1160 = vadd.f32 %v999, %v1159
        %v1161 = vpop.f32.mrb[0].mxu0
        %v1162 = vpop.f32.mrb[0].mxu0
        %v1163 = vadd.f32 %v1002, %v1162
        %v1164 = vpop.f32.mrb[0].mxu0
        %1165 = vmatprep.mubr.bf16.mxu0 0
        %1166 = vmatmul.mubr.bf16.gmra.mrb[0].mxu0 %v1080
        %v1167 = vpop.f32.mrb[0].mxu0
        %v1168 = vadd.f32 %v1007, %v1167
        %v1169 = vpop.f32.mrb[0].mxu0
        %v1170 = vpop.f32.mrb[0].mxu0
        %v1171 = vadd.f32 %v1010, %v1170
        %v1172 = vpop.f32.mrb[0].mxu0
        %1173 = vmatprep.mubr.bf16.mxu0 0
        %1174 = vmatmul.mubr.bf16.gmra.mrb[0].mxu0 %v1083
        %v1175 = vpop.f32.mrb[0].mxu0
        %v1176 = vadd.f32 %v1015, %v1175
        %v1177 = vpop.f32.mrb[0].mxu0
        %v1178 = vpop.f32.mrb[0].mxu0
        %v1179 = vadd.f32 %v1018, %v1178
        %v1180 = vpop.f32.mrb[0].mxu0
        %1181 = vdwg.mxu0
        %s1182 = scalar_lea.vmem %s1, 32
        %v1183 = vld [vmem:[%s1182] sm:$0xf]
        %v1184 = vld [vmem:[%s1182 + $0x4] sm:$0xf]
        %v1185 = vld [vmem:[%s1182 + $0x8] sm:$0xf]
        %v1186 = vld [vmem:[%s1182 + $0xc] sm:$0xf]
        %v1191 = vunpack.c.l.b16 %v1183
        %v1192 = vunpack.c.l.b16 %v1184
        %v1193 = vunpack.c.l.b16 %v1185
        %v1194 = vunpack.c.l.b16 %v1186
        %v1195 = vpack.c.b16 %v1192, %v1191
        %v1196 = vpack.c.b16 %v1194, %v1193
        %1199 = vmatprep.subr.bf16.mxu0 0
        %1200 = vmatpush1.bf16.msra.mxu0 %v1195
        %1201 = vmatprep.subr.bf16.mxu0 0
        %1202 = vmatpush1.bf16.msra.mxu0 %v1196
        %1203 = vmatprep.subr.bf16.mxu0 0
        %1204 = vmatpush1.bf16.msra.mxu0 0
        %1205 = vmatprep.subr.bf16.mxu0 0
        %1206 = vmatpush1.bf16.msra.mxu0 0
        %1207 = vmatprep.subr.bf16.mxu0 0
        %1208 = vmatpush1.bf16.msra.mxu0 0
        %1209 = vmatprep.subr.bf16.mxu0 0
        %1210 = vmatpush1.bf16.msra.mxu0 0
        %1211 = vmatprep.subr.bf16.mxu0 0
        %1212 = vmatpush1.bf16.msra.mxu0 0
        %1213 = vmatprep.subr.bf16.mxu0 0
        %1214 = vmatpush1.bf16.msra.mxu0 0
        %1215 = vmatprep.subr.bf16.mxu0 0
        %1216 = vmatpush1.bf16.msra.mxu0 0
        %1217 = vmatprep.subr.bf16.mxu0 0
        %1218 = vmatpush1.bf16.msra.mxu0 0
        %1219 = vmatprep.subr.bf16.mxu0 0
        %1220 = vmatpush1.bf16.msra.mxu0 0
        %1221 = vmatprep.subr.bf16.mxu0 0
        %1222 = vmatpush1.bf16.msra.mxu0 0
        %1223 = vmatprep.subr.bf16.mxu0 0
        %1224 = vmatpush1.bf16.msra.mxu0 0
        %1225 = vmatprep.subr.bf16.mxu0 0
        %1226 = vmatpush1.bf16.msra.mxu0 0
        %1227 = vmatprep.subr.bf16.mxu0 0
        %1228 = vmatpush1.bf16.msra.mxu0 0
        %1229 = vmatprep.subr.bf16.mxu0 0
        %1230 = vmatpush1.bf16.msra.mxu0 0
        %1231 = vmatprep.mubr.bf16.mxu0 0
        %1232 = vmatmul.mubr.bf16.gmra.mrb[0].mxu0 %v618
        %v1233 = vpop.f32.mrb[0].mxu0
        %v1234 = vadd.f32 0.0, %v1233
        %v1235 = vpop.f32.mrb[0].mxu0
        %v1236 = vpop.f32.mrb[0].mxu0
        %v1237 = vadd.f32 0.0, %v1236
        %v1238 = vpop.f32.mrb[0].mxu0
        %1239 = vmatprep.mubr.bf16.mxu0 0
        %1240 = vmatmul.mubr.bf16.gmra.mrb[0].mxu0 %v621
        %v1241 = vpop.f32.mrb[0].mxu0
        %v1242 = vadd.f32 0.0, %v1241
        %v1243 = vpop.f32.mrb[0].mxu0
        %v1244 = vpop.f32.mrb[0].mxu0
        %v1245 = vadd.f32 0.0, %v1244
        %v1246 = vpop.f32.mrb[0].mxu0
        %1247 = vmatprep.mubr.bf16.mxu0 0
        %1248 = vmatmul.mubr.bf16.gmra.mrb[0].mxu0 %v624
        %v1249 = vpop.f32.mrb[0].mxu0
        %v1250 = vadd.f32 0.0, %v1249
        %v1251 = vpop.f32.mrb[0].mxu0
        %v1252 = vpop.f32.mrb[0].mxu0
        %v1253 = vadd.f32 0.0, %v1252
        %v1254 = vpop.f32.mrb[0].mxu0
        %1255 = vmatprep.mubr.bf16.mxu0 0
        %1256 = vmatmul.mubr.bf16.gmra.mrb[0].mxu0 %v627
        %v1257 = vpop.f32.mrb[0].mxu0
        %v1258 = vadd.f32 0.0, %v1257
        %v1259 = vpop.f32.mrb[0].mxu0
        %v1260 = vpop.f32.mrb[0].mxu0
        %v1261 = vadd.f32 0.0, %v1260
        %v1262 = vpop.f32.mrb[0].mxu0
        %1263 = vmatprep.mubr.bf16.mxu0 0
        %1264 = vmatmul.mubr.bf16.gmra.mrb[0].mxu0 %v630
        %v1265 = vpop.f32.mrb[0].mxu0
        %v1266 = vadd.f32 0.0, %v1265
        %v1267 = vpop.f32.mrb[0].mxu0
        %v1268 = vpop.f32.mrb[0].mxu0
        %v1269 = vadd.f32 0.0, %v1268
        %v1270 = vpop.f32.mrb[0].mxu0
        %1271 = vmatprep.mubr.bf16.mxu0 0
        %1272 = vmatmul.mubr.bf16.gmra.mrb[0].mxu0 %v633
        %v1273 = vpop.f32.mrb[0].mxu0
        %v1274 = vadd.f32 0.0, %v1273
        %v1275 = vpop.f32.mrb[0].mxu0
        %v1276 = vpop.f32.mrb[0].mxu0
        %v1277 = vadd.f32 0.0, %v1276
        %v1278 = vpop.f32.mrb[0].mxu0
        %1279 = vdwg.mxu0
        %v1280 = vpack.c.bf16 %v1237, %v1234
        %v1281 = vpack.c.bf16 %v1245, %v1242
        %v1282 = vpack.c.bf16 %v1253, %v1250
        %v1283 = vpack.c.bf16 %v1261, %v1258
        %v1284 = vpack.c.bf16 %v1269, %v1266
        %v1285 = vpack.c.bf16 %v1277, %v1274
        %s1286 = scalar_lea.vmem %s2, 128
        %v1287 = vld [vmem:[%s1286] sm:$0xf]
        %v1288 = vld [vmem:[%s1286 + $0x4] sm:$0xf]
        %v1289 = vld [vmem:[%s1286 + $0x8] sm:$0xf]
        %v1290 = vld [vmem:[%s1286 + $0xc] sm:$0xf]
        %v1291 = vld [vmem:[%s1286 + $0x10] sm:$0xf]
        %v1292 = vld [vmem:[%s1286 + $0x14] sm:$0xf]
        %v1293 = vld [vmem:[%s1286 + $0x18] sm:$0xf]
        %v1294 = vld [vmem:[%s1286 + $0x1c] sm:$0xf]
        %v1295 = vld [vmem:[%s1286 + $0x20] sm:$0xf]
        %v1296 = vld [vmem:[%s1286 + $0x24] sm:$0xf]
        %v1297 = vld [vmem:[%s1286 + $0x28] sm:$0xf]
        %v1298 = vld [vmem:[%s1286 + $0x2c] sm:$0xf]
        %v1299 = vld [vmem:[%s1286 + $0x30] sm:$0xf]
        %v1300 = vld [vmem:[%s1286 + $0x34] sm:$0xf]
        %v1301 = vld [vmem:[%s1286 + $0x38] sm:$0xf]
        %v1302 = vld [vmem:[%s1286 + $0x3c] sm:$0xf]
        %v1319 = vunpack.c.l.b16 %v1287
        %v1320 = vunpack.c.l.b16 %v1288
        %v1321 = vunpack.c.l.b16 %v1289
        %v1322 = vunpack.c.l.b16 %v1290
        %v1323 = vunpack.c.l.b16 %v1291
        %v1324 = vunpack.c.l.b16 %v1292
        %v1325 = vunpack.c.l.b16 %v1293
        %v1326 = vunpack.c.l.b16 %v1294
        %v1327 = vunpack.c.l.b16 %v1295
        %v1328 = vunpack.c.l.b16 %v1296
        %v1329 = vunpack.c.l.b16 %v1297
        %v1330 = vunpack.c.l.b16 %v1298
        %v1331 = vunpack.c.l.b16 %v1299
        %v1332 = vunpack.c.l.b16 %v1300
        %v1333 = vunpack.c.l.b16 %v1301
        %v1334 = vunpack.c.l.b16 %v1302
        %v1335 = vpack.c.b16 %v1320, %v1319
        %v1336 = vpack.c.b16 %v1322, %v1321
        %v1337 = vpack.c.b16 %v1324, %v1323
        %v1338 = vpack.c.b16 %v1326, %v1325
        %v1339 = vpack.c.b16 %v1328, %v1327
        %v1340 = vpack.c.b16 %v1330, %v1329
        %v1341 = vpack.c.b16 %v1332, %v1331
        %v1342 = vpack.c.b16 %v1334, %v1333
        %v1344 = vsel %vm899, %v1335, 0
        %v1347 = vsel %vm899, %v1336, 0
        %v1350 = vsel %vm899, %v1337, 0
        %v1353 = vsel %vm899, %v1338, 0
        %v1356 = vsel %vm899, %v1339, 0
        %v1359 = vsel %vm899, %v1340, 0
        %v1362 = vsel %vm899, %v1341, 0
        %v1365 = vsel %vm899, %v1342, 0
        %1367 = vmatprep.subr.bf16.mxu0 0
        %1368 = vmatpush1.bf16.msra.mxu0 %v1280
        %1369 = vmatprep.subr.bf16.mxu0 0
        %1370 = vmatpush1.bf16.msra.mxu0 %v1281
        %1371 = vmatprep.subr.bf16.mxu0 0
        %1372 = vmatpush1.bf16.msra.mxu0 %v1282
        %1373 = vmatprep.subr.bf16.mxu0 0
        %1374 = vmatpush1.bf16.msra.mxu0 %v1283
        %1375 = vmatprep.subr.bf16.mxu0 0
        %1376 = vmatpush1.bf16.msra.mxu0 %v1284
        %1377 = vmatprep.subr.bf16.mxu0 0
        %1378 = vmatpush1.bf16.msra.mxu0 %v1285
        %1379 = vmatprep.subr.bf16.mxu0 0
        %1380 = vmatpush1.bf16.msra.mxu0 0
        %1381 = vmatprep.subr.bf16.mxu0 0
        %1382 = vmatpush1.bf16.msra.mxu0 0
        %1383 = vmatprep.subr.bf16.mxu0 0
        %1384 = vmatpush1.bf16.msra.mxu0 0
        %1385 = vmatprep.subr.bf16.mxu0 0
        %1386 = vmatpush1.bf16.msra.mxu0 0
        %1387 = vmatprep.subr.bf16.mxu0 0
        %1388 = vmatpush1.bf16.msra.mxu0 0
        %1389 = vmatprep.subr.bf16.mxu0 0
        %1390 = vmatpush1.bf16.msra.mxu0 0
        %1391 = vmatprep.subr.bf16.mxu0 0
        %1392 = vmatpush1.bf16.msra.mxu0 0
        %1393 = vmatprep.subr.bf16.mxu0 0
        %1394 = vmatpush1.bf16.msra.mxu0 0
        %1395 = vmatprep.subr.bf16.mxu0 0
        %1396 = vmatpush1.bf16.msra.mxu0 0
        %1397 = vmatprep.subr.bf16.mxu0 0
        %1398 = vmatpush1.bf16.msra.mxu0 0
        %1399 = vmatprep.mubr.bf16.mxu0 0
        %1400 = vmatmul.mubr.bf16.gmra.mrb[0].mxu0 %v1344
        %v1401 = vpop.f32.mrb[0].mxu0
        %v1402 = vadd.f32 0.0, %v1401
        %v1403 = vpop.f32.mrb[0].mxu0
        %v1404 = vpop.f32.mrb[0].mxu0
        %v1405 = vadd.f32 0.0, %v1404
        %v1406 = vpop.f32.mrb[0].mxu0
        %1407 = vmatprep.mubr.bf16.mxu0 0
        %1408 = vmatmul.mubr.bf16.gmra.mrb[0].mxu0 %v1347
        %v1409 = vpop.f32.mrb[0].mxu0
        %v1410 = vadd.f32 0.0, %v1409
        %v1411 = vpop.f32.mrb[0].mxu0
        %v1412 = vpop.f32.mrb[0].mxu0
        %v1413 = vadd.f32 0.0, %v1412
        %v1414 = vpop.f32.mrb[0].mxu0
        %1415 = vmatprep.mubr.bf16.mxu0 0
        %1416 = vmatmul.mubr.bf16.gmra.mrb[0].mxu0 %v1350
        %v1417 = vpop.f32.mrb[0].mxu0
        %v1418 = vadd.f32 0.0, %v1417
        %v1419 = vpop.f32.mrb[0].mxu0
        %v1420 = vpop.f32.mrb[0].mxu0
        %v1421 = vadd.f32 0.0, %v1420
        %v1422 = vpop.f32.mrb[0].mxu0
        %1423 = vmatprep.mubr.bf16.mxu0 0
        %1424 = vmatmul.mubr.bf16.gmra.mrb[0].mxu0 %v1353
        %v1425 = vpop.f32.mrb[0].mxu0
        %v1426 = vadd.f32 0.0, %v1425
        %v1427 = vpop.f32.mrb[0].mxu0
        %v1428 = vpop.f32.mrb[0].mxu0
        %v1429 = vadd.f32 0.0, %v1428
        %v1430 = vpop.f32.mrb[0].mxu0
        %1431 = vmatprep.mubr.bf16.mxu0 0
        %1432 = vmatmul.mubr.bf16.gmra.mrb[0].mxu0 %v1356
        %v1433 = vpop.f32.mrb[0].mxu0
        %v1434 = vadd.f32 0.0, %v1433
        %v1435 = vpop.f32.mrb[0].mxu0
        %v1436 = vpop.f32.mrb[0].mxu0
        %v1437 = vadd.f32 0.0, %v1436
        %v1438 = vpop.f32.mrb[0].mxu0
        %1439 = vmatprep.mubr.bf16.mxu0 0
        %1440 = vmatmul.mubr.bf16.gmra.mrb[0].mxu0 %v1359
        %v1441 = vpop.f32.mrb[0].mxu0
        %v1442 = vadd.f32 0.0, %v1441
        %v1443 = vpop.f32.mrb[0].mxu0
        %v1444 = vpop.f32.mrb[0].mxu0
        %v1445 = vadd.f32 0.0, %v1444
        %v1446 = vpop.f32.mrb[0].mxu0
        %1447 = vmatprep.mubr.bf16.mxu0 0
        %1448 = vmatmul.mubr.bf16.gmra.mrb[0].mxu0 %v1362
        %v1449 = vpop.f32.mrb[0].mxu0
        %v1450 = vadd.f32 0.0, %v1449
        %v1451 = vpop.f32.mrb[0].mxu0
        %v1452 = vpop.f32.mrb[0].mxu0
        %v1453 = vadd.f32 0.0, %v1452
        %v1454 = vpop.f32.mrb[0].mxu0
        %1455 = vmatprep.mubr.bf16.mxu0 0
        %1456 = vmatmul.mubr.bf16.gmra.mrb[0].mxu0 %v1365
        %v1457 = vpop.f32.mrb[0].mxu0
        %v1458 = vadd.f32 0.0, %v1457
        %v1459 = vpop.f32.mrb[0].mxu0
        %v1460 = vpop.f32.mrb[0].mxu0
        %v1461 = vadd.f32 0.0, %v1460
        %v1462 = vpop.f32.mrb[0].mxu0
        %1463 = vdwg.mxu0
        %v1464 = vadd.f32 %v1120, %v1402
        %v1465 = vadd.f32 %v1123, %v1405
        %v1466 = vadd.f32 %v1128, %v1410
        %v1467 = vadd.f32 %v1131, %v1413
        %v1468 = vadd.f32 %v1136, %v1418
        %v1469 = vadd.f32 %v1139, %v1421
        %v1470 = vadd.f32 %v1144, %v1426
        %v1471 = vadd.f32 %v1147, %v1429
        %v1472 = vadd.f32 %v1152, %v1434
        %v1473 = vadd.f32 %v1155, %v1437
        %v1474 = vadd.f32 %v1160, %v1442
        %v1475 = vadd.f32 %v1163, %v1445
        %v1476 = vadd.f32 %v1168, %v1450
        %v1477 = vadd.f32 %v1171, %v1453
        %v1478 = vadd.f32 %v1176, %v1458
        %v1479 = vadd.f32 %v1179, %v1461
        %v1480 = vld [vmem:[%s3] sm:$0xff]
        %v1481 = vld [vmem:[%s3 + $0x8] sm:$0xff]
        %v1482 = vld [vmem:[%s3 + $0x10] sm:$0xff]
        %v1483 = vld [vmem:[%s3 + $0x18] sm:$0xff]
        %v1484 = vld [vmem:[%s3 + $0x20] sm:$0xff]
        %v1485 = vld [vmem:[%s3 + $0x28] sm:$0xff]
        %v1486 = vld [vmem:[%s3 + $0x30] sm:$0xff]
        %v1487 = vld [vmem:[%s3 + $0x38] sm:$0xff]
        %v1488 = vld [vmem:[%s3 + $0x40] sm:$0xff]
        %v1489 = vld [vmem:[%s3 + $0x48] sm:$0xff]
        %v1490 = vld [vmem:[%s3 + $0x50] sm:$0xff]
        %v1491 = vld [vmem:[%s3 + $0x58] sm:$0xff]
        %v1492 = vld [vmem:[%s3 + $0x60] sm:$0xff]
        %v1493 = vld [vmem:[%s3 + $0x68] sm:$0xff]
        %v1494 = vld [vmem:[%s3 + $0x70] sm:$0xff]
        %v1495 = vld [vmem:[%s3 + $0x78] sm:$0xff]
        %1497 = vset.pattern.permute.xlu0 0
        %1498 = vperm.xlu0 %1497, %v1480
        %v1499 = vpop.permute.xlu0 %1498
        %1502 = vset.pattern.permute.xlu0 0
        %1503 = vperm.xlu0 %1502, %v1481
        %v1504 = vpop.permute.xlu0 %1503
        %1507 = vset.pattern.permute.xlu0 0
        %1508 = vperm.xlu0 %1507, %v1482
        %v1509 = vpop.permute.xlu0 %1508
        %1512 = vset.pattern.permute.xlu0 0
        %1513 = vperm.xlu0 %1512, %v1483
        %v1514 = vpop.permute.xlu0 %1513
        %1517 = vset.pattern.permute.xlu0 0
        %1518 = vperm.xlu0 %1517, %v1484
        %v1519 = vpop.permute.xlu0 %1518
        %1522 = vset.pattern.permute.xlu0 0
        %1523 = vperm.xlu0 %1522, %v1485
        %v1524 = vpop.permute.xlu0 %1523
        %1527 = vset.pattern.permute.xlu0 0
        %1528 = vperm.xlu0 %1527, %v1486
        %v1529 = vpop.permute.xlu0 %1528
        %1532 = vset.pattern.permute.xlu0 0
        %1533 = vperm.xlu0 %1532, %v1487
        %v1534 = vpop.permute.xlu0 %1533
        %1537 = vset.pattern.permute.xlu0 0
        %1538 = vperm.xlu0 %1537, %v1488
        %v1539 = vpop.permute.xlu0 %1538
        %1542 = vset.pattern.permute.xlu0 0
        %1543 = vperm.xlu0 %1542, %v1489
        %v1544 = vpop.permute.xlu0 %1543
        %1547 = vset.pattern.permute.xlu0 0
        %1548 = vperm.xlu0 %1547, %v1490
        %v1549 = vpop.permute.xlu0 %1548
        %1552 = vset.pattern.permute.xlu0 0
        %1553 = vperm.xlu0 %1552, %v1491
        %v1554 = vpop.permute.xlu0 %1553
        %1557 = vset.pattern.permute.xlu0 0
        %1558 = vperm.xlu0 %1557, %v1492
        %v1559 = vpop.permute.xlu0 %1558
        %1562 = vset.pattern.permute.xlu0 0
        %1563 = vperm.xlu0 %1562, %v1493
        %v1564 = vpop.permute.xlu0 %1563
        %1567 = vset.pattern.permute.xlu0 0
        %1568 = vperm.xlu0 %1567, %v1494
        %v1569 = vpop.permute.xlu0 %1568
        %1572 = vset.pattern.permute.xlu0 0
        %1573 = vperm.xlu0 %1572, %v1495
        %v1574 = vpop.permute.xlu0 %1573
        %v1576 = vadd.f32 %v1464, %v1499
        %v1577 = vadd.f32 %v1465, %v1504
        %v1578 = vadd.f32 %v1466, %v1509
        %v1579 = vadd.f32 %v1467, %v1514
        %v1580 = vadd.f32 %v1468, %v1519
        %v1581 = vadd.f32 %v1469, %v1524
        %v1582 = vadd.f32 %v1470, %v1529
        %v1583 = vadd.f32 %v1471, %v1534
        %v1584 = vadd.f32 %v1472, %v1539
        %v1585 = vadd.f32 %v1473, %v1544
        %v1586 = vadd.f32 %v1474, %v1549
        %v1587 = vadd.f32 %v1475, %v1554
        %v1588 = vadd.f32 %v1476, %v1559
        %v1589 = vadd.f32 %v1477, %v1564
        %v1590 = vadd.f32 %v1478, %v1569
        %v1591 = vadd.f32 %v1479, %v1574
        %v1592 = vmax.f32 %v1576, 0.0
        %v1593 = vmax.f32 %v1577, 0.0
        %v1594 = vmax.f32 %v1578, 0.0
        %v1595 = vmax.f32 %v1579, 0.0
        %v1596 = vmax.f32 %v1580, 0.0
        %v1597 = vmax.f32 %v1581, 0.0
        %v1598 = vmax.f32 %v1582, 0.0
        %v1599 = vmax.f32 %v1583, 0.0
        %v1600 = vmax.f32 %v1584, 0.0
        %v1601 = vmax.f32 %v1585, 0.0
        %v1602 = vmax.f32 %v1586, 0.0
        %v1603 = vmax.f32 %v1587, 0.0
        %v1604 = vmax.f32 %v1588, 0.0
        %v1605 = vmax.f32 %v1589, 0.0
        %v1606 = vmax.f32 %v1590, 0.0
        %v1607 = vmax.f32 %v1591, 0.0
        %vm1608 = vcmask 130048
        %1609 = vst.msk [vmem:[%s515] sm:$0xff] %vm1608, %v1592
        %1610 = vst.msk [vmem:[%s515 + $0x8] sm:$0xff] %vm1608, %v1593
        %1611 = vst.msk [vmem:[%s515 + $0x10] sm:$0xff] %vm1608, %v1594
        %1612 = vst.msk [vmem:[%s515 + $0x18] sm:$0xff] %vm1608, %v1595
        %1613 = vst.msk [vmem:[%s515 + $0x20] sm:$0xff] %vm1608, %v1596
        %1614 = vst.msk [vmem:[%s515 + $0x28] sm:$0xff] %vm1608, %v1597
        %1615 = vst.msk [vmem:[%s515 + $0x30] sm:$0xff] %vm1608, %v1598
        %1616 = vst.msk [vmem:[%s515 + $0x38] sm:$0xff] %vm1608, %v1599
        %1617 = vst.msk [vmem:[%s515 + $0x40] sm:$0xff] %vm1608, %v1600
        %1618 = vst.msk [vmem:[%s515 + $0x48] sm:$0xff] %vm1608, %v1601
        %1619 = vst.msk [vmem:[%s515 + $0x50] sm:$0xff] %vm1608, %v1602
        %1620 = vst.msk [vmem:[%s515 + $0x58] sm:$0xff] %vm1608, %v1603
        %1621 = vst.msk [vmem:[%s515 + $0x60] sm:$0xff] %vm1608, %v1604
        %1622 = vst.msk [vmem:[%s515 + $0x68] sm:$0xff] %vm1608, %v1605
        %1623 = vst.msk [vmem:[%s515 + $0x70] sm:$0xff] %vm1608, %v1606
        %1624 = vst.msk [vmem:[%s515 + $0x78] sm:$0xff] %vm1608, %v1607
        %v1625 = vpack.c.bf16 %v1593, %v1592
        %v1626 = vpack.c.bf16 %v1595, %v1594
        %v1627 = vpack.c.bf16 %v1597, %v1596
        %v1628 = vpack.c.bf16 %v1599, %v1598
        %v1629 = vpack.c.bf16 %v1601, %v1600
        %v1630 = vpack.c.bf16 %v1603, %v1602
        %v1631 = vpack.c.bf16 %v1605, %v1604
        %v1632 = vpack.c.bf16 %v1607, %v1606
        %v1633 = vld [vmem:[%s4] sm:$0xf]
        %v1634 = vld [vmem:[%s4 + $0x4] sm:$0xf]
        %v1637 = vunpack.c.l.b16 %v1633
        %v1638 = vunpack.c.l.b16 %v1634
        %v1639 = vpack.c.b16 %v1638, %v1637
        %v1642 = vsel %vm1608, %v1625, 0
        %v1645 = vsel %vm1608, %v1626, 0
        %v1648 = vsel %vm1608, %v1627, 0
        %v1651 = vsel %vm1608, %v1628, 0
        %v1654 = vsel %vm1608, %v1629, 0
        %v1657 = vsel %vm1608, %v1630, 0
        %v1660 = vsel %vm1608, %v1631, 0
        %v1663 = vsel %vm1608, %v1632, 0
        %1665 = vmatprep.subr.bf16.mxu0 0
        %1666 = vmatpush1.bf16.msra.mxu0 %v1639
        %1667 = vmatprep.subr.bf16.mxu0 0
        %1668 = vmatpush1.bf16.msra.mxu0 0
        %1669 = vmatprep.subr.bf16.mxu0 0
        %1670 = vmatpush1.bf16.msra.mxu0 0
        %1671 = vmatprep.subr.bf16.mxu0 0
        %1672 = vmatpush1.bf16.msra.mxu0 0
        %1673 = vmatprep.subr.bf16.mxu0 0
        %1674 = vmatpush1.bf16.msra.mxu0 0
        %1675 = vmatprep.subr.bf16.mxu0 0
        %1676 = vmatpush1.bf16.msra.mxu0 0
        %1677 = vmatprep.subr.bf16.mxu0 0
        %1678 = vmatpush1.bf16.msra.mxu0 0
        %1679 = vmatprep.subr.bf16.mxu0 0
        %1680 = vmatpush1.bf16.msra.mxu0 0
        %1681 = vmatprep.subr.bf16.mxu0 0
        %1682 = vmatpush1.bf16.msra.mxu0 0
        %1683 = vmatprep.subr.bf16.mxu0 0
        %1684 = vmatpush1.bf16.msra.mxu0 0
        %1685 = vmatprep.subr.bf16.mxu0 0
        %1686 = vmatpush1.bf16.msra.mxu0 0
        %1687 = vmatprep.subr.bf16.mxu0 0
        %1688 = vmatpush1.bf16.msra.mxu0 0
        %1689 = vmatprep.subr.bf16.mxu0 0
        %1690 = vmatpush1.bf16.msra.mxu0 0
        %1691 = vmatprep.subr.bf16.mxu0 0
        %1692 = vmatpush1.bf16.msra.mxu0 0
        %1693 = vmatprep.subr.bf16.mxu0 0
        %1694 = vmatpush1.bf16.msra.mxu0 0
        %1695 = vmatprep.subr.bf16.mxu0 0
        %1696 = vmatpush1.bf16.msra.mxu0 0
        %1697 = vmatprep.mubr.bf16.mxu0 0
        %1698 = vmatmul.mubr.bf16.gmra.mrb[0].mxu0 %v1642
        %v1699 = vpop.f32.mrb[0].mxu0
        %v1700 = vadd.f32 0.0, %v1699
        %v1701 = vpop.f32.mrb[0].mxu0
        %v1702 = vpop.f32.mrb[0].mxu0
        %v1703 = vadd.f32 0.0, %v1702
        %v1704 = vpop.f32.mrb[0].mxu0
        %1705 = vmatprep.mubr.bf16.mxu0 0
        %1706 = vmatmul.mubr.bf16.gmra.mrb[0].mxu0 %v1645
        %v1707 = vpop.f32.mrb[0].mxu0
        %v1708 = vadd.f32 0.0, %v1707
        %v1709 = vpop.f32.mrb[0].mxu0
        %v1710 = vpop.f32.mrb[0].mxu0
        %v1711 = vadd.f32 0.0, %v1710
        %v1712 = vpop.f32.mrb[0].mxu0
        %1713 = vmatprep.mubr.bf16.mxu0 0
        %1714 = vmatmul.mubr.bf16.gmra.mrb[0].mxu0 %v1648
        %v1715 = vpop.f32.mrb[0].mxu0
        %v1716 = vadd.f32 0.0, %v1715
        %v1717 = vpop.f32.mrb[0].mxu0
        %v1718 = vpop.f32.mrb[0].mxu0
        %v1719 = vadd.f32 0.0, %v1718
        %v1720 = vpop.f32.mrb[0].mxu0
        %1721 = vmatprep.mubr.bf16.mxu0 0
        %1722 = vmatmul.mubr.bf16.gmra.mrb[0].mxu0 %v1651
        %v1723 = vpop.f32.mrb[0].mxu0
        %v1724 = vadd.f32 0.0, %v1723
        %v1725 = vpop.f32.mrb[0].mxu0
        %v1726 = vpop.f32.mrb[0].mxu0
        %v1727 = vadd.f32 0.0, %v1726
        %v1728 = vpop.f32.mrb[0].mxu0
        %1729 = vmatprep.mubr.bf16.mxu0 0
        %1730 = vmatmul.mubr.bf16.gmra.mrb[0].mxu0 %v1654
        %v1731 = vpop.f32.mrb[0].mxu0
        %v1732 = vadd.f32 0.0, %v1731
        %v1733 = vpop.f32.mrb[0].mxu0
        %v1734 = vpop.f32.mrb[0].mxu0
        %v1735 = vadd.f32 0.0, %v1734
        %v1736 = vpop.f32.mrb[0].mxu0
        %1737 = vmatprep.mubr.bf16.mxu0 0
        %1738 = vmatmul.mubr.bf16.gmra.mrb[0].mxu0 %v1657
        %v1739 = vpop.f32.mrb[0].mxu0
        %v1740 = vadd.f32 0.0, %v1739
        %v1741 = vpop.f32.mrb[0].mxu0
        %v1742 = vpop.f32.mrb[0].mxu0
        %v1743 = vadd.f32 0.0, %v1742
        %v1744 = vpop.f32.mrb[0].mxu0
        %1745 = vmatprep.mubr.bf16.mxu0 0
        %1746 = vmatmul.mubr.bf16.gmra.mrb[0].mxu0 %v1660
        %v1747 = vpop.f32.mrb[0].mxu0
        %v1748 = vadd.f32 0.0, %v1747
        %v1749 = vpop.f32.mrb[0].mxu0
        %v1750 = vpop.f32.mrb[0].mxu0
        %v1751 = vadd.f32 0.0, %v1750
        %v1752 = vpop.f32.mrb[0].mxu0
        %1753 = vmatprep.mubr.bf16.mxu0 0
        %1754 = vmatmul.mubr.bf16.gmra.mrb[0].mxu0 %v1663
        %v1755 = vpop.f32.mrb[0].mxu0
        %v1756 = vadd.f32 0.0, %v1755
        %v1757 = vpop.f32.mrb[0].mxu0
        %v1758 = vpop.f32.mrb[0].mxu0
        %v1759 = vadd.f32 0.0, %v1758
        %v1760 = vpop.f32.mrb[0].mxu0
        %1761 = vdwg.mxu0
        %v1762 = vpack.c.bf16 %v1703, %v1700
        %v1763 = vpack.c.bf16 %v1711, %v1708
        %v1764 = vpack.c.bf16 %v1719, %v1716
        %v1765 = vpack.c.bf16 %v1727, %v1724
        %v1766 = vpack.c.bf16 %v1735, %v1732
        %v1767 = vpack.c.bf16 %v1743, %v1740
        %v1768 = vpack.c.bf16 %v1751, %v1748
        %v1769 = vpack.c.bf16 %v1759, %v1756
        %v1770 = vld [vmem:[%s5] sm:$0xf]
        %v1771 = vld [vmem:[%s5 + $0x4] sm:$0xf]
        %v1772 = vld [vmem:[%s5 + $0x8] sm:$0xf]
        %v1773 = vld [vmem:[%s5 + $0xc] sm:$0xf]
        %v1774 = vld [vmem:[%s5 + $0x10] sm:$0xf]
        %v1775 = vld [vmem:[%s5 + $0x14] sm:$0xf]
        %v1776 = vld [vmem:[%s5 + $0x18] sm:$0xf]
        %v1777 = vld [vmem:[%s5 + $0x1c] sm:$0xf]
        %v1778 = vld [vmem:[%s5 + $0x20] sm:$0xf]
        %v1779 = vld [vmem:[%s5 + $0x24] sm:$0xf]
        %v1780 = vld [vmem:[%s5 + $0x28] sm:$0xf]
        %v1781 = vld [vmem:[%s5 + $0x2c] sm:$0xf]
        %v1782 = vld [vmem:[%s5 + $0x30] sm:$0xf]
        %v1783 = vld [vmem:[%s5 + $0x34] sm:$0xf]
        %v1784 = vld [vmem:[%s5 + $0x38] sm:$0xf]
        %v1785 = vld [vmem:[%s5 + $0x3c] sm:$0xf]
        %s1786 = scalar_lea.vmem %s4, 8
        %v1787 = vld [vmem:[%s1786] sm:$0xf]
        %v1788 = vld [vmem:[%s1786 + $0x4] sm:$0xf]
        %v1791 = vunpack.c.l.b16 %v1787
        %v1792 = vunpack.c.l.b16 %v1788
        %v1793 = vpack.c.b16 %v1792, %v1791
        %1795 = vmatprep.subr.bf16.mxu0 0
        %1796 = vmatpush1.bf16.msra.mxu0 %v1793
        %1797 = vmatprep.subr.bf16.mxu0 0
        %1798 = vmatpush1.bf16.msra.mxu0 0
        %1799 = vmatprep.subr.bf16.mxu0 0
        %1800 = vmatpush1.bf16.msra.mxu0 0
        %1801 = vmatprep.subr.bf16.mxu0 0
        %1802 = vmatpush1.bf16.msra.mxu0 0
        %1803 = vmatprep.subr.bf16.mxu0 0
        %1804 = vmatpush1.bf16.msra.mxu0 0
        %1805 = vmatprep.subr.bf16.mxu0 0
        %1806 = vmatpush1.bf16.msra.mxu0 0
        %1807 = vmatprep.subr.bf16.mxu0 0
        %1808 = vmatpush1.bf16.msra.mxu0 0
        %1809 = vmatprep.subr.bf16.mxu0 0
        %1810 = vmatpush1.bf16.msra.mxu0 0
        %1811 = vmatprep.subr.bf16.mxu0 0
        %1812 = vmatpush1.bf16.msra.mxu0 0
        %1813 = vmatprep.subr.bf16.mxu0 0
        %1814 = vmatpush1.bf16.msra.mxu0 0
        %1815 = vmatprep.subr.bf16.mxu0 0
        %1816 = vmatpush1.bf16.msra.mxu0 0
        %1817 = vmatprep.subr.bf16.mxu0 0
        %1818 = vmatpush1.bf16.msra.mxu0 0
        %1819 = vmatprep.subr.bf16.mxu0 0
        %1820 = vmatpush1.bf16.msra.mxu0 0
        %1821 = vmatprep.subr.bf16.mxu0 0
        %1822 = vmatpush1.bf16.msra.mxu0 0
        %1823 = vmatprep.subr.bf16.mxu0 0
        %1824 = vmatpush1.bf16.msra.mxu0 0
        %1825 = vmatprep.subr.bf16.mxu0 0
        %1826 = vmatpush1.bf16.msra.mxu0 0
        %1827 = vmatprep.mubr.bf16.mxu0 0
        %1828 = vmatmul.mubr.bf16.gmra.mrb[0].mxu0 %v1642
        %v1829 = vpop.f32.mrb[0].mxu0
        %v1830 = vadd.f32 0.0, %v1829
        %v1831 = vpop.f32.mrb[0].mxu0
        %v1832 = vpop.f32.mrb[0].mxu0
        %v1833 = vadd.f32 0.0, %v1832
        %v1834 = vpop.f32.mrb[0].mxu0
        %1835 = vmatprep.mubr.bf16.mxu0 0
        %1836 = vmatmul.mubr.bf16.gmra.mrb[0].mxu0 %v1645
        %v1837 = vpop.f32.mrb[0].mxu0
        %v1838 = vadd.f32 0.0, %v1837
        %v1839 = vpop.f32.mrb[0].mxu0
        %v1840 = vpop.f32.mrb[0].mxu0
        %v1841 = vadd.f32 0.0, %v1840
        %v1842 = vpop.f32.mrb[0].mxu0
        %1843 = vmatprep.mubr.bf16.mxu0 0
        %1844 = vmatmul.mubr.bf16.gmra.mrb[0].mxu0 %v1648
        %v1845 = vpop.f32.mrb[0].mxu0
        %v1846 = vadd.f32 0.0, %v1845
        %v1847 = vpop.f32.mrb[0].mxu0
        %v1848 = vpop.f32.mrb[0].mxu0
        %v1849 = vadd.f32 0.0, %v1848
        %v1850 = vpop.f32.mrb[0].mxu0
        %1851 = vmatprep.mubr.bf16.mxu0 0
        %1852 = vmatmul.mubr.bf16.gmra.mrb[0].mxu0 %v1651
        %v1853 = vpop.f32.mrb[0].mxu0
        %v1854 = vadd.f32 0.0, %v1853
        %v1855 = vpop.f32.mrb[0].mxu0
        %v1856 = vpop.f32.mrb[0].mxu0
        %v1857 = vadd.f32 0.0, %v1856
        %v1858 = vpop.f32.mrb[0].mxu0
        %1859 = vmatprep.mubr.bf16.mxu0 0
        %1860 = vmatmul.mubr.bf16.gmra.mrb[0].mxu0 %v1654
        %v1861 = vpop.f32.mrb[0].mxu0
        %v1862 = vadd.f32 0.0, %v1861
        %v1863 = vpop.f32.mrb[0].mxu0
        %v1864 = vpop.f32.mrb[0].mxu0
        %v1865 = vadd.f32 0.0, %v1864
        %v1866 = vpop.f32.mrb[0].mxu0
        %1867 = vmatprep.mubr.bf16.mxu0 0
        %1868 = vmatmul.mubr.bf16.gmra.mrb[0].mxu0 %v1657
        %v1869 = vpop.f32.mrb[0].mxu0
        %v1870 = vadd.f32 0.0, %v1869
        %v1871 = vpop.f32.mrb[0].mxu0
        %v1872 = vpop.f32.mrb[0].mxu0
        %v1873 = vadd.f32 0.0, %v1872
        %v1874 = vpop.f32.mrb[0].mxu0
        %1875 = vmatprep.mubr.bf16.mxu0 0
        %1876 = vmatmul.mubr.bf16.gmra.mrb[0].mxu0 %v1660
        %v1877 = vpop.f32.mrb[0].mxu0
        %v1878 = vadd.f32 0.0, %v1877
        %v1879 = vpop.f32.mrb[0].mxu0
        %v1880 = vpop.f32.mrb[0].mxu0
        %v1881 = vadd.f32 0.0, %v1880
        %v1882 = vpop.f32.mrb[0].mxu0
        %1883 = vmatprep.mubr.bf16.mxu0 0
        %1884 = vmatmul.mubr.bf16.gmra.mrb[0].mxu0 %v1663
        %v1885 = vpop.f32.mrb[0].mxu0
        %v1886 = vadd.f32 0.0, %v1885
        %v1887 = vpop.f32.mrb[0].mxu0
        %v1888 = vpop.f32.mrb[0].mxu0
        %v1889 = vadd.f32 0.0, %v1888
        %v1890 = vpop.f32.mrb[0].mxu0
        %1891 = vdwg.mxu0
        %v1892 = vpack.c.bf16 %v1833, %v1830
        %v1893 = vpack.c.bf16 %v1841, %v1838
        %v1894 = vpack.c.bf16 %v1849, %v1846
        %v1895 = vpack.c.bf16 %v1857, %v1854
        %v1896 = vpack.c.bf16 %v1865, %v1862
        %v1897 = vpack.c.bf16 %v1873, %v1870
        %v1898 = vpack.c.bf16 %v1881, %v1878
        %v1899 = vpack.c.bf16 %v1889, %v1886
        %s1900 = scalar_lea.vmem %s5, 64
        %v1901 = vld [vmem:[%s1900] sm:$0xf]
        %v1902 = vld [vmem:[%s1900 + $0x4] sm:$0xf]
        %v1903 = vld [vmem:[%s1900 + $0x8] sm:$0xf]
        %v1904 = vld [vmem:[%s1900 + $0xc] sm:$0xf]
        %v1905 = vld [vmem:[%s1900 + $0x10] sm:$0xf]
        %v1906 = vld [vmem:[%s1900 + $0x14] sm:$0xf]
        %v1907 = vld [vmem:[%s1900 + $0x18] sm:$0xf]
        %v1908 = vld [vmem:[%s1900 + $0x1c] sm:$0xf]
        %v1909 = vld [vmem:[%s1900 + $0x20] sm:$0xf]
        %v1910 = vld [vmem:[%s1900 + $0x24] sm:$0xf]
        %v1911 = vld [vmem:[%s1900 + $0x28] sm:$0xf]
        %v1912 = vld [vmem:[%s1900 + $0x2c] sm:$0xf]
        %v1913 = vld [vmem:[%s1900 + $0x30] sm:$0xf]
        %v1914 = vld [vmem:[%s1900 + $0x34] sm:$0xf]
        %v1915 = vld [vmem:[%s1900 + $0x38] sm:$0xf]
        %v1916 = vld [vmem:[%s1900 + $0x3c] sm:$0xf]
        %v1933 = vunpack.c.l.b16 %v1901
        %v1934 = vunpack.c.l.b16 %v1902
        %v1935 = vunpack.c.l.b16 %v1903
        %v1936 = vunpack.c.l.b16 %v1904
        %v1937 = vunpack.c.l.b16 %v1905
        %v1938 = vunpack.c.l.b16 %v1906
        %v1939 = vunpack.c.l.b16 %v1907
        %v1940 = vunpack.c.l.b16 %v1908
        %v1941 = vunpack.c.l.b16 %v1909
        %v1942 = vunpack.c.l.b16 %v1910
        %v1943 = vunpack.c.l.b16 %v1911
        %v1944 = vunpack.c.l.b16 %v1912
        %v1945 = vunpack.c.l.b16 %v1913
        %v1946 = vunpack.c.l.b16 %v1914
        %v1947 = vunpack.c.l.b16 %v1915
        %v1948 = vunpack.c.l.b16 %v1916
        %v1949 = vpack.c.b16 %v1934, %v1933
        %v1950 = vpack.c.b16 %v1936, %v1935
        %v1951 = vpack.c.b16 %v1938, %v1937
        %v1952 = vpack.c.b16 %v1940, %v1939
        %v1953 = vpack.c.b16 %v1942, %v1941
        %v1954 = vpack.c.b16 %v1944, %v1943
        %v1955 = vpack.c.b16 %v1946, %v1945
        %v1956 = vpack.c.b16 %v1948, %v1947
        %1965 = vmatprep.subr.bf16.mxu0 0
        %1966 = vmatpush1.bf16.msra.mxu0 %v1892
        %1967 = vmatprep.subr.bf16.mxu0 0
        %1968 = vmatpush1.bf16.msra.mxu0 %v1893
        %1969 = vmatprep.subr.bf16.mxu0 0
        %1970 = vmatpush1.bf16.msra.mxu0 %v1894
        %1971 = vmatprep.subr.bf16.mxu0 0
        %1972 = vmatpush1.bf16.msra.mxu0 %v1895
        %1973 = vmatprep.subr.bf16.mxu0 0
        %1974 = vmatpush1.bf16.msra.mxu0 %v1896
        %1975 = vmatprep.subr.bf16.mxu0 0
        %1976 = vmatpush1.bf16.msra.mxu0 %v1897
        %1977 = vmatprep.subr.bf16.mxu0 0
        %1978 = vmatpush1.bf16.msra.mxu0 %v1898
        %1979 = vmatprep.subr.bf16.mxu0 0
        %1980 = vmatpush1.bf16.msra.mxu0 %v1899
        %1981 = vmatprep.subr.bf16.mxu0 0
        %1982 = vmatpush1.bf16.msra.mxu0 0
        %1983 = vmatprep.subr.bf16.mxu0 0
        %1984 = vmatpush1.bf16.msra.mxu0 0
        %1985 = vmatprep.subr.bf16.mxu0 0
        %1986 = vmatpush1.bf16.msra.mxu0 0
        %1987 = vmatprep.subr.bf16.mxu0 0
        %1988 = vmatpush1.bf16.msra.mxu0 0
        %1989 = vmatprep.subr.bf16.mxu0 0
        %1990 = vmatpush1.bf16.msra.mxu0 0
        %1991 = vmatprep.subr.bf16.mxu0 0
        %1992 = vmatpush1.bf16.msra.mxu0 0
        %1993 = vmatprep.subr.bf16.mxu0 0
        %1994 = vmatpush1.bf16.msra.mxu0 0
        %1995 = vmatprep.subr.bf16.mxu0 0
        %1996 = vmatpush1.bf16.msra.mxu0 0
        %1997 = vmatprep.mubr.bf16.mxu0 0
        %1998 = vmatmul.mubr.bf16.gmra.mrb[0].mxu0 %v1949
        %v1999 = vpop.f32.mrb[0].mxu0
        %v2000 = vadd.f32 0.0, %v1999
        %v2001 = vpop.f32.mrb[0].mxu0
        %v2002 = vpop.f32.mrb[0].mxu0
        %v2003 = vadd.f32 0.0, %v2002
        %v2004 = vpop.f32.mrb[0].mxu0
        %2005 = vmatprep.mubr.bf16.mxu0 0
        %2006 = vmatmul.mubr.bf16.gmra.mrb[0].mxu0 %v1950
        %v2007 = vpop.f32.mrb[0].mxu0
        %v2008 = vadd.f32 0.0, %v2007
        %v2009 = vpop.f32.mrb[0].mxu0
        %v2010 = vpop.f32.mrb[0].mxu0
        %v2011 = vadd.f32 0.0, %v2010
        %v2012 = vpop.f32.mrb[0].mxu0
        %2013 = vmatprep.mubr.bf16.mxu0 0
        %2014 = vmatmul.mubr.bf16.gmra.mrb[0].mxu0 %v1951
        %v2015 = vpop.f32.mrb[0].mxu0
        %v2016 = vadd.f32 0.0, %v2015
        %v2017 = vpop.f32.mrb[0].mxu0
        %v2018 = vpop.f32.mrb[0].mxu0
        %v2019 = vadd.f32 0.0, %v2018
        %v2020 = vpop.f32.mrb[0].mxu0
        %2021 = vmatprep.mubr.bf16.mxu0 0
        %2022 = vmatmul.mubr.bf16.gmra.mrb[0].mxu0 %v1952
        %v2023 = vpop.f32.mrb[0].mxu0
        %v2024 = vadd.f32 0.0, %v2023
        %v2025 = vpop.f32.mrb[0].mxu0
        %v2026 = vpop.f32.mrb[0].mxu0
        %v2027 = vadd.f32 0.0, %v2026
        %v2028 = vpop.f32.mrb[0].mxu0
        %2029 = vmatprep.mubr.bf16.mxu0 0
        %2030 = vmatmul.mubr.bf16.gmra.mrb[0].mxu0 %v1953
        %v2031 = vpop.f32.mrb[0].mxu0
        %v2032 = vadd.f32 0.0, %v2031
        %v2033 = vpop.f32.mrb[0].mxu0
        %v2034 = vpop.f32.mrb[0].mxu0
        %v2035 = vadd.f32 0.0, %v2034
        %v2036 = vpop.f32.mrb[0].mxu0
        %2037 = vmatprep.mubr.bf16.mxu0 0
        %2038 = vmatmul.mubr.bf16.gmra.mrb[0].mxu0 %v1954
        %v2039 = vpop.f32.mrb[0].mxu0
        %v2040 = vadd.f32 0.0, %v2039
        %v2041 = vpop.f32.mrb[0].mxu0
        %v2042 = vpop.f32.mrb[0].mxu0
        %v2043 = vadd.f32 0.0, %v2042
        %v2044 = vpop.f32.mrb[0].mxu0
        %2045 = vmatprep.mubr.bf16.mxu0 0
        %2046 = vmatmul.mubr.bf16.gmra.mrb[0].mxu0 %v1955
        %v2047 = vpop.f32.mrb[0].mxu0
        %v2048 = vadd.f32 0.0, %v2047
        %v2049 = vpop.f32.mrb[0].mxu0
        %v2050 = vpop.f32.mrb[0].mxu0
        %v2051 = vadd.f32 0.0, %v2050
        %v2052 = vpop.f32.mrb[0].mxu0
        %2053 = vmatprep.mubr.bf16.mxu0 0
        %2054 = vmatmul.mubr.bf16.gmra.mrb[0].mxu0 %v1956
        %v2055 = vpop.f32.mrb[0].mxu0
        %v2056 = vadd.f32 0.0, %v2055
        %v2057 = vpop.f32.mrb[0].mxu0
        %v2058 = vpop.f32.mrb[0].mxu0
        %v2059 = vadd.f32 0.0, %v2058
        %v2060 = vpop.f32.mrb[0].mxu0
        %2061 = vdwg.mxu0
        %v2078 = vunpack.c.l.b16 %v1770
        %v2079 = vunpack.c.l.b16 %v1771
        %v2080 = vunpack.c.l.b16 %v1772
        %v2081 = vunpack.c.l.b16 %v1773
        %v2082 = vunpack.c.l.b16 %v1774
        %v2083 = vunpack.c.l.b16 %v1775
        %v2084 = vunpack.c.l.b16 %v1776
        %v2085 = vunpack.c.l.b16 %v1777
        %v2086 = vunpack.c.l.b16 %v1778
        %v2087 = vunpack.c.l.b16 %v1779
        %v2088 = vunpack.c.l.b16 %v1780
        %v2089 = vunpack.c.l.b16 %v1781
        %v2090 = vunpack.c.l.b16 %v1782
        %v2091 = vunpack.c.l.b16 %v1783
        %v2092 = vunpack.c.l.b16 %v1784
        %v2093 = vunpack.c.l.b16 %v1785
        %v2094 = vpack.c.b16 %v2079, %v2078
        %v2095 = vpack.c.b16 %v2081, %v2080
        %v2096 = vpack.c.b16 %v2083, %v2082
        %v2097 = vpack.c.b16 %v2085, %v2084
        %v2098 = vpack.c.b16 %v2087, %v2086
        %v2099 = vpack.c.b16 %v2089, %v2088
        %v2100 = vpack.c.b16 %v2091, %v2090
        %v2101 = vpack.c.b16 %v2093, %v2092
        %2110 = vmatprep.subr.bf16.mxu0 0
        %2111 = vmatpush1.bf16.msra.mxu0 %v1762
        %2112 = vmatprep.subr.bf16.mxu0 0
        %2113 = vmatpush1.bf16.msra.mxu0 %v1763
        %2114 = vmatprep.subr.bf16.mxu0 0
        %2115 = vmatpush1.bf16.msra.mxu0 %v1764
        %2116 = vmatprep.subr.bf16.mxu0 0
        %2117 = vmatpush1.bf16.msra.mxu0 %v1765
        %2118 = vmatprep.subr.bf16.mxu0 0
        %2119 = vmatpush1.bf16.msra.mxu0 %v1766
        %2120 = vmatprep.subr.bf16.mxu0 0
        %2121 = vmatpush1.bf16.msra.mxu0 %v1767
        %2122 = vmatprep.subr.bf16.mxu0 0
        %2123 = vmatpush1.bf16.msra.mxu0 %v1768
        %2124 = vmatprep.subr.bf16.mxu0 0
        %2125 = vmatpush1.bf16.msra.mxu0 %v1769
        %2126 = vmatprep.subr.bf16.mxu0 0
        %2127 = vmatpush1.bf16.msra.mxu0 0
        %2128 = vmatprep.subr.bf16.mxu0 0
        %2129 = vmatpush1.bf16.msra.mxu0 0
        %2130 = vmatprep.subr.bf16.mxu0 0
        %2131 = vmatpush1.bf16.msra.mxu0 0
        %2132 = vmatprep.subr.bf16.mxu0 0
        %2133 = vmatpush1.bf16.msra.mxu0 0
        %2134 = vmatprep.subr.bf16.mxu0 0
        %2135 = vmatpush1.bf16.msra.mxu0 0
        %2136 = vmatprep.subr.bf16.mxu0 0
        %2137 = vmatpush1.bf16.msra.mxu0 0
        %2138 = vmatprep.subr.bf16.mxu0 0
        %2139 = vmatpush1.bf16.msra.mxu0 0
        %2140 = vmatprep.subr.bf16.mxu0 0
        %2141 = vmatpush1.bf16.msra.mxu0 0
        %2142 = vmatprep.mubr.bf16.mxu0 0
        %2143 = vmatmul.mubr.bf16.gmra.mrb[0].mxu0 %v2094
        %v2144 = vpop.f32.mrb[0].mxu0
        %v2145 = vadd.f32 %v2000, %v2144
        %v2146 = vpop.f32.mrb[0].mxu0
        %v2147 = vpop.f32.mrb[0].mxu0
        %v2148 = vadd.f32 %v2003, %v2147
        %v2149 = vpop.f32.mrb[0].mxu0
        %2150 = vmatprep.mubr.bf16.mxu0 0
        %2151 = vmatmul.mubr.bf16.gmra.mrb[0].mxu0 %v2095
        %v2152 = vpop.f32.mrb[0].mxu0
        %v2153 = vadd.f32 %v2008, %v2152
        %v2154 = vpop.f32.mrb[0].mxu0
        %v2155 = vpop.f32.mrb[0].mxu0
        %v2156 = vadd.f32 %v2011, %v2155
        %v2157 = vpop.f32.mrb[0].mxu0
        %2158 = vmatprep.mubr.bf16.mxu0 0
        %2159 = vmatmul.mubr.bf16.gmra.mrb[0].mxu0 %v2096
        %v2160 = vpop.f32.mrb[0].mxu0
        %v2161 = vadd.f32 %v2016, %v2160
        %v2162 = vpop.f32.mrb[0].mxu0
        %v2163 = vpop.f32.mrb[0].mxu0
        %v2164 = vadd.f32 %v2019, %v2163
        %v2165 = vpop.f32.mrb[0].mxu0
        %2166 = vmatprep.mubr.bf16.mxu0 0
        %2167 = vmatmul.mubr.bf16.gmra.mrb[0].mxu0 %v2097
        %v2168 = vpop.f32.mrb[0].mxu0
        %v2169 = vadd.f32 %v2024, %v2168
        %v2170 = vpop.f32.mrb[0].mxu0
        %v2171 = vpop.f32.mrb[0].mxu0
        %v2172 = vadd.f32 %v2027, %v2171
        %v2173 = vpop.f32.mrb[0].mxu0
        %2174 = vmatprep.mubr.bf16.mxu0 0
        %2175 = vmatmul.mubr.bf16.gmra.mrb[0].mxu0 %v2098
        %v2176 = vpop.f32.mrb[0].mxu0
        %v2177 = vadd.f32 %v2032, %v2176
        %v2178 = vpop.f32.mrb[0].mxu0
        %v2179 = vpop.f32.mrb[0].mxu0
        %v2180 = vadd.f32 %v2035, %v2179
        %v2181 = vpop.f32.mrb[0].mxu0
        %2182 = vmatprep.mubr.bf16.mxu0 0
        %2183 = vmatmul.mubr.bf16.gmra.mrb[0].mxu0 %v2099
        %v2184 = vpop.f32.mrb[0].mxu0
        %v2185 = vadd.f32 %v2040, %v2184
        %v2186 = vpop.f32.mrb[0].mxu0
        %v2187 = vpop.f32.mrb[0].mxu0
        %v2188 = vadd.f32 %v2043, %v2187
        %v2189 = vpop.f32.mrb[0].mxu0
        %2190 = vmatprep.mubr.bf16.mxu0 0
        %2191 = vmatmul.mubr.bf16.gmra.mrb[0].mxu0 %v2100
        %v2192 = vpop.f32.mrb[0].mxu0
        %v2193 = vadd.f32 %v2048, %v2192
        %v2194 = vpop.f32.mrb[0].mxu0
        %v2195 = vpop.f32.mrb[0].mxu0
        %v2196 = vadd.f32 %v2051, %v2195
        %v2197 = vpop.f32.mrb[0].mxu0
        %2198 = vmatprep.mubr.bf16.mxu0 0
        %2199 = vmatmul.mubr.bf16.gmra.mrb[0].mxu0 %v2101
        %v2200 = vpop.f32.mrb[0].mxu0
        %v2201 = vadd.f32 %v2056, %v2200
        %v2202 = vpop.f32.mrb[0].mxu0
        %v2203 = vpop.f32.mrb[0].mxu0
        %v2204 = vadd.f32 %v2059, %v2203
        %v2205 = vpop.f32.mrb[0].mxu0
        %2206 = vdwg.mxu0
        %s2207 = scalar_lea.vmem %s4, 16
        %v2208 = vld [vmem:[%s2207] sm:$0xf]
        %v2209 = vld [vmem:[%s2207 + $0x4] sm:$0xf]
        %v2212 = vunpack.c.l.b16 %v2208
        %v2213 = vunpack.c.l.b16 %v2209
        %v2214 = vpack.c.b16 %v2213, %v2212
        %2216 = vmatprep.subr.bf16.mxu0 0
        %2217 = vmatpush1.bf16.msra.mxu0 %v2214
        %2218 = vmatprep.subr.bf16.mxu0 0
        %2219 = vmatpush1.bf16.msra.mxu0 0
        %2220 = vmatprep.subr.bf16.mxu0 0
        %2221 = vmatpush1.bf16.msra.mxu0 0
        %2222 = vmatprep.subr.bf16.mxu0 0
        %2223 = vmatpush1.bf16.msra.mxu0 0
        %2224 = vmatprep.subr.bf16.mxu0 0
        %2225 = vmatpush1.bf16.msra.mxu0 0
        %2226 = vmatprep.subr.bf16.mxu0 0
        %2227 = vmatpush1.bf16.msra.mxu0 0
        %2228 = vmatprep.subr.bf16.mxu0 0
        %2229 = vmatpush1.bf16.msra.mxu0 0
        %2230 = vmatprep.subr.bf16.mxu0 0
        %2231 = vmatpush1.bf16.msra.mxu0 0
        %2232 = vmatprep.subr.bf16.mxu0 0
        %2233 = vmatpush1.bf16.msra.mxu0 0
        %2234 = vmatprep.subr.bf16.mxu0 0
        %2235 = vmatpush1.bf16.msra.mxu0 0
        %2236 = vmatprep.subr.bf16.mxu0 0
        %2237 = vmatpush1.bf16.msra.mxu0 0
        %2238 = vmatprep.subr.bf16.mxu0 0
        %2239 = vmatpush1.bf16.msra.mxu0 0
        %2240 = vmatprep.subr.bf16.mxu0 0
        %2241 = vmatpush1.bf16.msra.mxu0 0
        %2242 = vmatprep.subr.bf16.mxu0 0
        %2243 = vmatpush1.bf16.msra.mxu0 0
        %2244 = vmatprep.subr.bf16.mxu0 0
        %2245 = vmatpush1.bf16.msra.mxu0 0
        %2246 = vmatprep.subr.bf16.mxu0 0
        %2247 = vmatpush1.bf16.msra.mxu0 0
        %2248 = vmatprep.mubr.bf16.mxu0 0
        %2249 = vmatmul.mubr.bf16.gmra.mrb[0].mxu0 %v1642
        %v2250 = vpop.f32.mrb[0].mxu0
        %v2251 = vadd.f32 0.0, %v2250
        %v2252 = vpop.f32.mrb[0].mxu0
        %v2253 = vpop.f32.mrb[0].mxu0
        %v2254 = vadd.f32 0.0, %v2253
        %v2255 = vpop.f32.mrb[0].mxu0
        %2256 = vmatprep.mubr.bf16.mxu0 0
        %2257 = vmatmul.mubr.bf16.gmra.mrb[0].mxu0 %v1645
        %v2258 = vpop.f32.mrb[0].mxu0
        %v2259 = vadd.f32 0.0, %v2258
        %v2260 = vpop.f32.mrb[0].mxu0
        %v2261 = vpop.f32.mrb[0].mxu0
        %v2262 = vadd.f32 0.0, %v2261
        %v2263 = vpop.f32.mrb[0].mxu0
        %2264 = vmatprep.mubr.bf16.mxu0 0
        %2265 = vmatmul.mubr.bf16.gmra.mrb[0].mxu0 %v1648
        %v2266 = vpop.f32.mrb[0].mxu0
        %v2267 = vadd.f32 0.0, %v2266
        %v2268 = vpop.f32.mrb[0].mxu0
        %v2269 = vpop.f32.mrb[0].mxu0
        %v2270 = vadd.f32 0.0, %v2269
        %v2271 = vpop.f32.mrb[0].mxu0
        %2272 = vmatprep.mubr.bf16.mxu0 0
        %2273 = vmatmul.mubr.bf16.gmra.mrb[0].mxu0 %v1651
        %v2274 = vpop.f32.mrb[0].mxu0
        %v2275 = vadd.f32 0.0, %v2274
        %v2276 = vpop.f32.mrb[0].mxu0
        %v2277 = vpop.f32.mrb[0].mxu0
        %v2278 = vadd.f32 0.0, %v2277
        %v2279 = vpop.f32.mrb[0].mxu0
        %2280 = vmatprep.mubr.bf16.mxu0 0
        %2281 = vmatmul.mubr.bf16.gmra.mrb[0].mxu0 %v1654
        %v2282 = vpop.f32.mrb[0].mxu0
        %v2283 = vadd.f32 0.0, %v2282
        %v2284 = vpop.f32.mrb[0].mxu0
        %v2285 = vpop.f32.mrb[0].mxu0
        %v2286 = vadd.f32 0.0, %v2285
        %v2287 = vpop.f32.mrb[0].mxu0
        %2288 = vmatprep.mubr.bf16.mxu0 0
        %2289 = vmatmul.mubr.bf16.gmra.mrb[0].mxu0 %v1657
        %v2290 = vpop.f32.mrb[0].mxu0
        %v2291 = vadd.f32 0.0, %v2290
        %v2292 = vpop.f32.mrb[0].mxu0
        %v2293 = vpop.f32.mrb[0].mxu0
        %v2294 = vadd.f32 0.0, %v2293
        %v2295 = vpop.f32.mrb[0].mxu0
        %2296 = vmatprep.mubr.bf16.mxu0 0
        %2297 = vmatmul.mubr.bf16.gmra.mrb[0].mxu0 %v1660
        %v2298 = vpop.f32.mrb[0].mxu0
        %v2299 = vadd.f32 0.0, %v2298
        %v2300 = vpop.f32.mrb[0].mxu0
        %v2301 = vpop.f32.mrb[0].mxu0
        %v2302 = vadd.f32 0.0, %v2301
        %v2303 = vpop.f32.mrb[0].mxu0
        %2304 = vmatprep.mubr.bf16.mxu0 0
        %2305 = vmatmul.mubr.bf16.gmra.mrb[0].mxu0 %v1663
        %v2306 = vpop.f32.mrb[0].mxu0
        %v2307 = vadd.f32 0.0, %v2306
        %v2308 = vpop.f32.mrb[0].mxu0
        %v2309 = vpop.f32.mrb[0].mxu0
        %v2310 = vadd.f32 0.0, %v2309
        %v2311 = vpop.f32.mrb[0].mxu0
        %2312 = vdwg.mxu0
        %v2313 = vpack.c.bf16 %v2254, %v2251
        %v2314 = vpack.c.bf16 %v2262, %v2259
        %v2315 = vpack.c.bf16 %v2270, %v2267
        %v2316 = vpack.c.bf16 %v2278, %v2275
        %v2317 = vpack.c.bf16 %v2286, %v2283
        %v2318 = vpack.c.bf16 %v2294, %v2291
        %v2319 = vpack.c.bf16 %v2302, %v2299
        %v2320 = vpack.c.bf16 %v2310, %v2307
        %s2321 = scalar_lea.vmem %s5, 128
        %v2322 = vld [vmem:[%s2321] sm:$0xf]
        %v2323 = vld [vmem:[%s2321 + $0x4] sm:$0xf]
        %v2324 = vld [vmem:[%s2321 + $0x8] sm:$0xf]
        %v2325 = vld [vmem:[%s2321 + $0xc] sm:$0xf]
        %v2326 = vld [vmem:[%s2321 + $0x10] sm:$0xf]
        %v2327 = vld [vmem:[%s2321 + $0x14] sm:$0xf]
        %v2328 = vld [vmem:[%s2321 + $0x18] sm:$0xf]
        %v2329 = vld [vmem:[%s2321 + $0x1c] sm:$0xf]
        %v2330 = vld [vmem:[%s2321 + $0x20] sm:$0xf]
        %v2331 = vld [vmem:[%s2321 + $0x24] sm:$0xf]
        %v2332 = vld [vmem:[%s2321 + $0x28] sm:$0xf]
        %v2333 = vld [vmem:[%s2321 + $0x2c] sm:$0xf]
        %v2334 = vld [vmem:[%s2321 + $0x30] sm:$0xf]
        %v2335 = vld [vmem:[%s2321 + $0x34] sm:$0xf]
        %v2336 = vld [vmem:[%s2321 + $0x38] sm:$0xf]
        %v2337 = vld [vmem:[%s2321 + $0x3c] sm:$0xf]
        %v2354 = vunpack.c.l.b16 %v2322
        %v2355 = vunpack.c.l.b16 %v2323
        %v2356 = vunpack.c.l.b16 %v2324
        %v2357 = vunpack.c.l.b16 %v2325
        %v2358 = vunpack.c.l.b16 %v2326
        %v2359 = vunpack.c.l.b16 %v2327
        %v2360 = vunpack.c.l.b16 %v2328
        %v2361 = vunpack.c.l.b16 %v2329
        %v2362 = vunpack.c.l.b16 %v2330
        %v2363 = vunpack.c.l.b16 %v2331
        %v2364 = vunpack.c.l.b16 %v2332
        %v2365 = vunpack.c.l.b16 %v2333
        %v2366 = vunpack.c.l.b16 %v2334
        %v2367 = vunpack.c.l.b16 %v2335
        %v2368 = vunpack.c.l.b16 %v2336
        %v2369 = vunpack.c.l.b16 %v2337
        %v2370 = vpack.c.b16 %v2355, %v2354
        %v2371 = vpack.c.b16 %v2357, %v2356
        %v2372 = vpack.c.b16 %v2359, %v2358
        %v2373 = vpack.c.b16 %v2361, %v2360
        %v2374 = vpack.c.b16 %v2363, %v2362
        %v2375 = vpack.c.b16 %v2365, %v2364
        %v2376 = vpack.c.b16 %v2367, %v2366
        %v2377 = vpack.c.b16 %v2369, %v2368
        %2386 = vmatprep.subr.bf16.mxu0 0
        %2387 = vmatpush1.bf16.msra.mxu0 %v2313
        %2388 = vmatprep.subr.bf16.mxu0 0
        %2389 = vmatpush1.bf16.msra.mxu0 %v2314
        %2390 = vmatprep.subr.bf16.mxu0 0
        %2391 = vmatpush1.bf16.msra.mxu0 %v2315
        %2392 = vmatprep.subr.bf16.mxu0 0
        %2393 = vmatpush1.bf16.msra.mxu0 %v2316
        %2394 = vmatprep.subr.bf16.mxu0 0
        %2395 = vmatpush1.bf16.msra.mxu0 %v2317
        %2396 = vmatprep.subr.bf16.mxu0 0
        %2397 = vmatpush1.bf16.msra.mxu0 %v2318
        %2398 = vmatprep.subr.bf16.mxu0 0
        %2399 = vmatpush1.bf16.msra.mxu0 %v2319
        %2400 = vmatprep.subr.bf16.mxu0 0
        %2401 = vmatpush1.bf16.msra.mxu0 %v2320
        %2402 = vmatprep.subr.bf16.mxu0 0
        %2403 = vmatpush1.bf16.msra.mxu0 0
        %2404 = vmatprep.subr.bf16.mxu0 0
        %2405 = vmatpush1.bf16.msra.mxu0 0
        %2406 = vmatprep.subr.bf16.mxu0 0
        %2407 = vmatpush1.bf16.msra.mxu0 0
        %2408 = vmatprep.subr.bf16.mxu0 0
        %2409 = vmatpush1.bf16.msra.mxu0 0
        %2410 = vmatprep.subr.bf16.mxu0 0
        %2411 = vmatpush1.bf16.msra.mxu0 0
        %2412 = vmatprep.subr.bf16.mxu0 0
        %2413 = vmatpush1.bf16.msra.mxu0 0
        %2414 = vmatprep.subr.bf16.mxu0 0
        %2415 = vmatpush1.bf16.msra.mxu0 0
        %2416 = vmatprep.subr.bf16.mxu0 0
        %2417 = vmatpush1.bf16.msra.mxu0 0
        %2418 = vmatprep.mubr.bf16.mxu0 0
        %2419 = vmatmul.mubr.bf16.gmra.mrb[0].mxu0 %v2370
        %v2420 = vpop.f32.mrb[0].mxu0
        %v2421 = vadd.f32 0.0, %v2420
        %v2422 = vpop.f32.mrb[0].mxu0
        %v2423 = vpop.f32.mrb[0].mxu0
        %v2424 = vadd.f32 0.0, %v2423
        %v2425 = vpop.f32.mrb[0].mxu0
        %2426 = vmatprep.mubr.bf16.mxu0 0
        %2427 = vmatmul.mubr.bf16.gmra.mrb[0].mxu0 %v2371
        %v2428 = vpop.f32.mrb[0].mxu0
        %v2429 = vadd.f32 0.0, %v2428
        %v2430 = vpop.f32.mrb[0].mxu0
        %v2431 = vpop.f32.mrb[0].mxu0
        %v2432 = vadd.f32 0.0, %v2431
        %v2433 = vpop.f32.mrb[0].mxu0
        %2434 = vmatprep.mubr.bf16.mxu0 0
        %2435 = vmatmul.mubr.bf16.gmra.mrb[0].mxu0 %v2372
        %v2436 = vpop.f32.mrb[0].mxu0
        %v2437 = vadd.f32 0.0, %v2436
        %v2438 = vpop.f32.mrb[0].mxu0
        %v2439 = vpop.f32.mrb[0].mxu0
        %v2440 = vadd.f32 0.0, %v2439
        %v2441 = vpop.f32.mrb[0].mxu0
        %2442 = vmatprep.mubr.bf16.mxu0 0
        %2443 = vmatmul.mubr.bf16.gmra.mrb[0].mxu0 %v2373
        %v2444 = vpop.f32.mrb[0].mxu0
        %v2445 = vadd.f32 0.0, %v2444
        %v2446 = vpop.f32.mrb[0].mxu0
        %v2447 = vpop.f32.mrb[0].mxu0
        %v2448 = vadd.f32 0.0, %v2447
        %v2449 = vpop.f32.mrb[0].mxu0
        %2450 = vmatprep.mubr.bf16.mxu0 0
        %2451 = vmatmul.mubr.bf16.gmra.mrb[0].mxu0 %v2374
        %v2452 = vpop.f32.mrb[0].mxu0
        %v2453 = vadd.f32 0.0, %v2452
        %v2454 = vpop.f32.mrb[0].mxu0
        %v2455 = vpop.f32.mrb[0].mxu0
        %v2456 = vadd.f32 0.0, %v2455
        %v2457 = vpop.f32.mrb[0].mxu0
        %2458 = vmatprep.mubr.bf16.mxu0 0
        %2459 = vmatmul.mubr.bf16.gmra.mrb[0].mxu0 %v2375
        %v2460 = vpop.f32.mrb[0].mxu0
        %v2461 = vadd.f32 0.0, %v2460
        %v2462 = vpop.f32.mrb[0].mxu0
        %v2463 = vpop.f32.mrb[0].mxu0
        %v2464 = vadd.f32 0.0, %v2463
        %v2465 = vpop.f32.mrb[0].mxu0
        %2466 = vmatprep.mubr.bf16.mxu0 0
        %2467 = vmatmul.mubr.bf16.gmra.mrb[0].mxu0 %v2376
        %v2468 = vpop.f32.mrb[0].mxu0
        %v2469 = vadd.f32 0.0, %v2468
        %v2470 = vpop.f32.mrb[0].mxu0
        %v2471 = vpop.f32.mrb[0].mxu0
        %v2472 = vadd.f32 0.0, %v2471
        %v2473 = vpop.f32.mrb[0].mxu0
        %2474 = vmatprep.mubr.bf16.mxu0 0
        %2475 = vmatmul.mubr.bf16.gmra.mrb[0].mxu0 %v2377
        %v2476 = vpop.f32.mrb[0].mxu0
        %v2477 = vadd.f32 0.0, %v2476
        %v2478 = vpop.f32.mrb[0].mxu0
        %v2479 = vpop.f32.mrb[0].mxu0
        %v2480 = vadd.f32 0.0, %v2479
        %v2481 = vpop.f32.mrb[0].mxu0
        %2482 = vdwg.mxu0
        %v2483 = vadd.f32 %v2145, %v2421
        %v2484 = vadd.f32 %v2148, %v2424
        %v2485 = vadd.f32 %v2153, %v2429
        %v2486 = vadd.f32 %v2156, %v2432
        %v2487 = vadd.f32 %v2161, %v2437
        %v2488 = vadd.f32 %v2164, %v2440
        %v2489 = vadd.f32 %v2169, %v2445
        %v2490 = vadd.f32 %v2172, %v2448
        %v2491 = vadd.f32 %v2177, %v2453
        %v2492 = vadd.f32 %v2180, %v2456
        %v2493 = vadd.f32 %v2185, %v2461
        %v2494 = vadd.f32 %v2188, %v2464
        %v2495 = vadd.f32 %v2193, %v2469
        %v2496 = vadd.f32 %v2196, %v2472
        %v2497 = vadd.f32 %v2201, %v2477
        %v2498 = vadd.f32 %v2204, %v2480
        %v2499 = vld [vmem:[%s6] sm:$0xff]
        %v2500 = vld [vmem:[%s6 + $0x8] sm:$0xff]
        %v2501 = vld [vmem:[%s6 + $0x10] sm:$0xff]
        %v2502 = vld [vmem:[%s6 + $0x18] sm:$0xff]
        %v2503 = vld [vmem:[%s6 + $0x20] sm:$0xff]
        %v2504 = vld [vmem:[%s6 + $0x28] sm:$0xff]
        %v2505 = vld [vmem:[%s6 + $0x30] sm:$0xff]
        %v2506 = vld [vmem:[%s6 + $0x38] sm:$0xff]
        %v2507 = vld [vmem:[%s6 + $0x40] sm:$0xff]
        %v2508 = vld [vmem:[%s6 + $0x48] sm:$0xff]
        %v2509 = vld [vmem:[%s6 + $0x50] sm:$0xff]
        %v2510 = vld [vmem:[%s6 + $0x58] sm:$0xff]
        %v2511 = vld [vmem:[%s6 + $0x60] sm:$0xff]
        %v2512 = vld [vmem:[%s6 + $0x68] sm:$0xff]
        %v2513 = vld [vmem:[%s6 + $0x70] sm:$0xff]
        %v2514 = vld [vmem:[%s6 + $0x78] sm:$0xff]
        %2516 = vset.pattern.permute.xlu0 0
        %2517 = vperm.xlu0 %2516, %v2499
        %v2518 = vpop.permute.xlu0 %2517
        %2521 = vset.pattern.permute.xlu0 0
        %2522 = vperm.xlu0 %2521, %v2500
        %v2523 = vpop.permute.xlu0 %2522
        %2526 = vset.pattern.permute.xlu0 0
        %2527 = vperm.xlu0 %2526, %v2501
        %v2528 = vpop.permute.xlu0 %2527
        %2531 = vset.pattern.permute.xlu0 0
        %2532 = vperm.xlu0 %2531, %v2502
        %v2533 = vpop.permute.xlu0 %2532
        %2536 = vset.pattern.permute.xlu0 0
        %2537 = vperm.xlu0 %2536, %v2503
        %v2538 = vpop.permute.xlu0 %2537
        %2541 = vset.pattern.permute.xlu0 0
        %2542 = vperm.xlu0 %2541, %v2504
        %v2543 = vpop.permute.xlu0 %2542
        %2546 = vset.pattern.permute.xlu0 0
        %2547 = vperm.xlu0 %2546, %v2505
        %v2548 = vpop.permute.xlu0 %2547
        %2551 = vset.pattern.permute.xlu0 0
        %2552 = vperm.xlu0 %2551, %v2506
        %v2553 = vpop.permute.xlu0 %2552
        %2556 = vset.pattern.permute.xlu0 0
        %2557 = vperm.xlu0 %2556, %v2507
        %v2558 = vpop.permute.xlu0 %2557
        %2561 = vset.pattern.permute.xlu0 0
        %2562 = vperm.xlu0 %2561, %v2508
        %v2563 = vpop.permute.xlu0 %2562
        %2566 = vset.pattern.permute.xlu0 0
        %2567 = vperm.xlu0 %2566, %v2509
        %v2568 = vpop.permute.xlu0 %2567
        %2571 = vset.pattern.permute.xlu0 0
        %2572 = vperm.xlu0 %2571, %v2510
        %v2573 = vpop.permute.xlu0 %2572
        %2576 = vset.pattern.permute.xlu0 0
        %2577 = vperm.xlu0 %2576, %v2511
        %v2578 = vpop.permute.xlu0 %2577
        %2581 = vset.pattern.permute.xlu0 0
        %2582 = vperm.xlu0 %2581, %v2512
        %v2583 = vpop.permute.xlu0 %2582
        %2586 = vset.pattern.permute.xlu0 0
        %2587 = vperm.xlu0 %2586, %v2513
        %v2588 = vpop.permute.xlu0 %2587
        %2591 = vset.pattern.permute.xlu0 0
        %2592 = vperm.xlu0 %2591, %v2514
        %v2593 = vpop.permute.xlu0 %2592
        %v2595 = vadd.f32 %v2483, %v2518
        %v2596 = vadd.f32 %v2484, %v2523
        %v2597 = vadd.f32 %v2485, %v2528
        %v2598 = vadd.f32 %v2486, %v2533
        %v2599 = vadd.f32 %v2487, %v2538
        %v2600 = vadd.f32 %v2488, %v2543
        %v2601 = vadd.f32 %v2489, %v2548
        %v2602 = vadd.f32 %v2490, %v2553
        %v2603 = vadd.f32 %v2491, %v2558
        %v2604 = vadd.f32 %v2492, %v2563
        %v2605 = vadd.f32 %v2493, %v2568
        %v2606 = vadd.f32 %v2494, %v2573
        %v2607 = vadd.f32 %v2495, %v2578
        %v2608 = vadd.f32 %v2496, %v2583
        %v2609 = vadd.f32 %v2497, %v2588
        %v2610 = vadd.f32 %v2498, %v2593
        %v2611 = vmax.f32 %v2595, 0.0
        %v2612 = vmax.f32 %v2596, 0.0
        %v2613 = vmax.f32 %v2597, 0.0
        %v2614 = vmax.f32 %v2598, 0.0
        %v2615 = vmax.f32 %v2599, 0.0
        %v2616 = vmax.f32 %v2600, 0.0
        %v2617 = vmax.f32 %v2601, 0.0
        %v2618 = vmax.f32 %v2602, 0.0
        %v2619 = vmax.f32 %v2603, 0.0
        %v2620 = vmax.f32 %v2604, 0.0
        %v2621 = vmax.f32 %v2605, 0.0
        %v2622 = vmax.f32 %v2606, 0.0
        %v2623 = vmax.f32 %v2607, 0.0
        %v2624 = vmax.f32 %v2608, 0.0
        %v2625 = vmax.f32 %v2609, 0.0
        %v2626 = vmax.f32 %v2610, 0.0
        %vm2627 = vcmask 64512
        %2628 = vst.msk [vmem:[%s546] sm:$0xff] %vm2627, %v2611
        %2629 = vst.msk [vmem:[%s546 + $0x8] sm:$0xff] %vm2627, %v2612
        %2630 = vst.msk [vmem:[%s546 + $0x10] sm:$0xff] %vm2627, %v2613
        %2631 = vst.msk [vmem:[%s546 + $0x18] sm:$0xff] %vm2627, %v2614
        %2632 = vst.msk [vmem:[%s546 + $0x20] sm:$0xff] %vm2627, %v2615
        %2633 = vst.msk [vmem:[%s546 + $0x28] sm:$0xff] %vm2627, %v2616
        %2634 = vst.msk [vmem:[%s546 + $0x30] sm:$0xff] %vm2627, %v2617
        %2635 = vst.msk [vmem:[%s546 + $0x38] sm:$0xff] %vm2627, %v2618
        %2636 = vst.msk [vmem:[%s546 + $0x40] sm:$0xff] %vm2627, %v2619
        %2637 = vst.msk [vmem:[%s546 + $0x48] sm:$0xff] %vm2627, %v2620
        %2638 = vst.msk [vmem:[%s546 + $0x50] sm:$0xff] %vm2627, %v2621
        %2639 = vst.msk [vmem:[%s546 + $0x58] sm:$0xff] %vm2627, %v2622
        %2640 = vst.msk [vmem:[%s546 + $0x60] sm:$0xff] %vm2627, %v2623
        %2641 = vst.msk [vmem:[%s546 + $0x68] sm:$0xff] %vm2627, %v2624
        %2642 = vst.msk [vmem:[%s546 + $0x70] sm:$0xff] %vm2627, %v2625
        %2643 = vst.msk [vmem:[%s546 + $0x78] sm:$0xff] %vm2627, %v2626
        %v2644 = vpack.c.bf16 %v2612, %v2611
        %v2645 = vpack.c.bf16 %v2614, %v2613
        %v2646 = vpack.c.bf16 %v2616, %v2615
        %v2647 = vpack.c.bf16 %v2618, %v2617
        %v2648 = vpack.c.bf16 %v2620, %v2619
        %v2649 = vpack.c.bf16 %v2622, %v2621
        %v2650 = vpack.c.bf16 %v2624, %v2623
        %v2651 = vpack.c.bf16 %v2626, %v2625
        %v2652 = vld [vmem:[%s7] sm:$0xf]
        %v2654 = vsel %vm2627, %v2644, 0
        %v2657 = vsel %vm2627, %v2645, 0
        %v2660 = vsel %vm2627, %v2646, 0
        %v2663 = vsel %vm2627, %v2647, 0
        %v2666 = vsel %vm2627, %v2648, 0
        %v2669 = vsel %vm2627, %v2649, 0
        %v2672 = vsel %vm2627, %v2650, 0
        %v2675 = vsel %vm2627, %v2651, 0
        %vm2677 = vcmask 1043456
        %v2679 = vsel %vm2677, %v2652, 0
        %2681 = vmatprep.subr.bf16.mxu0 0
        %2682 = vmatpush1.bf16.msra.mxu0 %v2679
        %2683 = vmatprep.subr.bf16.mxu0 0
        %2684 = vmatpush1.bf16.msra.mxu0 0
        %2685 = vmatprep.subr.bf16.mxu0 0
        %2686 = vmatpush1.bf16.msra.mxu0 0
        %2687 = vmatprep.subr.bf16.mxu0 0
        %2688 = vmatpush1.bf16.msra.mxu0 0
        %2689 = vmatprep.subr.bf16.mxu0 0
        %2690 = vmatpush1.bf16.msra.mxu0 0
        %2691 = vmatprep.subr.bf16.mxu0 0
        %2692 = vmatpush1.bf16.msra.mxu0 0
        %2693 = vmatprep.subr.bf16.mxu0 0
        %2694 = vmatpush1.bf16.msra.mxu0 0
        %2695 = vmatprep.subr.bf16.mxu0 0
        %2696 = vmatpush1.bf16.msra.mxu0 0
        %2697 = vmatprep.subr.bf16.mxu0 0
        %2698 = vmatpush1.bf16.msra.mxu0 0
        %2699 = vmatprep.subr.bf16.mxu0 0
        %2700 = vmatpush1.bf16.msra.mxu0 0
        %2701 = vmatprep.subr.bf16.mxu0 0
        %2702 = vmatpush1.bf16.msra.mxu0 0
        %2703 = vmatprep.subr.bf16.mxu0 0
        %2704 = vmatpush1.bf16.msra.mxu0 0
        %2705 = vmatprep.subr.bf16.mxu0 0
        %2706 = vmatpush1.bf16.msra.mxu0 0
        %2707 = vmatprep.subr.bf16.mxu0 0
        %2708 = vmatpush1.bf16.msra.mxu0 0
        %2709 = vmatprep.subr.bf16.mxu0 0
        %2710 = vmatpush1.bf16.msra.mxu0 0
        %2711 = vmatprep.subr.bf16.mxu0 0
        %2712 = vmatpush1.bf16.msra.mxu0 0
        %2713 = vmatprep.mubr.bf16.mxu0 0
        %2714 = vmatmul.mubr.bf16.gmra.mrb[0].mxu0 %v2654
        %v2715 = vpop.f32.mrb[0].mxu0
        %v2716 = vadd.f32 0.0, %v2715
        %v2717 = vpop.f32.mrb[0].mxu0
        %v2718 = vpop.f32.mrb[0].mxu0
        %v2719 = vadd.f32 0.0, %v2718
        %v2720 = vpop.f32.mrb[0].mxu0
        %2721 = vmatprep.mubr.bf16.mxu0 0
        %2722 = vmatmul.mubr.bf16.gmra.mrb[0].mxu0 %v2657
        %v2723 = vpop.f32.mrb[0].mxu0
        %v2724 = vadd.f32 0.0, %v2723
        %v2725 = vpop.f32.mrb[0].mxu0
        %v2726 = vpop.f32.mrb[0].mxu0
        %v2727 = vadd.f32 0.0, %v2726
        %v2728 = vpop.f32.mrb[0].mxu0
        %2729 = vmatprep.mubr.bf16.mxu0 0
        %2730 = vmatmul.mubr.bf16.gmra.mrb[0].mxu0 %v2660
        %v2731 = vpop.f32.mrb[0].mxu0
        %v2732 = vadd.f32 0.0, %v2731
        %v2733 = vpop.f32.mrb[0].mxu0
        %v2734 = vpop.f32.mrb[0].mxu0
        %v2735 = vadd.f32 0.0, %v2734
        %v2736 = vpop.f32.mrb[0].mxu0
        %2737 = vmatprep.mubr.bf16.mxu0 0
        %2738 = vmatmul.mubr.bf16.gmra.mrb[0].mxu0 %v2663
        %v2739 = vpop.f32.mrb[0].mxu0
        %v2740 = vadd.f32 0.0, %v2739
        %v2741 = vpop.f32.mrb[0].mxu0
        %v2742 = vpop.f32.mrb[0].mxu0
        %v2743 = vadd.f32 0.0, %v2742
        %v2744 = vpop.f32.mrb[0].mxu0
        %2745 = vmatprep.mubr.bf16.mxu0 0
        %2746 = vmatmul.mubr.bf16.gmra.mrb[0].mxu0 %v2666
        %v2747 = vpop.f32.mrb[0].mxu0
        %v2748 = vadd.f32 0.0, %v2747
        %v2749 = vpop.f32.mrb[0].mxu0
        %v2750 = vpop.f32.mrb[0].mxu0
        %v2751 = vadd.f32 0.0, %v2750
        %v2752 = vpop.f32.mrb[0].mxu0
        %2753 = vmatprep.mubr.bf16.mxu0 0
        %2754 = vmatmul.mubr.bf16.gmra.mrb[0].mxu0 %v2669
        %v2755 = vpop.f32.mrb[0].mxu0
        %v2756 = vadd.f32 0.0, %v2755
        %v2757 = vpop.f32.mrb[0].mxu0
        %v2758 = vpop.f32.mrb[0].mxu0
        %v2759 = vadd.f32 0.0, %v2758
        %v2760 = vpop.f32.mrb[0].mxu0
        %2761 = vmatprep.mubr.bf16.mxu0 0
        %2762 = vmatmul.mubr.bf16.gmra.mrb[0].mxu0 %v2672
        %v2763 = vpop.f32.mrb[0].mxu0
        %v2764 = vadd.f32 0.0, %v2763
        %v2765 = vpop.f32.mrb[0].mxu0
        %v2766 = vpop.f32.mrb[0].mxu0
        %v2767 = vadd.f32 0.0, %v2766
        %v2768 = vpop.f32.mrb[0].mxu0
        %2769 = vmatprep.mubr.bf16.mxu0 0
        %2770 = vmatmul.mubr.bf16.gmra.mrb[0].mxu0 %v2675
        %v2771 = vpop.f32.mrb[0].mxu0
        %v2772 = vadd.f32 0.0, %v2771
        %v2773 = vpop.f32.mrb[0].mxu0
        %v2774 = vpop.f32.mrb[0].mxu0
        %v2775 = vadd.f32 0.0, %v2774
        %v2776 = vpop.f32.mrb[0].mxu0
        %2777 = vdwg.mxu0
        %v2778 = vpack.c.bf16 %v2719, %v2716
        %v2779 = vpack.c.bf16 %v2727, %v2724
        %v2780 = vpack.c.bf16 %v2735, %v2732
        %v2781 = vpack.c.bf16 %v2743, %v2740
        %v2782 = vpack.c.bf16 %v2751, %v2748
        %v2783 = vpack.c.bf16 %v2759, %v2756
        %v2784 = vpack.c.bf16 %v2767, %v2764
        %v2785 = vpack.c.bf16 %v2775, %v2772
        %v2786 = vld [vmem:[%s8] sm:$0xf]
        %v2787 = vld [vmem:[%s8 + $0x4] sm:$0xf]
        %v2788 = vld [vmem:[%s8 + $0x8] sm:$0xf]
        %v2789 = vld [vmem:[%s8 + $0xc] sm:$0xf]
        %v2790 = vld [vmem:[%s8 + $0x10] sm:$0xf]
        %v2791 = vld [vmem:[%s8 + $0x14] sm:$0xf]
        %v2792 = vld [vmem:[%s8 + $0x18] sm:$0xf]
        %v2793 = vld [vmem:[%s8 + $0x1c] sm:$0xf]
        %v2794 = vld [vmem:[%s8 + $0x20] sm:$0xf]
        %v2795 = vld [vmem:[%s8 + $0x24] sm:$0xf]
        %v2796 = vld [vmem:[%s8 + $0x28] sm:$0xf]
        %v2797 = vld [vmem:[%s8 + $0x2c] sm:$0xf]
        %v2798 = vld [vmem:[%s8 + $0x30] sm:$0xf]
        %v2799 = vld [vmem:[%s8 + $0x34] sm:$0xf]
        %v2800 = vld [vmem:[%s8 + $0x38] sm:$0xf]
        %v2801 = vld [vmem:[%s8 + $0x3c] sm:$0xf]
        %s2802 = scalar_lea.vmem %s7, 4
        %v2803 = vld [vmem:[%s2802] sm:$0xf]
        %v2805 = vsel %vm2677, %v2803, 0
        %2807 = vmatprep.subr.bf16.mxu0 0
        %2808 = vmatpush1.bf16.msra.mxu0 %v2805
        %2809 = vmatprep.subr.bf16.mxu0 0
        %2810 = vmatpush1.bf16.msra.mxu0 0
        %2811 = vmatprep.subr.bf16.mxu0 0
        %2812 = vmatpush1.bf16.msra.mxu0 0
        %2813 = vmatprep.subr.bf16.mxu0 0
        %2814 = vmatpush1.bf16.msra.mxu0 0
        %2815 = vmatprep.subr.bf16.mxu0 0
        %2816 = vmatpush1.bf16.msra.mxu0 0
        %2817 = vmatprep.subr.bf16.mxu0 0
        %2818 = vmatpush1.bf16.msra.mxu0 0
        %2819 = vmatprep.subr.bf16.mxu0 0
        %2820 = vmatpush1.bf16.msra.mxu0 0
        %2821 = vmatprep.subr.bf16.mxu0 0
        %2822 = vmatpush1.bf16.msra.mxu0 0
        %2823 = vmatprep.subr.bf16.mxu0 0
        %2824 = vmatpush1.bf16.msra.mxu0 0
        %2825 = vmatprep.subr.bf16.mxu0 0
        %2826 = vmatpush1.bf16.msra.mxu0 0
        %2827 = vmatprep.subr.bf16.mxu0 0
        %2828 = vmatpush1.bf16.msra.mxu0 0
        %2829 = vmatprep.subr.bf16.mxu0 0
        %2830 = vmatpush1.bf16.msra.mxu0 0
        %2831 = vmatprep.subr.bf16.mxu0 0
        %2832 = vmatpush1.bf16.msra.mxu0 0
        %2833 = vmatprep.subr.bf16.mxu0 0
        %2834 = vmatpush1.bf16.msra.mxu0 0
        %2835 = vmatprep.subr.bf16.mxu0 0
        %2836 = vmatpush1.bf16.msra.mxu0 0
        %2837 = vmatprep.subr.bf16.mxu0 0
        %2838 = vmatpush1.bf16.msra.mxu0 0
        %2839 = vmatprep.mubr.bf16.mxu0 0
        %2840 = vmatmul.mubr.bf16.gmra.mrb[0].mxu0 %v2654
        %v2841 = vpop.f32.mrb[0].mxu0
        %v2842 = vadd.f32 0.0, %v2841
        %v2843 = vpop.f32.mrb[0].mxu0
        %v2844 = vpop.f32.mrb[0].mxu0
        %v2845 = vadd.f32 0.0, %v2844
        %v2846 = vpop.f32.mrb[0].mxu0
        %2847 = vmatprep.mubr.bf16.mxu0 0
        %2848 = vmatmul.mubr.bf16.gmra.mrb[0].mxu0 %v2657
        %v2849 = vpop.f32.mrb[0].mxu0
        %v2850 = vadd.f32 0.0, %v2849
        %v2851 = vpop.f32.mrb[0].mxu0
        %v2852 = vpop.f32.mrb[0].mxu0
        %v2853 = vadd.f32 0.0, %v2852
        %v2854 = vpop.f32.mrb[0].mxu0
        %2855 = vmatprep.mubr.bf16.mxu0 0
        %2856 = vmatmul.mubr.bf16.gmra.mrb[0].mxu0 %v2660
        %v2857 = vpop.f32.mrb[0].mxu0
        %v2858 = vadd.f32 0.0, %v2857
        %v2859 = vpop.f32.mrb[0].mxu0
        %v2860 = vpop.f32.mrb[0].mxu0
        %v2861 = vadd.f32 0.0, %v2860
        %v2862 = vpop.f32.mrb[0].mxu0
        %2863 = vmatprep.mubr.bf16.mxu0 0
        %2864 = vmatmul.mubr.bf16.gmra.mrb[0].mxu0 %v2663
        %v2865 = vpop.f32.mrb[0].mxu0
        %v2866 = vadd.f32 0.0, %v2865
        %v2867 = vpop.f32.mrb[0].mxu0
        %v2868 = vpop.f32.mrb[0].mxu0
        %v2869 = vadd.f32 0.0, %v2868
        %v2870 = vpop.f32.mrb[0].mxu0
        %2871 = vmatprep.mubr.bf16.mxu0 0
        %2872 = vmatmul.mubr.bf16.gmra.mrb[0].mxu0 %v2666
        %v2873 = vpop.f32.mrb[0].mxu0
        %v2874 = vadd.f32 0.0, %v2873
        %v2875 = vpop.f32.mrb[0].mxu0
        %v2876 = vpop.f32.mrb[0].mxu0
        %v2877 = vadd.f32 0.0, %v2876
        %v2878 = vpop.f32.mrb[0].mxu0
        %2879 = vmatprep.mubr.bf16.mxu0 0
        %2880 = vmatmul.mubr.bf16.gmra.mrb[0].mxu0 %v2669
        %v2881 = vpop.f32.mrb[0].mxu0
        %v2882 = vadd.f32 0.0, %v2881
        %v2883 = vpop.f32.mrb[0].mxu0
        %v2884 = vpop.f32.mrb[0].mxu0
        %v2885 = vadd.f32 0.0, %v2884
        %v2886 = vpop.f32.mrb[0].mxu0
        %2887 = vmatprep.mubr.bf16.mxu0 0
        %2888 = vmatmul.mubr.bf16.gmra.mrb[0].mxu0 %v2672
        %v2889 = vpop.f32.mrb[0].mxu0
        %v2890 = vadd.f32 0.0, %v2889
        %v2891 = vpop.f32.mrb[0].mxu0
        %v2892 = vpop.f32.mrb[0].mxu0
        %v2893 = vadd.f32 0.0, %v2892
        %v2894 = vpop.f32.mrb[0].mxu0
        %2895 = vmatprep.mubr.bf16.mxu0 0
        %2896 = vmatmul.mubr.bf16.gmra.mrb[0].mxu0 %v2675
        %v2897 = vpop.f32.mrb[0].mxu0
        %v2898 = vadd.f32 0.0, %v2897
        %v2899 = vpop.f32.mrb[0].mxu0
        %v2900 = vpop.f32.mrb[0].mxu0
        %v2901 = vadd.f32 0.0, %v2900
        %v2902 = vpop.f32.mrb[0].mxu0
        %2903 = vdwg.mxu0
        %v2904 = vpack.c.bf16 %v2845, %v2842
        %v2905 = vpack.c.bf16 %v2853, %v2850
        %v2906 = vpack.c.bf16 %v2861, %v2858
        %v2907 = vpack.c.bf16 %v2869, %v2866
        %v2908 = vpack.c.bf16 %v2877, %v2874
        %v2909 = vpack.c.bf16 %v2885, %v2882
        %v2910 = vpack.c.bf16 %v2893, %v2890
        %v2911 = vpack.c.bf16 %v2901, %v2898
        %s2912 = scalar_lea.vmem %s8, 64
        %v2913 = vld [vmem:[%s2912] sm:$0xf]
        %v2914 = vld [vmem:[%s2912 + $0x4] sm:$0xf]
        %v2915 = vld [vmem:[%s2912 + $0x8] sm:$0xf]
        %v2916 = vld [vmem:[%s2912 + $0xc] sm:$0xf]
        %v2917 = vld [vmem:[%s2912 + $0x10] sm:$0xf]
        %v2918 = vld [vmem:[%s2912 + $0x14] sm:$0xf]
        %v2919 = vld [vmem:[%s2912 + $0x18] sm:$0xf]
        %v2920 = vld [vmem:[%s2912 + $0x1c] sm:$0xf]
        %v2921 = vld [vmem:[%s2912 + $0x20] sm:$0xf]
        %v2922 = vld [vmem:[%s2912 + $0x24] sm:$0xf]
        %v2923 = vld [vmem:[%s2912 + $0x28] sm:$0xf]
        %v2924 = vld [vmem:[%s2912 + $0x2c] sm:$0xf]
        %v2925 = vld [vmem:[%s2912 + $0x30] sm:$0xf]
        %v2926 = vld [vmem:[%s2912 + $0x34] sm:$0xf]
        %v2927 = vld [vmem:[%s2912 + $0x38] sm:$0xf]
        %v2928 = vld [vmem:[%s2912 + $0x3c] sm:$0xf]
        %v2945 = vunpack.c.l.b16 %v2913
        %v2946 = vunpack.c.l.b16 %v2914
        %v2947 = vunpack.c.l.b16 %v2915
        %v2948 = vunpack.c.l.b16 %v2916
        %v2949 = vunpack.c.l.b16 %v2917
        %v2950 = vunpack.c.l.b16 %v2918
        %v2951 = vunpack.c.l.b16 %v2919
        %v2952 = vunpack.c.l.b16 %v2920
        %v2953 = vunpack.c.l.b16 %v2921
        %v2954 = vunpack.c.l.b16 %v2922
        %v2955 = vunpack.c.l.b16 %v2923
        %v2956 = vunpack.c.l.b16 %v2924
        %v2957 = vunpack.c.l.b16 %v2925
        %v2958 = vunpack.c.l.b16 %v2926
        %v2959 = vunpack.c.l.b16 %v2927
        %v2960 = vunpack.c.l.b16 %v2928
        %v2961 = vpack.c.b16 %v2946, %v2945
        %v2962 = vpack.c.b16 %v2948, %v2947
        %v2963 = vpack.c.b16 %v2950, %v2949
        %v2964 = vpack.c.b16 %v2952, %v2951
        %v2965 = vpack.c.b16 %v2954, %v2953
        %v2966 = vpack.c.b16 %v2956, %v2955
        %v2967 = vpack.c.b16 %v2958, %v2957
        %v2968 = vpack.c.b16 %v2960, %v2959
        %2977 = vmatprep.subr.bf16.mxu0 0
        %2978 = vmatpush1.bf16.msra.mxu0 %v2904
        %2979 = vmatprep.subr.bf16.mxu0 0
        %2980 = vmatpush1.bf16.msra.mxu0 %v2905
        %2981 = vmatprep.subr.bf16.mxu0 0
        %2982 = vmatpush1.bf16.msra.mxu0 %v2906
        %2983 = vmatprep.subr.bf16.mxu0 0
        %2984 = vmatpush1.bf16.msra.mxu0 %v2907
        %2985 = vmatprep.subr.bf16.mxu0 0
        %2986 = vmatpush1.bf16.msra.mxu0 %v2908
        %2987 = vmatprep.subr.bf16.mxu0 0
        %2988 = vmatpush1.bf16.msra.mxu0 %v2909
        %2989 = vmatprep.subr.bf16.mxu0 0
        %2990 = vmatpush1.bf16.msra.mxu0 %v2910
        %2991 = vmatprep.subr.bf16.mxu0 0
        %2992 = vmatpush1.bf16.msra.mxu0 %v2911
        %2993 = vmatprep.subr.bf16.mxu0 0
        %2994 = vmatpush1.bf16.msra.mxu0 0
        %2995 = vmatprep.subr.bf16.mxu0 0
        %2996 = vmatpush1.bf16.msra.mxu0 0
        %2997 = vmatprep.subr.bf16.mxu0 0
        %2998 = vmatpush1.bf16.msra.mxu0 0
        %2999 = vmatprep.subr.bf16.mxu0 0
        %3000 = vmatpush1.bf16.msra.mxu0 0
        %3001 = vmatprep.subr.bf16.mxu0 0
        %3002 = vmatpush1.bf16.msra.mxu0 0
        %3003 = vmatprep.subr.bf16.mxu0 0
        %3004 = vmatpush1.bf16.msra.mxu0 0
        %3005 = vmatprep.subr.bf16.mxu0 0
        %3006 = vmatpush1.bf16.msra.mxu0 0
        %3007 = vmatprep.subr.bf16.mxu0 0
        %3008 = vmatpush1.bf16.msra.mxu0 0
        %3009 = vmatprep.mubr.bf16.mxu0 0
        %3010 = vmatmul.mubr.bf16.gmra.mrb[0].mxu0 %v2961
        %v3011 = vpop.f32.mrb[0].mxu0
        %v3012 = vadd.f32 0.0, %v3011
        %v3013 = vpop.f32.mrb[0].mxu0
        %v3014 = vpop.f32.mrb[0].mxu0
        %v3015 = vadd.f32 0.0, %v3014
        %v3016 = vpop.f32.mrb[0].mxu0
        %3017 = vmatprep.mubr.bf16.mxu0 0
        %3018 = vmatmul.mubr.bf16.gmra.mrb[0].mxu0 %v2962
        %v3019 = vpop.f32.mrb[0].mxu0
        %v3020 = vadd.f32 0.0, %v3019
        %v3021 = vpop.f32.mrb[0].mxu0
        %v3022 = vpop.f32.mrb[0].mxu0
        %v3023 = vadd.f32 0.0, %v3022
        %v3024 = vpop.f32.mrb[0].mxu0
        %3025 = vmatprep.mubr.bf16.mxu0 0
        %3026 = vmatmul.mubr.bf16.gmra.mrb[0].mxu0 %v2963
        %v3027 = vpop.f32.mrb[0].mxu0
        %v3028 = vadd.f32 0.0, %v3027
        %v3029 = vpop.f32.mrb[0].mxu0
        %v3030 = vpop.f32.mrb[0].mxu0
        %v3031 = vadd.f32 0.0, %v3030
        %v3032 = vpop.f32.mrb[0].mxu0
        %3033 = vmatprep.mubr.bf16.mxu0 0
        %3034 = vmatmul.mubr.bf16.gmra.mrb[0].mxu0 %v2964
        %v3035 = vpop.f32.mrb[0].mxu0
        %v3036 = vadd.f32 0.0, %v3035
        %v3037 = vpop.f32.mrb[0].mxu0
        %v3038 = vpop.f32.mrb[0].mxu0
        %v3039 = vadd.f32 0.0, %v3038
        %v3040 = vpop.f32.mrb[0].mxu0
        %3041 = vmatprep.mubr.bf16.mxu0 0
        %3042 = vmatmul.mubr.bf16.gmra.mrb[0].mxu0 %v2965
        %v3043 = vpop.f32.mrb[0].mxu0
        %v3044 = vadd.f32 0.0, %v3043
        %v3045 = vpop.f32.mrb[0].mxu0
        %v3046 = vpop.f32.mrb[0].mxu0
        %v3047 = vadd.f32 0.0, %v3046
        %v3048 = vpop.f32.mrb[0].mxu0
        %3049 = vmatprep.mubr.bf16.mxu0 0
        %3050 = vmatmul.mubr.bf16.gmra.mrb[0].mxu0 %v2966
        %v3051 = vpop.f32.mrb[0].mxu0
        %v3052 = vadd.f32 0.0, %v3051
        %v3053 = vpop.f32.mrb[0].mxu0
        %v3054 = vpop.f32.mrb[0].mxu0
        %v3055 = vadd.f32 0.0, %v3054
        %v3056 = vpop.f32.mrb[0].mxu0
        %3057 = vmatprep.mubr.bf16.mxu0 0
        %3058 = vmatmul.mubr.bf16.gmra.mrb[0].mxu0 %v2967
        %v3059 = vpop.f32.mrb[0].mxu0
        %v3060 = vadd.f32 0.0, %v3059
        %v3061 = vpop.f32.mrb[0].mxu0
        %v3062 = vpop.f32.mrb[0].mxu0
        %v3063 = vadd.f32 0.0, %v3062
        %v3064 = vpop.f32.mrb[0].mxu0
        %3065 = vmatprep.mubr.bf16.mxu0 0
        %3066 = vmatmul.mubr.bf16.gmra.mrb[0].mxu0 %v2968
        %v3067 = vpop.f32.mrb[0].mxu0
        %v3068 = vadd.f32 0.0, %v3067
        %v3069 = vpop.f32.mrb[0].mxu0
        %v3070 = vpop.f32.mrb[0].mxu0
        %v3071 = vadd.f32 0.0, %v3070
        %v3072 = vpop.f32.mrb[0].mxu0
        %3073 = vdwg.mxu0
        %v3090 = vunpack.c.l.b16 %v2786
        %v3091 = vunpack.c.l.b16 %v2787
        %v3092 = vunpack.c.l.b16 %v2788
        %v3093 = vunpack.c.l.b16 %v2789
        %v3094 = vunpack.c.l.b16 %v2790
        %v3095 = vunpack.c.l.b16 %v2791
        %v3096 = vunpack.c.l.b16 %v2792
        %v3097 = vunpack.c.l.b16 %v2793
        %v3098 = vunpack.c.l.b16 %v2794
        %v3099 = vunpack.c.l.b16 %v2795
        %v3100 = vunpack.c.l.b16 %v2796
        %v3101 = vunpack.c.l.b16 %v2797
        %v3102 = vunpack.c.l.b16 %v2798
        %v3103 = vunpack.c.l.b16 %v2799
        %v3104 = vunpack.c.l.b16 %v2800
        %v3105 = vunpack.c.l.b16 %v2801
        %v3106 = vpack.c.b16 %v3091, %v3090
        %v3107 = vpack.c.b16 %v3093, %v3092
        %v3108 = vpack.c.b16 %v3095, %v3094
        %v3109 = vpack.c.b16 %v3097, %v3096
        %v3110 = vpack.c.b16 %v3099, %v3098
        %v3111 = vpack.c.b16 %v3101, %v3100
        %v3112 = vpack.c.b16 %v3103, %v3102
        %v3113 = vpack.c.b16 %v3105, %v3104
        %3122 = vmatprep.subr.bf16.mxu0 0
        %3123 = vmatpush1.bf16.msra.mxu0 %v2778
        %3124 = vmatprep.subr.bf16.mxu0 0
        %3125 = vmatpush1.bf16.msra.mxu0 %v2779
        %3126 = vmatprep.subr.bf16.mxu0 0
        %3127 = vmatpush1.bf16.msra.mxu0 %v2780
        %3128 = vmatprep.subr.bf16.mxu0 0
        %3129 = vmatpush1.bf16.msra.mxu0 %v2781
        %3130 = vmatprep.subr.bf16.mxu0 0
        %3131 = vmatpush1.bf16.msra.mxu0 %v2782
        %3132 = vmatprep.subr.bf16.mxu0 0
        %3133 = vmatpush1.bf16.msra.mxu0 %v2783
        %3134 = vmatprep.subr.bf16.mxu0 0
        %3135 = vmatpush1.bf16.msra.mxu0 %v2784
        %3136 = vmatprep.subr.bf16.mxu0 0
        %3137 = vmatpush1.bf16.msra.mxu0 %v2785
        %3138 = vmatprep.subr.bf16.mxu0 0
        %3139 = vmatpush1.bf16.msra.mxu0 0
        %3140 = vmatprep.subr.bf16.mxu0 0
        %3141 = vmatpush1.bf16.msra.mxu0 0
        %3142 = vmatprep.subr.bf16.mxu0 0
        %3143 = vmatpush1.bf16.msra.mxu0 0
        %3144 = vmatprep.subr.bf16.mxu0 0
        %3145 = vmatpush1.bf16.msra.mxu0 0
        %3146 = vmatprep.subr.bf16.mxu0 0
        %3147 = vmatpush1.bf16.msra.mxu0 0
        %3148 = vmatprep.subr.bf16.mxu0 0
        %3149 = vmatpush1.bf16.msra.mxu0 0
        %3150 = vmatprep.subr.bf16.mxu0 0
        %3151 = vmatpush1.bf16.msra.mxu0 0
        %3152 = vmatprep.subr.bf16.mxu0 0
        %3153 = vmatpush1.bf16.msra.mxu0 0
        %3154 = vmatprep.mubr.bf16.mxu0 0
        %3155 = vmatmul.mubr.bf16.gmra.mrb[0].mxu0 %v3106
        %v3156 = vpop.f32.mrb[0].mxu0
        %v3157 = vadd.f32 %v3012, %v3156
        %v3158 = vpop.f32.mrb[0].mxu0
        %v3159 = vpop.f32.mrb[0].mxu0
        %v3160 = vadd.f32 %v3015, %v3159
        %v3161 = vpop.f32.mrb[0].mxu0
        %3162 = vmatprep.mubr.bf16.mxu0 0
        %3163 = vmatmul.mubr.bf16.gmra.mrb[0].mxu0 %v3107
        %v3164 = vpop.f32.mrb[0].mxu0
        %v3165 = vadd.f32 %v3020, %v3164
        %v3166 = vpop.f32.mrb[0].mxu0
        %v3167 = vpop.f32.mrb[0].mxu0
        %v3168 = vadd.f32 %v3023, %v3167
        %v3169 = vpop.f32.mrb[0].mxu0
        %3170 = vmatprep.mubr.bf16.mxu0 0
        %3171 = vmatmul.mubr.bf16.gmra.mrb[0].mxu0 %v3108
        %v3172 = vpop.f32.mrb[0].mxu0
        %v3173 = vadd.f32 %v3028, %v3172
        %v3174 = vpop.f32.mrb[0].mxu0
        %v3175 = vpop.f32.mrb[0].mxu0
        %v3176 = vadd.f32 %v3031, %v3175
        %v3177 = vpop.f32.mrb[0].mxu0
        %3178 = vmatprep.mubr.bf16.mxu0 0
        %3179 = vmatmul.mubr.bf16.gmra.mrb[0].mxu0 %v3109
        %v3180 = vpop.f32.mrb[0].mxu0
        %v3181 = vadd.f32 %v3036, %v3180
        %v3182 = vpop.f32.mrb[0].mxu0
        %v3183 = vpop.f32.mrb[0].mxu0
        %v3184 = vadd.f32 %v3039, %v3183
        %v3185 = vpop.f32.mrb[0].mxu0
        %3186 = vmatprep.mubr.bf16.mxu0 0
        %3187 = vmatmul.mubr.bf16.gmra.mrb[0].mxu0 %v3110
        %v3188 = vpop.f32.mrb[0].mxu0
        %v3189 = vadd.f32 %v3044, %v3188
        %v3190 = vpop.f32.mrb[0].mxu0
        %v3191 = vpop.f32.mrb[0].mxu0
        %v3192 = vadd.f32 %v3047, %v3191
        %v3193 = vpop.f32.mrb[0].mxu0
        %3194 = vmatprep.mubr.bf16.mxu0 0
        %3195 = vmatmul.mubr.bf16.gmra.mrb[0].mxu0 %v3111
        %v3196 = vpop.f32.mrb[0].mxu0
        %v3197 = vadd.f32 %v3052, %v3196
        %v3198 = vpop.f32.mrb[0].mxu0
        %v3199 = vpop.f32.mrb[0].mxu0
        %v3200 = vadd.f32 %v3055, %v3199
        %v3201 = vpop.f32.mrb[0].mxu0
        %3202 = vmatprep.mubr.bf16.mxu0 0
        %3203 = vmatmul.mubr.bf16.gmra.mrb[0].mxu0 %v3112
        %v3204 = vpop.f32.mrb[0].mxu0
        %v3205 = vadd.f32 %v3060, %v3204
        %v3206 = vpop.f32.mrb[0].mxu0
        %v3207 = vpop.f32.mrb[0].mxu0
        %v3208 = vadd.f32 %v3063, %v3207
        %v3209 = vpop.f32.mrb[0].mxu0
        %3210 = vmatprep.mubr.bf16.mxu0 0
        %3211 = vmatmul.mubr.bf16.gmra.mrb[0].mxu0 %v3113
        %v3212 = vpop.f32.mrb[0].mxu0
        %v3213 = vadd.f32 %v3068, %v3212
        %v3214 = vpop.f32.mrb[0].mxu0
        %v3215 = vpop.f32.mrb[0].mxu0
        %v3216 = vadd.f32 %v3071, %v3215
        %v3217 = vpop.f32.mrb[0].mxu0
        %3218 = vdwg.mxu0
        %s3219 = scalar_lea.vmem %s7, 8
        %v3220 = vld [vmem:[%s3219] sm:$0xf]
        %v3222 = vsel %vm2677, %v3220, 0
        %3224 = vmatprep.subr.bf16.mxu0 0
        %3225 = vmatpush1.bf16.msra.mxu0 %v3222
        %3226 = vmatprep.subr.bf16.mxu0 0
        %3227 = vmatpush1.bf16.msra.mxu0 0
        %3228 = vmatprep.subr.bf16.mxu0 0
        %3229 = vmatpush1.bf16.msra.mxu0 0
        %3230 = vmatprep.subr.bf16.mxu0 0
        %3231 = vmatpush1.bf16.msra.mxu0 0
        %3232 = vmatprep.subr.bf16.mxu0 0
        %3233 = vmatpush1.bf16.msra.mxu0 0
        %3234 = vmatprep.subr.bf16.mxu0 0
        %3235 = vmatpush1.bf16.msra.mxu0 0
        %3236 = vmatprep.subr.bf16.mxu0 0
        %3237 = vmatpush1.bf16.msra.mxu0 0
        %3238 = vmatprep.subr.bf16.mxu0 0
        %3239 = vmatpush1.bf16.msra.mxu0 0
        %3240 = vmatprep.subr.bf16.mxu0 0
        %3241 = vmatpush1.bf16.msra.mxu0 0
        %3242 = vmatprep.subr.bf16.mxu0 0
        %3243 = vmatpush1.bf16.msra.mxu0 0
        %3244 = vmatprep.subr.bf16.mxu0 0
        %3245 = vmatpush1.bf16.msra.mxu0 0
        %3246 = vmatprep.subr.bf16.mxu0 0
        %3247 = vmatpush1.bf16.msra.mxu0 0
        %3248 = vmatprep.subr.bf16.mxu0 0
        %3249 = vmatpush1.bf16.msra.mxu0 0
        %3250 = vmatprep.subr.bf16.mxu0 0
        %3251 = vmatpush1.bf16.msra.mxu0 0
        %3252 = vmatprep.subr.bf16.mxu0 0
        %3253 = vmatpush1.bf16.msra.mxu0 0
        %3254 = vmatprep.subr.bf16.mxu0 0
        %3255 = vmatpush1.bf16.msra.mxu0 0
        %3256 = vmatprep.mubr.bf16.mxu0 0
        %3257 = vmatmul.mubr.bf16.gmra.mrb[0].mxu0 %v2654
        %v3258 = vpop.f32.mrb[0].mxu0
        %v3259 = vadd.f32 0.0, %v3258
        %v3260 = vpop.f32.mrb[0].mxu0
        %v3261 = vpop.f32.mrb[0].mxu0
        %v3262 = vadd.f32 0.0, %v3261
        %v3263 = vpop.f32.mrb[0].mxu0
        %3264 = vmatprep.mubr.bf16.mxu0 0
        %3265 = vmatmul.mubr.bf16.gmra.mrb[0].mxu0 %v2657
        %v3266 = vpop.f32.mrb[0].mxu0
        %v3267 = vadd.f32 0.0, %v3266
        %v3268 = vpop.f32.mrb[0].mxu0
        %v3269 = vpop.f32.mrb[0].mxu0
        %v3270 = vadd.f32 0.0, %v3269
        %v3271 = vpop.f32.mrb[0].mxu0
        %3272 = vmatprep.mubr.bf16.mxu0 0
        %3273 = vmatmul.mubr.bf16.gmra.mrb[0].mxu0 %v2660
        %v3274 = vpop.f32.mrb[0].mxu0
        %v3275 = vadd.f32 0.0, %v3274
        %v3276 = vpop.f32.mrb[0].mxu0
        %v3277 = vpop.f32.mrb[0].mxu0
        %v3278 = vadd.f32 0.0, %v3277
        %v3279 = vpop.f32.mrb[0].mxu0
        %3280 = vmatprep.mubr.bf16.mxu0 0
        %3281 = vmatmul.mubr.bf16.gmra.mrb[0].mxu0 %v2663
        %v3282 = vpop.f32.mrb[0].mxu0
        %v3283 = vadd.f32 0.0, %v3282
        %v3284 = vpop.f32.mrb[0].mxu0
        %v3285 = vpop.f32.mrb[0].mxu0
        %v3286 = vadd.f32 0.0, %v3285
        %v3287 = vpop.f32.mrb[0].mxu0
        %3288 = vmatprep.mubr.bf16.mxu0 0
        %3289 = vmatmul.mubr.bf16.gmra.mrb[0].mxu0 %v2666
        %v3290 = vpop.f32.mrb[0].mxu0
        %v3291 = vadd.f32 0.0, %v3290
        %v3292 = vpop.f32.mrb[0].mxu0
        %v3293 = vpop.f32.mrb[0].mxu0
        %v3294 = vadd.f32 0.0, %v3293
        %v3295 = vpop.f32.mrb[0].mxu0
        %3296 = vmatprep.mubr.bf16.mxu0 0
        %3297 = vmatmul.mubr.bf16.gmra.mrb[0].mxu0 %v2669
        %v3298 = vpop.f32.mrb[0].mxu0
        %v3299 = vadd.f32 0.0, %v3298
        %v3300 = vpop.f32.mrb[0].mxu0
        %v3301 = vpop.f32.mrb[0].mxu0
        %v3302 = vadd.f32 0.0, %v3301
        %v3303 = vpop.f32.mrb[0].mxu0
        %3304 = vmatprep.mubr.bf16.mxu0 0
        %3305 = vmatmul.mubr.bf16.gmra.mrb[0].mxu0 %v2672
        %v3306 = vpop.f32.mrb[0].mxu0
        %v3307 = vadd.f32 0.0, %v3306
        %v3308 = vpop.f32.mrb[0].mxu0
        %v3309 = vpop.f32.mrb[0].mxu0
        %v3310 = vadd.f32 0.0, %v3309
        %v3311 = vpop.f32.mrb[0].mxu0
        %3312 = vmatprep.mubr.bf16.mxu0 0
        %3313 = vmatmul.mubr.bf16.gmra.mrb[0].mxu0 %v2675
        %v3314 = vpop.f32.mrb[0].mxu0
        %v3315 = vadd.f32 0.0, %v3314
        %v3316 = vpop.f32.mrb[0].mxu0
        %v3317 = vpop.f32.mrb[0].mxu0
        %v3318 = vadd.f32 0.0, %v3317
        %v3319 = vpop.f32.mrb[0].mxu0
        %3320 = vdwg.mxu0
        %v3321 = vpack.c.bf16 %v3262, %v3259
        %v3322 = vpack.c.bf16 %v3270, %v3267
        %v3323 = vpack.c.bf16 %v3278, %v3275
        %v3324 = vpack.c.bf16 %v3286, %v3283
        %v3325 = vpack.c.bf16 %v3294, %v3291
        %v3326 = vpack.c.bf16 %v3302, %v3299
        %v3327 = vpack.c.bf16 %v3310, %v3307
        %v3328 = vpack.c.bf16 %v3318, %v3315
        %s3329 = scalar_lea.vmem %s8, 128
        %v3330 = vld [vmem:[%s3329] sm:$0xf]
        %v3331 = vld [vmem:[%s3329 + $0x4] sm:$0xf]
        %v3332 = vld [vmem:[%s3329 + $0x8] sm:$0xf]
        %v3333 = vld [vmem:[%s3329 + $0xc] sm:$0xf]
        %v3334 = vld [vmem:[%s3329 + $0x10] sm:$0xf]
        %v3335 = vld [vmem:[%s3329 + $0x14] sm:$0xf]
        %v3336 = vld [vmem:[%s3329 + $0x18] sm:$0xf]
        %v3337 = vld [vmem:[%s3329 + $0x1c] sm:$0xf]
        %v3338 = vld [vmem:[%s3329 + $0x20] sm:$0xf]
        %v3339 = vld [vmem:[%s3329 + $0x24] sm:$0xf]
        %v3340 = vld [vmem:[%s3329 + $0x28] sm:$0xf]
        %v3341 = vld [vmem:[%s3329 + $0x2c] sm:$0xf]
        %v3342 = vld [vmem:[%s3329 + $0x30] sm:$0xf]
        %v3343 = vld [vmem:[%s3329 + $0x34] sm:$0xf]
        %v3344 = vld [vmem:[%s3329 + $0x38] sm:$0xf]
        %v3345 = vld [vmem:[%s3329 + $0x3c] sm:$0xf]
        %v3362 = vunpack.c.l.b16 %v3330
        %v3363 = vunpack.c.l.b16 %v3331
        %v3364 = vunpack.c.l.b16 %v3332
        %v3365 = vunpack.c.l.b16 %v3333
        %v3366 = vunpack.c.l.b16 %v3334
        %v3367 = vunpack.c.l.b16 %v3335
        %v3368 = vunpack.c.l.b16 %v3336
        %v3369 = vunpack.c.l.b16 %v3337
        %v3370 = vunpack.c.l.b16 %v3338
        %v3371 = vunpack.c.l.b16 %v3339
        %v3372 = vunpack.c.l.b16 %v3340
        %v3373 = vunpack.c.l.b16 %v3341
        %v3374 = vunpack.c.l.b16 %v3342
        %v3375 = vunpack.c.l.b16 %v3343
        %v3376 = vunpack.c.l.b16 %v3344
        %v3377 = vunpack.c.l.b16 %v3345
        %v3378 = vpack.c.b16 %v3363, %v3362
        %v3379 = vpack.c.b16 %v3365, %v3364
        %v3380 = vpack.c.b16 %v3367, %v3366
        %v3381 = vpack.c.b16 %v3369, %v3368
        %v3382 = vpack.c.b16 %v3371, %v3370
        %v3383 = vpack.c.b16 %v3373, %v3372
        %v3384 = vpack.c.b16 %v3375, %v3374
        %v3385 = vpack.c.b16 %v3377, %v3376
        %3394 = vmatprep.subr.bf16.mxu0 0
        %3395 = vmatpush1.bf16.msra.mxu0 %v3321
        %3396 = vmatprep.subr.bf16.mxu0 0
        %3397 = vmatpush1.bf16.msra.mxu0 %v3322
        %3398 = vmatprep.subr.bf16.mxu0 0
        %3399 = vmatpush1.bf16.msra.mxu0 %v3323
        %3400 = vmatprep.subr.bf16.mxu0 0
        %3401 = vmatpush1.bf16.msra.mxu0 %v3324
        %3402 = vmatprep.subr.bf16.mxu0 0
        %3403 = vmatpush1.bf16.msra.mxu0 %v3325
        %3404 = vmatprep.subr.bf16.mxu0 0
        %3405 = vmatpush1.bf16.msra.mxu0 %v3326
        %3406 = vmatprep.subr.bf16.mxu0 0
        %3407 = vmatpush1.bf16.msra.mxu0 %v3327
        %3408 = vmatprep.subr.bf16.mxu0 0
        %3409 = vmatpush1.bf16.msra.mxu0 %v3328
        %3410 = vmatprep.subr.bf16.mxu0 0
        %3411 = vmatpush1.bf16.msra.mxu0 0
        %3412 = vmatprep.subr.bf16.mxu0 0
        %3413 = vmatpush1.bf16.msra.mxu0 0
        %3414 = vmatprep.subr.bf16.mxu0 0
        %3415 = vmatpush1.bf16.msra.mxu0 0
        %3416 = vmatprep.subr.bf16.mxu0 0
        %3417 = vmatpush1.bf16.msra.mxu0 0
        %3418 = vmatprep.subr.bf16.mxu0 0
        %3419 = vmatpush1.bf16.msra.mxu0 0
        %3420 = vmatprep.subr.bf16.mxu0 0
        %3421 = vmatpush1.bf16.msra.mxu0 0
        %3422 = vmatprep.subr.bf16.mxu0 0
        %3423 = vmatpush1.bf16.msra.mxu0 0
        %3424 = vmatprep.subr.bf16.mxu0 0
        %3425 = vmatpush1.bf16.msra.mxu0 0
        %3426 = vmatprep.mubr.bf16.mxu0 0
        %3427 = vmatmul.mubr.bf16.gmra.mrb[0].mxu0 %v3378
        %v3428 = vpop.f32.mrb[0].mxu0
        %v3429 = vadd.f32 0.0, %v3428
        %v3430 = vpop.f32.mrb[0].mxu0
        %v3431 = vpop.f32.mrb[0].mxu0
        %v3432 = vadd.f32 0.0, %v3431
        %v3433 = vpop.f32.mrb[0].mxu0
        %3434 = vmatprep.mubr.bf16.mxu0 0
        %3435 = vmatmul.mubr.bf16.gmra.mrb[0].mxu0 %v3379
        %v3436 = vpop.f32.mrb[0].mxu0
        %v3437 = vadd.f32 0.0, %v3436
        %v3438 = vpop.f32.mrb[0].mxu0
        %v3439 = vpop.f32.mrb[0].mxu0
        %v3440 = vadd.f32 0.0, %v3439
        %v3441 = vpop.f32.mrb[0].mxu0
        %3442 = vmatprep.mubr.bf16.mxu0 0
        %3443 = vmatmul.mubr.bf16.gmra.mrb[0].mxu0 %v3380
        %v3444 = vpop.f32.mrb[0].mxu0
        %v3445 = vadd.f32 0.0, %v3444
        %v3446 = vpop.f32.mrb[0].mxu0
        %v3447 = vpop.f32.mrb[0].mxu0
        %v3448 = vadd.f32 0.0, %v3447
        %v3449 = vpop.f32.mrb[0].mxu0
        %3450 = vmatprep.mubr.bf16.mxu0 0
        %3451 = vmatmul.mubr.bf16.gmra.mrb[0].mxu0 %v3381
        %v3452 = vpop.f32.mrb[0].mxu0
        %v3453 = vadd.f32 0.0, %v3452
        %v3454 = vpop.f32.mrb[0].mxu0
        %v3455 = vpop.f32.mrb[0].mxu0
        %v3456 = vadd.f32 0.0, %v3455
        %v3457 = vpop.f32.mrb[0].mxu0
        %3458 = vmatprep.mubr.bf16.mxu0 0
        %3459 = vmatmul.mubr.bf16.gmra.mrb[0].mxu0 %v3382
        %v3460 = vpop.f32.mrb[0].mxu0
        %v3461 = vadd.f32 0.0, %v3460
        %v3462 = vpop.f32.mrb[0].mxu0
        %v3463 = vpop.f32.mrb[0].mxu0
        %v3464 = vadd.f32 0.0, %v3463
        %v3465 = vpop.f32.mrb[0].mxu0
        %3466 = vmatprep.mubr.bf16.mxu0 0
        %3467 = vmatmul.mubr.bf16.gmra.mrb[0].mxu0 %v3383
        %v3468 = vpop.f32.mrb[0].mxu0
        %v3469 = vadd.f32 0.0, %v3468
        %v3470 = vpop.f32.mrb[0].mxu0
        %v3471 = vpop.f32.mrb[0].mxu0
        %v3472 = vadd.f32 0.0, %v3471
        %v3473 = vpop.f32.mrb[0].mxu0
        %3474 = vmatprep.mubr.bf16.mxu0 0
        %3475 = vmatmul.mubr.bf16.gmra.mrb[0].mxu0 %v3384
        %v3476 = vpop.f32.mrb[0].mxu0
        %v3477 = vadd.f32 0.0, %v3476
        %v3478 = vpop.f32.mrb[0].mxu0
        %v3479 = vpop.f32.mrb[0].mxu0
        %v3480 = vadd.f32 0.0, %v3479
        %v3481 = vpop.f32.mrb[0].mxu0
        %3482 = vmatprep.mubr.bf16.mxu0 0
        %3483 = vmatmul.mubr.bf16.gmra.mrb[0].mxu0 %v3385
        %v3484 = vpop.f32.mrb[0].mxu0
        %v3485 = vadd.f32 0.0, %v3484
        %v3486 = vpop.f32.mrb[0].mxu0
        %v3487 = vpop.f32.mrb[0].mxu0
        %v3488 = vadd.f32 0.0, %v3487
        %v3489 = vpop.f32.mrb[0].mxu0
        %3490 = vdwg.mxu0
        %v3491 = vadd.f32 %v3157, %v3429
        %v3492 = vadd.f32 %v3160, %v3432
        %v3493 = vadd.f32 %v3165, %v3437
        %v3494 = vadd.f32 %v3168, %v3440
        %v3495 = vadd.f32 %v3173, %v3445
        %v3496 = vadd.f32 %v3176, %v3448
        %v3497 = vadd.f32 %v3181, %v3453
        %v3498 = vadd.f32 %v3184, %v3456
        %v3499 = vadd.f32 %v3189, %v3461
        %v3500 = vadd.f32 %v3192, %v3464
        %v3501 = vadd.f32 %v3197, %v3469
        %v3502 = vadd.f32 %v3200, %v3472
        %v3503 = vadd.f32 %v3205, %v3477
        %v3504 = vadd.f32 %v3208, %v3480
        %v3505 = vadd.f32 %v3213, %v3485
        %v3506 = vadd.f32 %v3216, %v3488
        %v3507 = vld [vmem:[%s9] sm:$0xff]
        %v3508 = vld [vmem:[%s9 + $0x8] sm:$0xff]
        %v3509 = vld [vmem:[%s9 + $0x10] sm:$0xff]
        %v3510 = vld [vmem:[%s9 + $0x18] sm:$0xff]
        %v3511 = vld [vmem:[%s9 + $0x20] sm:$0xff]
        %v3512 = vld [vmem:[%s9 + $0x28] sm:$0xff]
        %v3513 = vld [vmem:[%s9 + $0x30] sm:$0xff]
        %v3514 = vld [vmem:[%s9 + $0x38] sm:$0xff]
        %v3515 = vld [vmem:[%s9 + $0x40] sm:$0xff]
        %v3516 = vld [vmem:[%s9 + $0x48] sm:$0xff]
        %v3517 = vld [vmem:[%s9 + $0x50] sm:$0xff]
        %v3518 = vld [vmem:[%s9 + $0x58] sm:$0xff]
        %v3519 = vld [vmem:[%s9 + $0x60] sm:$0xff]
        %v3520 = vld [vmem:[%s9 + $0x68] sm:$0xff]
        %v3521 = vld [vmem:[%s9 + $0x70] sm:$0xff]
        %v3522 = vld [vmem:[%s9 + $0x78] sm:$0xff]
        %3524 = vset.pattern.permute.xlu0 0
        %3525 = vperm.xlu0 %3524, %v3507
        %v3526 = vpop.permute.xlu0 %3525
        %3529 = vset.pattern.permute.xlu0 0
        %3530 = vperm.xlu0 %3529, %v3508
        %v3531 = vpop.permute.xlu0 %3530
        %3534 = vset.pattern.permute.xlu0 0
        %3535 = vperm.xlu0 %3534, %v3509
        %v3536 = vpop.permute.xlu0 %3535
        %3539 = vset.pattern.permute.xlu0 0
        %3540 = vperm.xlu0 %3539, %v3510
        %v3541 = vpop.permute.xlu0 %3540
        %3544 = vset.pattern.permute.xlu0 0
        %3545 = vperm.xlu0 %3544, %v3511
        %v3546 = vpop.permute.xlu0 %3545
        %3549 = vset.pattern.permute.xlu0 0
        %3550 = vperm.xlu0 %3549, %v3512
        %v3551 = vpop.permute.xlu0 %3550
        %3554 = vset.pattern.permute.xlu0 0
        %3555 = vperm.xlu0 %3554, %v3513
        %v3556 = vpop.permute.xlu0 %3555
        %3559 = vset.pattern.permute.xlu0 0
        %3560 = vperm.xlu0 %3559, %v3514
        %v3561 = vpop.permute.xlu0 %3560
        %3564 = vset.pattern.permute.xlu0 0
        %3565 = vperm.xlu0 %3564, %v3515
        %v3566 = vpop.permute.xlu0 %3565
        %3569 = vset.pattern.permute.xlu0 0
        %3570 = vperm.xlu0 %3569, %v3516
        %v3571 = vpop.permute.xlu0 %3570
        %3574 = vset.pattern.permute.xlu0 0
        %3575 = vperm.xlu0 %3574, %v3517
        %v3576 = vpop.permute.xlu0 %3575
        %3579 = vset.pattern.permute.xlu0 0
        %3580 = vperm.xlu0 %3579, %v3518
        %v3581 = vpop.permute.xlu0 %3580
        %3584 = vset.pattern.permute.xlu0 0
        %3585 = vperm.xlu0 %3584, %v3519
        %v3586 = vpop.permute.xlu0 %3585
        %3589 = vset.pattern.permute.xlu0 0
        %3590 = vperm.xlu0 %3589, %v3520
        %v3591 = vpop.permute.xlu0 %3590
        %3594 = vset.pattern.permute.xlu0 0
        %3595 = vperm.xlu0 %3594, %v3521
        %v3596 = vpop.permute.xlu0 %3595
        %3599 = vset.pattern.permute.xlu0 0
        %3600 = vperm.xlu0 %3599, %v3522
        %v3601 = vpop.permute.xlu0 %3600
        %v3603 = vadd.f32 %v3491, %v3526
        %v3604 = vadd.f32 %v3492, %v3531
        %v3605 = vadd.f32 %v3493, %v3536
        %v3606 = vadd.f32 %v3494, %v3541
        %v3607 = vadd.f32 %v3495, %v3546
        %v3608 = vadd.f32 %v3496, %v3551
        %v3609 = vadd.f32 %v3497, %v3556
        %v3610 = vadd.f32 %v3498, %v3561
        %v3611 = vadd.f32 %v3499, %v3566
        %v3612 = vadd.f32 %v3500, %v3571
        %v3613 = vadd.f32 %v3501, %v3576
        %v3614 = vadd.f32 %v3502, %v3581
        %v3615 = vadd.f32 %v3503, %v3586
        %v3616 = vadd.f32 %v3504, %v3591
        %v3617 = vadd.f32 %v3505, %v3596
        %v3618 = vadd.f32 %v3506, %v3601
        %v3619 = vmax.f32 %v3603, 0.0
        %v3620 = vmax.f32 %v3604, 0.0
        %v3621 = vmax.f32 %v3605, 0.0
        %v3622 = vmax.f32 %v3606, 0.0
        %v3623 = vmax.f32 %v3607, 0.0
        %v3624 = vmax.f32 %v3608, 0.0
        %v3625 = vmax.f32 %v3609, 0.0
        %v3626 = vmax.f32 %v3610, 0.0
        %v3627 = vmax.f32 %v3611, 0.0
        %v3628 = vmax.f32 %v3612, 0.0
        %v3629 = vmax.f32 %v3613, 0.0
        %v3630 = vmax.f32 %v3614, 0.0
        %v3631 = vmax.f32 %v3615, 0.0
        %v3632 = vmax.f32 %v3616, 0.0
        %v3633 = vmax.f32 %v3617, 0.0
        %v3634 = vmax.f32 %v3618, 0.0
        %3635 = vst.msk [vmem:[%s551] sm:$0xff] %vm2627, %v3619
        %3636 = vst.msk [vmem:[%s551 + $0x8] sm:$0xff] %vm2627, %v3620
        %3637 = vst.msk [vmem:[%s551 + $0x10] sm:$0xff] %vm2627, %v3621
        %3638 = vst.msk [vmem:[%s551 + $0x18] sm:$0xff] %vm2627, %v3622
        %3639 = vst.msk [vmem:[%s551 + $0x20] sm:$0xff] %vm2627, %v3623
        %3640 = vst.msk [vmem:[%s551 + $0x28] sm:$0xff] %vm2627, %v3624
        %3641 = vst.msk [vmem:[%s551 + $0x30] sm:$0xff] %vm2627, %v3625
        %3642 = vst.msk [vmem:[%s551 + $0x38] sm:$0xff] %vm2627, %v3626
        %3643 = vst.msk [vmem:[%s551 + $0x40] sm:$0xff] %vm2627, %v3627
        %3644 = vst.msk [vmem:[%s551 + $0x48] sm:$0xff] %vm2627, %v3628
        %3645 = vst.msk [vmem:[%s551 + $0x50] sm:$0xff] %vm2627, %v3629
        %3646 = vst.msk [vmem:[%s551 + $0x58] sm:$0xff] %vm2627, %v3630
        %3647 = vst.msk [vmem:[%s551 + $0x60] sm:$0xff] %vm2627, %v3631
        %3648 = vst.msk [vmem:[%s551 + $0x68] sm:$0xff] %vm2627, %v3632
        %3649 = vst.msk [vmem:[%s551 + $0x70] sm:$0xff] %vm2627, %v3633
        %3650 = vst.msk [vmem:[%s551 + $0x78] sm:$0xff] %vm2627, %v3634
        %v3651 = vpack.c.bf16 %v3620, %v3619
        %v3652 = vpack.c.bf16 %v3622, %v3621
        %v3653 = vpack.c.bf16 %v3624, %v3623
        %v3654 = vpack.c.bf16 %v3626, %v3625
        %v3655 = vpack.c.bf16 %v3628, %v3627
        %v3656 = vpack.c.bf16 %v3630, %v3629
        %v3657 = vpack.c.bf16 %v3632, %v3631
        %v3658 = vpack.c.bf16 %v3634, %v3633
        %v3659 = vld [vmem:[%s10] sm:$0xf]
        %v3661 = vsel %vm2627, %v3651, 0
        %v3664 = vsel %vm2627, %v3652, 0
        %v3667 = vsel %vm2627, %v3653, 0
        %v3670 = vsel %vm2627, %v3654, 0
        %v3673 = vsel %vm2627, %v3655, 0
        %v3676 = vsel %vm2627, %v3656, 0
        %v3679 = vsel %vm2627, %v3657, 0
        %v3682 = vsel %vm2627, %v3658, 0
        %v3685 = vsel %vm2677, %v3659, 0
        %3687 = vmatprep.subr.bf16.mxu0 0
        %3688 = vmatpush1.bf16.msra.mxu0 %v3685
        %3689 = vmatprep.subr.bf16.mxu0 0
        %3690 = vmatpush1.bf16.msra.mxu0 0
        %3691 = vmatprep.subr.bf16.mxu0 0
        %3692 = vmatpush1.bf16.msra.mxu0 0
        %3693 = vmatprep.subr.bf16.mxu0 0
        %3694 = vmatpush1.bf16.msra.mxu0 0
        %3695 = vmatprep.subr.bf16.mxu0 0
        %3696 = vmatpush1.bf16.msra.mxu0 0
        %3697 = vmatprep.subr.bf16.mxu0 0
        %3698 = vmatpush1.bf16.msra.mxu0 0
        %3699 = vmatprep.subr.bf16.mxu0 0
        %3700 = vmatpush1.bf16.msra.mxu0 0
        %3701 = vmatprep.subr.bf16.mxu0 0
        %3702 = vmatpush1.bf16.msra.mxu0 0
        %3703 = vmatprep.subr.bf16.mxu0 0
        %3704 = vmatpush1.bf16.msra.mxu0 0
        %3705 = vmatprep.subr.bf16.mxu0 0
        %3706 = vmatpush1.bf16.msra.mxu0 0
        %3707 = vmatprep.subr.bf16.mxu0 0
        %3708 = vmatpush1.bf16.msra.mxu0 0
        %3709 = vmatprep.subr.bf16.mxu0 0
        %3710 = vmatpush1.bf16.msra.mxu0 0
        %3711 = vmatprep.subr.bf16.mxu0 0
        %3712 = vmatpush1.bf16.msra.mxu0 0
        %3713 = vmatprep.subr.bf16.mxu0 0
        %3714 = vmatpush1.bf16.msra.mxu0 0
        %3715 = vmatprep.subr.bf16.mxu0 0
        %3716 = vmatpush1.bf16.msra.mxu0 0
        %3717 = vmatprep.subr.bf16.mxu0 0
        %3718 = vmatpush1.bf16.msra.mxu0 0
        %3719 = vmatprep.mubr.bf16.mxu0 0
        %3720 = vmatmul.mubr.bf16.gmra.mrb[0].mxu0 %v3661
        %v3721 = vpop.f32.mrb[0].mxu0
        %v3722 = vadd.f32 0.0, %v3721
        %v3723 = vpop.f32.mrb[0].mxu0
        %v3724 = vpop.f32.mrb[0].mxu0
        %v3725 = vadd.f32 0.0, %v3724
        %v3726 = vpop.f32.mrb[0].mxu0
        %3727 = vmatprep.mubr.bf16.mxu0 0
        %3728 = vmatmul.mubr.bf16.gmra.mrb[0].mxu0 %v3664
        %v3729 = vpop.f32.mrb[0].mxu0
        %v3730 = vadd.f32 0.0, %v3729
        %v3731 = vpop.f32.mrb[0].mxu0
        %v3732 = vpop.f32.mrb[0].mxu0
        %v3733 = vadd.f32 0.0, %v3732
        %v3734 = vpop.f32.mrb[0].mxu0
        %3735 = vmatprep.mubr.bf16.mxu0 0
        %3736 = vmatmul.mubr.bf16.gmra.mrb[0].mxu0 %v3667
        %v3737 = vpop.f32.mrb[0].mxu0
        %v3738 = vadd.f32 0.0, %v3737
        %v3739 = vpop.f32.mrb[0].mxu0
        %v3740 = vpop.f32.mrb[0].mxu0
        %v3741 = vadd.f32 0.0, %v3740
        %v3742 = vpop.f32.mrb[0].mxu0
        %3743 = vmatprep.mubr.bf16.mxu0 0
        %3744 = vmatmul.mubr.bf16.gmra.mrb[0].mxu0 %v3670
        %v3745 = vpop.f32.mrb[0].mxu0
        %v3746 = vadd.f32 0.0, %v3745
        %v3747 = vpop.f32.mrb[0].mxu0
        %v3748 = vpop.f32.mrb[0].mxu0
        %v3749 = vadd.f32 0.0, %v3748
        %v3750 = vpop.f32.mrb[0].mxu0
        %3751 = vmatprep.mubr.bf16.mxu0 0
        %3752 = vmatmul.mubr.bf16.gmra.mrb[0].mxu0 %v3673
        %v3753 = vpop.f32.mrb[0].mxu0
        %v3754 = vadd.f32 0.0, %v3753
        %v3755 = vpop.f32.mrb[0].mxu0
        %v3756 = vpop.f32.mrb[0].mxu0
        %v3757 = vadd.f32 0.0, %v3756
        %v3758 = vpop.f32.mrb[0].mxu0
        %3759 = vmatprep.mubr.bf16.mxu0 0
        %3760 = vmatmul.mubr.bf16.gmra.mrb[0].mxu0 %v3676
        %v3761 = vpop.f32.mrb[0].mxu0
        %v3762 = vadd.f32 0.0, %v3761
        %v3763 = vpop.f32.mrb[0].mxu0
        %v3764 = vpop.f32.mrb[0].mxu0
        %v3765 = vadd.f32 0.0, %v3764
        %v3766 = vpop.f32.mrb[0].mxu0
        %3767 = vmatprep.mubr.bf16.mxu0 0
        %3768 = vmatmul.mubr.bf16.gmra.mrb[0].mxu0 %v3679
        %v3769 = vpop.f32.mrb[0].mxu0
        %v3770 = vadd.f32 0.0, %v3769
        %v3771 = vpop.f32.mrb[0].mxu0
        %v3772 = vpop.f32.mrb[0].mxu0
        %v3773 = vadd.f32 0.0, %v3772
        %v3774 = vpop.f32.mrb[0].mxu0
        %3775 = vmatprep.mubr.bf16.mxu0 0
        %3776 = vmatmul.mubr.bf16.gmra.mrb[0].mxu0 %v3682
        %v3777 = vpop.f32.mrb[0].mxu0
        %v3778 = vadd.f32 0.0, %v3777
        %v3779 = vpop.f32.mrb[0].mxu0
        %v3780 = vpop.f32.mrb[0].mxu0
        %v3781 = vadd.f32 0.0, %v3780
        %v3782 = vpop.f32.mrb[0].mxu0
        %3783 = vdwg.mxu0
        %v3784 = vpack.c.bf16 %v3725, %v3722
        %v3785 = vpack.c.bf16 %v3733, %v3730
        %v3786 = vpack.c.bf16 %v3741, %v3738
        %v3787 = vpack.c.bf16 %v3749, %v3746
        %v3788 = vpack.c.bf16 %v3757, %v3754
        %v3789 = vpack.c.bf16 %v3765, %v3762
        %v3790 = vpack.c.bf16 %v3773, %v3770
        %v3791 = vpack.c.bf16 %v3781, %v3778
        %v3792 = vld [vmem:[%s11] sm:$0xf]
        %v3793 = vld [vmem:[%s11 + $0x4] sm:$0xf]
        %v3794 = vld [vmem:[%s11 + $0x8] sm:$0xf]
        %v3795 = vld [vmem:[%s11 + $0xc] sm:$0xf]
        %v3796 = vld [vmem:[%s11 + $0x10] sm:$0xf]
        %v3797 = vld [vmem:[%s11 + $0x14] sm:$0xf]
        %v3798 = vld [vmem:[%s11 + $0x18] sm:$0xf]
        %v3799 = vld [vmem:[%s11 + $0x1c] sm:$0xf]
        %s3800 = scalar_lea.vmem %s10, 4
        %v3801 = vld [vmem:[%s3800] sm:$0xf]
        %v3803 = vsel %vm2677, %v3801, 0
        %3805 = vmatprep.subr.bf16.mxu0 0
        %3806 = vmatpush1.bf16.msra.mxu0 %v3803
        %3807 = vmatprep.subr.bf16.mxu0 0
        %3808 = vmatpush1.bf16.msra.mxu0 0
        %3809 = vmatprep.subr.bf16.mxu0 0
        %3810 = vmatpush1.bf16.msra.mxu0 0
        %3811 = vmatprep.subr.bf16.mxu0 0
        %3812 = vmatpush1.bf16.msra.mxu0 0
        %3813 = vmatprep.subr.bf16.mxu0 0
        %3814 = vmatpush1.bf16.msra.mxu0 0
        %3815 = vmatprep.subr.bf16.mxu0 0
        %3816 = vmatpush1.bf16.msra.mxu0 0
        %3817 = vmatprep.subr.bf16.mxu0 0
        %3818 = vmatpush1.bf16.msra.mxu0 0
        %3819 = vmatprep.subr.bf16.mxu0 0
        %3820 = vmatpush1.bf16.msra.mxu0 0
        %3821 = vmatprep.subr.bf16.mxu0 0
        %3822 = vmatpush1.bf16.msra.mxu0 0
        %3823 = vmatprep.subr.bf16.mxu0 0
        %3824 = vmatpush1.bf16.msra.mxu0 0
        %3825 = vmatprep.subr.bf16.mxu0 0
        %3826 = vmatpush1.bf16.msra.mxu0 0
        %3827 = vmatprep.subr.bf16.mxu0 0
        %3828 = vmatpush1.bf16.msra.mxu0 0
        %3829 = vmatprep.subr.bf16.mxu0 0
        %3830 = vmatpush1.bf16.msra.mxu0 0
        %3831 = vmatprep.subr.bf16.mxu0 0
        %3832 = vmatpush1.bf16.msra.mxu0 0
        %3833 = vmatprep.subr.bf16.mxu0 0
        %3834 = vmatpush1.bf16.msra.mxu0 0
        %3835 = vmatprep.subr.bf16.mxu0 0
        %3836 = vmatpush1.bf16.msra.mxu0 0
        %3837 = vmatprep.mubr.bf16.mxu0 0
        %3838 = vmatmul.mubr.bf16.gmra.mrb[0].mxu0 %v3661
        %v3839 = vpop.f32.mrb[0].mxu0
        %v3840 = vadd.f32 0.0, %v3839
        %v3841 = vpop.f32.mrb[0].mxu0
        %v3842 = vpop.f32.mrb[0].mxu0
        %v3843 = vadd.f32 0.0, %v3842
        %v3844 = vpop.f32.mrb[0].mxu0
        %3845 = vmatprep.mubr.bf16.mxu0 0
        %3846 = vmatmul.mubr.bf16.gmra.mrb[0].mxu0 %v3664
        %v3847 = vpop.f32.mrb[0].mxu0
        %v3848 = vadd.f32 0.0, %v3847
        %v3849 = vpop.f32.mrb[0].mxu0
        %v3850 = vpop.f32.mrb[0].mxu0
        %v3851 = vadd.f32 0.0, %v3850
        %v3852 = vpop.f32.mrb[0].mxu0
        %3853 = vmatprep.mubr.bf16.mxu0 0
        %3854 = vmatmul.mubr.bf16.gmra.mrb[0].mxu0 %v3667
        %v3855 = vpop.f32.mrb[0].mxu0
        %v3856 = vadd.f32 0.0, %v3855
        %v3857 = vpop.f32.mrb[0].mxu0
        %v3858 = vpop.f32.mrb[0].mxu0
        %v3859 = vadd.f32 0.0, %v3858
        %v3860 = vpop.f32.mrb[0].mxu0
        %3861 = vmatprep.mubr.bf16.mxu0 0
        %3862 = vmatmul.mubr.bf16.gmra.mrb[0].mxu0 %v3670
        %v3863 = vpop.f32.mrb[0].mxu0
        %v3864 = vadd.f32 0.0, %v3863
        %v3865 = vpop.f32.mrb[0].mxu0
        %v3866 = vpop.f32.mrb[0].mxu0
        %v3867 = vadd.f32 0.0, %v3866
        %v3868 = vpop.f32.mrb[0].mxu0
        %3869 = vmatprep.mubr.bf16.mxu0 0
        %3870 = vmatmul.mubr.bf16.gmra.mrb[0].mxu0 %v3673
        %v3871 = vpop.f32.mrb[0].mxu0
        %v3872 = vadd.f32 0.0, %v3871
        %v3873 = vpop.f32.mrb[0].mxu0
        %v3874 = vpop.f32.mrb[0].mxu0
        %v3875 = vadd.f32 0.0, %v3874
        %v3876 = vpop.f32.mrb[0].mxu0
        %3877 = vmatprep.mubr.bf16.mxu0 0
        %3878 = vmatmul.mubr.bf16.gmra.mrb[0].mxu0 %v3676
        %v3879 = vpop.f32.mrb[0].mxu0
        %v3880 = vadd.f32 0.0, %v3879
        %v3881 = vpop.f32.mrb[0].mxu0
        %v3882 = vpop.f32.mrb[0].mxu0
        %v3883 = vadd.f32 0.0, %v3882
        %v3884 = vpop.f32.mrb[0].mxu0
        %3885 = vmatprep.mubr.bf16.mxu0 0
        %3886 = vmatmul.mubr.bf16.gmra.mrb[0].mxu0 %v3679
        %v3887 = vpop.f32.mrb[0].mxu0
        %v3888 = vadd.f32 0.0, %v3887
        %v3889 = vpop.f32.mrb[0].mxu0
        %v3890 = vpop.f32.mrb[0].mxu0
        %v3891 = vadd.f32 0.0, %v3890
        %v3892 = vpop.f32.mrb[0].mxu0
        %3893 = vmatprep.mubr.bf16.mxu0 0
        %3894 = vmatmul.mubr.bf16.gmra.mrb[0].mxu0 %v3682
        %v3895 = vpop.f32.mrb[0].mxu0
        %v3896 = vadd.f32 0.0, %v3895
        %v3897 = vpop.f32.mrb[0].mxu0
        %v3898 = vpop.f32.mrb[0].mxu0
        %v3899 = vadd.f32 0.0, %v3898
        %v3900 = vpop.f32.mrb[0].mxu0
        %3901 = vdwg.mxu0
        %v3902 = vpack.c.bf16 %v3843, %v3840
        %v3903 = vpack.c.bf16 %v3851, %v3848
        %v3904 = vpack.c.bf16 %v3859, %v3856
        %v3905 = vpack.c.bf16 %v3867, %v3864
        %v3906 = vpack.c.bf16 %v3875, %v3872
        %v3907 = vpack.c.bf16 %v3883, %v3880
        %v3908 = vpack.c.bf16 %v3891, %v3888
        %v3909 = vpack.c.bf16 %v3899, %v3896
        %s3910 = scalar_lea.vmem %s11, 32
        %v3911 = vld [vmem:[%s3910] sm:$0xf]
        %v3912 = vld [vmem:[%s3910 + $0x4] sm:$0xf]
        %v3913 = vld [vmem:[%s3910 + $0x8] sm:$0xf]
        %v3914 = vld [vmem:[%s3910 + $0xc] sm:$0xf]
        %v3915 = vld [vmem:[%s3910 + $0x10] sm:$0xf]
        %v3916 = vld [vmem:[%s3910 + $0x14] sm:$0xf]
        %v3917 = vld [vmem:[%s3910 + $0x18] sm:$0xf]
        %v3918 = vld [vmem:[%s3910 + $0x1c] sm:$0xf]
        %v3927 = vunpack.c.l.b16 %v3911
        %v3928 = vunpack.c.l.b16 %v3912
        %v3929 = vunpack.c.l.b16 %v3913
        %v3930 = vunpack.c.l.b16 %v3914
        %v3931 = vunpack.c.l.b16 %v3915
        %v3932 = vunpack.c.l.b16 %v3916
        %v3933 = vunpack.c.l.b16 %v3917
        %v3934 = vunpack.c.l.b16 %v3918
        %v3935 = vpack.c.b16 %v3928, %v3927
        %v3936 = vpack.c.b16 %v3930, %v3929
        %v3937 = vpack.c.b16 %v3932, %v3931
        %v3938 = vpack.c.b16 %v3934, %v3933
        %3943 = vmatprep.subr.bf16.mxu0 0
        %3944 = vmatpush1.bf16.msra.mxu0 %v3902
        %3945 = vmatprep.subr.bf16.mxu0 0
        %3946 = vmatpush1.bf16.msra.mxu0 %v3903
        %3947 = vmatprep.subr.bf16.mxu0 0
        %3948 = vmatpush1.bf16.msra.mxu0 %v3904
        %3949 = vmatprep.subr.bf16.mxu0 0
        %3950 = vmatpush1.bf16.msra.mxu0 %v3905
        %3951 = vmatprep.subr.bf16.mxu0 0
        %3952 = vmatpush1.bf16.msra.mxu0 %v3906
        %3953 = vmatprep.subr.bf16.mxu0 0
        %3954 = vmatpush1.bf16.msra.mxu0 %v3907
        %3955 = vmatprep.subr.bf16.mxu0 0
        %3956 = vmatpush1.bf16.msra.mxu0 %v3908
        %3957 = vmatprep.subr.bf16.mxu0 0
        %3958 = vmatpush1.bf16.msra.mxu0 %v3909
        %3959 = vmatprep.subr.bf16.mxu0 0
        %3960 = vmatpush1.bf16.msra.mxu0 0
        %3961 = vmatprep.subr.bf16.mxu0 0
        %3962 = vmatpush1.bf16.msra.mxu0 0
        %3963 = vmatprep.subr.bf16.mxu0 0
        %3964 = vmatpush1.bf16.msra.mxu0 0
        %3965 = vmatprep.subr.bf16.mxu0 0
        %3966 = vmatpush1.bf16.msra.mxu0 0
        %3967 = vmatprep.subr.bf16.mxu0 0
        %3968 = vmatpush1.bf16.msra.mxu0 0
        %3969 = vmatprep.subr.bf16.mxu0 0
        %3970 = vmatpush1.bf16.msra.mxu0 0
        %3971 = vmatprep.subr.bf16.mxu0 0
        %3972 = vmatpush1.bf16.msra.mxu0 0
        %3973 = vmatprep.subr.bf16.mxu0 0
        %3974 = vmatpush1.bf16.msra.mxu0 0
        %3975 = vmatprep.mubr.bf16.mxu0 0
        %3976 = vmatmul.mubr.bf16.gmra.mrb[0].mxu0 %v3935
        %v3977 = vpop.f32.mrb[0].mxu0
        %v3978 = vadd.f32 0.0, %v3977
        %v3979 = vpop.f32.mrb[0].mxu0
        %v3980 = vpop.f32.mrb[0].mxu0
        %v3981 = vadd.f32 0.0, %v3980
        %v3982 = vpop.f32.mrb[0].mxu0
        %3983 = vmatprep.mubr.bf16.mxu0 0
        %3984 = vmatmul.mubr.bf16.gmra.mrb[0].mxu0 %v3936
        %v3985 = vpop.f32.mrb[0].mxu0
        %v3986 = vadd.f32 0.0, %v3985
        %v3987 = vpop.f32.mrb[0].mxu0
        %v3988 = vpop.f32.mrb[0].mxu0
        %v3989 = vadd.f32 0.0, %v3988
        %v3990 = vpop.f32.mrb[0].mxu0
        %3991 = vmatprep.mubr.bf16.mxu0 0
        %3992 = vmatmul.mubr.bf16.gmra.mrb[0].mxu0 %v3937
        %v3993 = vpop.f32.mrb[0].mxu0
        %v3994 = vadd.f32 0.0, %v3993
        %v3995 = vpop.f32.mrb[0].mxu0
        %v3996 = vpop.f32.mrb[0].mxu0
        %v3997 = vadd.f32 0.0, %v3996
        %v3998 = vpop.f32.mrb[0].mxu0
        %3999 = vmatprep.mubr.bf16.mxu0 0
        %4000 = vmatmul.mubr.bf16.gmra.mrb[0].mxu0 %v3938
        %v4001 = vpop.f32.mrb[0].mxu0
        %v4002 = vadd.f32 0.0, %v4001
        %v4003 = vpop.f32.mrb[0].mxu0
        %v4004 = vpop.f32.mrb[0].mxu0
        %v4005 = vadd.f32 0.0, %v4004
        %v4006 = vpop.f32.mrb[0].mxu0
        %4007 = vdwg.mxu0
        %v4016 = vunpack.c.l.b16 %v3792
        %v4017 = vunpack.c.l.b16 %v3793
        %v4018 = vunpack.c.l.b16 %v3794
        %v4019 = vunpack.c.l.b16 %v3795
        %v4020 = vunpack.c.l.b16 %v3796
        %v4021 = vunpack.c.l.b16 %v3797
        %v4022 = vunpack.c.l.b16 %v3798
        %v4023 = vunpack.c.l.b16 %v3799
        %v4024 = vpack.c.b16 %v4017, %v4016
        %v4025 = vpack.c.b16 %v4019, %v4018
        %v4026 = vpack.c.b16 %v4021, %v4020
        %v4027 = vpack.c.b16 %v4023, %v4022
        %4032 = vmatprep.subr.bf16.mxu0 0
        %4033 = vmatpush1.bf16.msra.mxu0 %v3784
        %4034 = vmatprep.subr.bf16.mxu0 0
        %4035 = vmatpush1.bf16.msra.mxu0 %v3785
        %4036 = vmatprep.subr.bf16.mxu0 0
        %4037 = vmatpush1.bf16.msra.mxu0 %v3786
        %4038 = vmatprep.subr.bf16.mxu0 0
        %4039 = vmatpush1.bf16.msra.mxu0 %v3787
        %4040 = vmatprep.subr.bf16.mxu0 0
        %4041 = vmatpush1.bf16.msra.mxu0 %v3788
        %4042 = vmatprep.subr.bf16.mxu0 0
        %4043 = vmatpush1.bf16.msra.mxu0 %v3789
        %4044 = vmatprep.subr.bf16.mxu0 0
        %4045 = vmatpush1.bf16.msra.mxu0 %v3790
        %4046 = vmatprep.subr.bf16.mxu0 0
        %4047 = vmatpush1.bf16.msra.mxu0 %v3791
        %4048 = vmatprep.subr.bf16.mxu0 0
        %4049 = vmatpush1.bf16.msra.mxu0 0
        %4050 = vmatprep.subr.bf16.mxu0 0
        %4051 = vmatpush1.bf16.msra.mxu0 0
        %4052 = vmatprep.subr.bf16.mxu0 0
        %4053 = vmatpush1.bf16.msra.mxu0 0
        %4054 = vmatprep.subr.bf16.mxu0 0
        %4055 = vmatpush1.bf16.msra.mxu0 0
        %4056 = vmatprep.subr.bf16.mxu0 0
        %4057 = vmatpush1.bf16.msra.mxu0 0
        %4058 = vmatprep.subr.bf16.mxu0 0
        %4059 = vmatpush1.bf16.msra.mxu0 0
        %4060 = vmatprep.subr.bf16.mxu0 0
        %4061 = vmatpush1.bf16.msra.mxu0 0
        %4062 = vmatprep.subr.bf16.mxu0 0
        %4063 = vmatpush1.bf16.msra.mxu0 0
        %4064 = vmatprep.mubr.bf16.mxu0 0
        %4065 = vmatmul.mubr.bf16.gmra.mrb[0].mxu0 %v4024
        %v4066 = vpop.f32.mrb[0].mxu0
        %v4067 = vadd.f32 %v3978, %v4066
        %v4068 = vpop.f32.mrb[0].mxu0
        %v4069 = vpop.f32.mrb[0].mxu0
        %v4070 = vadd.f32 %v3981, %v4069
        %v4071 = vpop.f32.mrb[0].mxu0
        %4072 = vmatprep.mubr.bf16.mxu0 0
        %4073 = vmatmul.mubr.bf16.gmra.mrb[0].mxu0 %v4025
        %v4074 = vpop.f32.mrb[0].mxu0
        %v4075 = vadd.f32 %v3986, %v4074
        %v4076 = vpop.f32.mrb[0].mxu0
        %v4077 = vpop.f32.mrb[0].mxu0
        %v4078 = vadd.f32 %v3989, %v4077
        %v4079 = vpop.f32.mrb[0].mxu0
        %4080 = vmatprep.mubr.bf16.mxu0 0
        %4081 = vmatmul.mubr.bf16.gmra.mrb[0].mxu0 %v4026
        %v4082 = vpop.f32.mrb[0].mxu0
        %v4083 = vadd.f32 %v3994, %v4082
        %v4084 = vpop.f32.mrb[0].mxu0
        %v4085 = vpop.f32.mrb[0].mxu0
        %v4086 = vadd.f32 %v3997, %v4085
        %v4087 = vpop.f32.mrb[0].mxu0
        %4088 = vmatprep.mubr.bf16.mxu0 0
        %4089 = vmatmul.mubr.bf16.gmra.mrb[0].mxu0 %v4027
        %v4090 = vpop.f32.mrb[0].mxu0
        %v4091 = vadd.f32 %v4002, %v4090
        %v4092 = vpop.f32.mrb[0].mxu0
        %v4093 = vpop.f32.mrb[0].mxu0
        %v4094 = vadd.f32 %v4005, %v4093
        %v4095 = vpop.f32.mrb[0].mxu0
        %4096 = vdwg.mxu0
        %s4097 = scalar_lea.vmem %s10, 8
        %v4098 = vld [vmem:[%s4097] sm:$0xf]
        %v4100 = vsel %vm2677, %v4098, 0
        %4102 = vmatprep.subr.bf16.mxu0 0
        %4103 = vmatpush1.bf16.msra.mxu0 %v4100
        %4104 = vmatprep.subr.bf16.mxu0 0
        %4105 = vmatpush1.bf16.msra.mxu0 0
        %4106 = vmatprep.subr.bf16.mxu0 0
        %4107 = vmatpush1.bf16.msra.mxu0 0
        %4108 = vmatprep.subr.bf16.mxu0 0
        %4109 = vmatpush1.bf16.msra.mxu0 0
        %4110 = vmatprep.subr.bf16.mxu0 0
        %4111 = vmatpush1.bf16.msra.mxu0 0
        %4112 = vmatprep.subr.bf16.mxu0 0
        %4113 = vmatpush1.bf16.msra.mxu0 0
        %4114 = vmatprep.subr.bf16.mxu0 0
        %4115 = vmatpush1.bf16.msra.mxu0 0
        %4116 = vmatprep.subr.bf16.mxu0 0
        %4117 = vmatpush1.bf16.msra.mxu0 0
        %4118 = vmatprep.subr.bf16.mxu0 0
        %4119 = vmatpush1.bf16.msra.mxu0 0
        %4120 = vmatprep.subr.bf16.mxu0 0
        %4121 = vmatpush1.bf16.msra.mxu0 0
        %4122 = vmatprep.subr.bf16.mxu0 0
        %4123 = vmatpush1.bf16.msra.mxu0 0
        %4124 = vmatprep.subr.bf16.mxu0 0
        %4125 = vmatpush1.bf16.msra.mxu0 0
        %4126 = vmatprep.subr.bf16.mxu0 0
        %4127 = vmatpush1.bf16.msra.mxu0 0
        %4128 = vmatprep.subr.bf16.mxu0 0
        %4129 = vmatpush1.bf16.msra.mxu0 0
        %4130 = vmatprep.subr.bf16.mxu0 0
        %4131 = vmatpush1.bf16.msra.mxu0 0
        %4132 = vmatprep.subr.bf16.mxu0 0
        %4133 = vmatpush1.bf16.msra.mxu0 0
        %4134 = vmatprep.mubr.bf16.mxu0 0
        %4135 = vmatmul.mubr.bf16.gmra.mrb[0].mxu0 %v3661
        %v4136 = vpop.f32.mrb[0].mxu0
        %v4137 = vadd.f32 0.0, %v4136
        %v4138 = vpop.f32.mrb[0].mxu0
        %v4139 = vpop.f32.mrb[0].mxu0
        %v4140 = vadd.f32 0.0, %v4139
        %v4141 = vpop.f32.mrb[0].mxu0
        %4142 = vmatprep.mubr.bf16.mxu0 0
        %4143 = vmatmul.mubr.bf16.gmra.mrb[0].mxu0 %v3664
        %v4144 = vpop.f32.mrb[0].mxu0
        %v4145 = vadd.f32 0.0, %v4144
        %v4146 = vpop.f32.mrb[0].mxu0
        %v4147 = vpop.f32.mrb[0].mxu0
        %v4148 = vadd.f32 0.0, %v4147
        %v4149 = vpop.f32.mrb[0].mxu0
        %4150 = vmatprep.mubr.bf16.mxu0 0
        %4151 = vmatmul.mubr.bf16.gmra.mrb[0].mxu0 %v3667
        %v4152 = vpop.f32.mrb[0].mxu0
        %v4153 = vadd.f32 0.0, %v4152
        %v4154 = vpop.f32.mrb[0].mxu0
        %v4155 = vpop.f32.mrb[0].mxu0
        %v4156 = vadd.f32 0.0, %v4155
        %v4157 = vpop.f32.mrb[0].mxu0
        %4158 = vmatprep.mubr.bf16.mxu0 0
        %4159 = vmatmul.mubr.bf16.gmra.mrb[0].mxu0 %v3670
        %v4160 = vpop.f32.mrb[0].mxu0
        %v4161 = vadd.f32 0.0, %v4160
        %v4162 = vpop.f32.mrb[0].mxu0
        %v4163 = vpop.f32.mrb[0].mxu0
        %v4164 = vadd.f32 0.0, %v4163
        %v4165 = vpop.f32.mrb[0].mxu0
        %4166 = vmatprep.mubr.bf16.mxu0 0
        %4167 = vmatmul.mubr.bf16.gmra.mrb[0].mxu0 %v3673
        %v4168 = vpop.f32.mrb[0].mxu0
        %v4169 = vadd.f32 0.0, %v4168
        %v4170 = vpop.f32.mrb[0].mxu0
        %v4171 = vpop.f32.mrb[0].mxu0
        %v4172 = vadd.f32 0.0, %v4171
        %v4173 = vpop.f32.mrb[0].mxu0
        %4174 = vmatprep.mubr.bf16.mxu0 0
        %4175 = vmatmul.mubr.bf16.gmra.mrb[0].mxu0 %v3676
        %v4176 = vpop.f32.mrb[0].mxu0
        %v4177 = vadd.f32 0.0, %v4176
        %v4178 = vpop.f32.mrb[0].mxu0
        %v4179 = vpop.f32.mrb[0].mxu0
        %v4180 = vadd.f32 0.0, %v4179
        %v4181 = vpop.f32.mrb[0].mxu0
        %4182 = vmatprep.mubr.bf16.mxu0 0
        %4183 = vmatmul.mubr.bf16.gmra.mrb[0].mxu0 %v3679
        %v4184 = vpop.f32.mrb[0].mxu0
        %v4185 = vadd.f32 0.0, %v4184
        %v4186 = vpop.f32.mrb[0].mxu0
        %v4187 = vpop.f32.mrb[0].mxu0
        %v4188 = vadd.f32 0.0, %v4187
        %v4189 = vpop.f32.mrb[0].mxu0
        %4190 = vmatprep.mubr.bf16.mxu0 0
        %4191 = vmatmul.mubr.bf16.gmra.mrb[0].mxu0 %v3682
        %v4192 = vpop.f32.mrb[0].mxu0
        %v4193 = vadd.f32 0.0, %v4192
        %v4194 = vpop.f32.mrb[0].mxu0
        %v4195 = vpop.f32.mrb[0].mxu0
        %v4196 = vadd.f32 0.0, %v4195
        %v4197 = vpop.f32.mrb[0].mxu0
        %4198 = vdwg.mxu0
        %v4199 = vpack.c.bf16 %v4140, %v4137
        %v4200 = vpack.c.bf16 %v4148, %v4145
        %v4201 = vpack.c.bf16 %v4156, %v4153
        %v4202 = vpack.c.bf16 %v4164, %v4161
        %v4203 = vpack.c.bf16 %v4172, %v4169
        %v4204 = vpack.c.bf16 %v4180, %v4177
        %v4205 = vpack.c.bf16 %v4188, %v4185
        %v4206 = vpack.c.bf16 %v4196, %v4193
        %s4207 = scalar_lea.vmem %s11, 64
        %v4208 = vld [vmem:[%s4207] sm:$0xf]
        %v4209 = vld [vmem:[%s4207 + $0x4] sm:$0xf]
        %v4210 = vld [vmem:[%s4207 + $0x8] sm:$0xf]
        %v4211 = vld [vmem:[%s4207 + $0xc] sm:$0xf]
        %v4212 = vld [vmem:[%s4207 + $0x10] sm:$0xf]
        %v4213 = vld [vmem:[%s4207 + $0x14] sm:$0xf]
        %v4214 = vld [vmem:[%s4207 + $0x18] sm:$0xf]
        %v4215 = vld [vmem:[%s4207 + $0x1c] sm:$0xf]
        %v4224 = vunpack.c.l.b16 %v4208
        %v4225 = vunpack.c.l.b16 %v4209
        %v4226 = vunpack.c.l.b16 %v4210
        %v4227 = vunpack.c.l.b16 %v4211
        %v4228 = vunpack.c.l.b16 %v4212
        %v4229 = vunpack.c.l.b16 %v4213
        %v4230 = vunpack.c.l.b16 %v4214
        %v4231 = vunpack.c.l.b16 %v4215
        %v4232 = vpack.c.b16 %v4225, %v4224
        %v4233 = vpack.c.b16 %v4227, %v4226
        %v4234 = vpack.c.b16 %v4229, %v4228
        %v4235 = vpack.c.b16 %v4231, %v4230
        %4240 = vmatprep.subr.bf16.mxu0 0
        %4241 = vmatpush1.bf16.msra.mxu0 %v4199
        %4242 = vmatprep.subr.bf16.mxu0 0
        %4243 = vmatpush1.bf16.msra.mxu0 %v4200
        %4244 = vmatprep.subr.bf16.mxu0 0
        %4245 = vmatpush1.bf16.msra.mxu0 %v4201
        %4246 = vmatprep.subr.bf16.mxu0 0
        %4247 = vmatpush1.bf16.msra.mxu0 %v4202
        %4248 = vmatprep.subr.bf16.mxu0 0
        %4249 = vmatpush1.bf16.msra.mxu0 %v4203
        %4250 = vmatprep.subr.bf16.mxu0 0
        %4251 = vmatpush1.bf16.msra.mxu0 %v4204
        %4252 = vmatprep.subr.bf16.mxu0 0
        %4253 = vmatpush1.bf16.msra.mxu0 %v4205
        %4254 = vmatprep.subr.bf16.mxu0 0
        %4255 = vmatpush1.bf16.msra.mxu0 %v4206
        %4256 = vmatprep.subr.bf16.mxu0 0
        %4257 = vmatpush1.bf16.msra.mxu0 0
        %4258 = vmatprep.subr.bf16.mxu0 0
        %4259 = vmatpush1.bf16.msra.mxu0 0
        %4260 = vmatprep.subr.bf16.mxu0 0
        %4261 = vmatpush1.bf16.msra.mxu0 0
        %4262 = vmatprep.subr.bf16.mxu0 0
        %4263 = vmatpush1.bf16.msra.mxu0 0
        %4264 = vmatprep.subr.bf16.mxu0 0
        %4265 = vmatpush1.bf16.msra.mxu0 0
        %4266 = vmatprep.subr.bf16.mxu0 0
        %4267 = vmatpush1.bf16.msra.mxu0 0
        %4268 = vmatprep.subr.bf16.mxu0 0
        %4269 = vmatpush1.bf16.msra.mxu0 0
        %4270 = vmatprep.subr.bf16.mxu0 0
        %4271 = vmatpush1.bf16.msra.mxu0 0
        %4272 = vmatprep.mubr.bf16.mxu0 0
        %4273 = vmatmul.mubr.bf16.gmra.mrb[0].mxu0 %v4232
        %v4274 = vpop.f32.mrb[0].mxu0
        %v4275 = vadd.f32 0.0, %v4274
        %v4276 = vpop.f32.mrb[0].mxu0
        %v4277 = vpop.f32.mrb[0].mxu0
        %v4278 = vadd.f32 0.0, %v4277
        %v4279 = vpop.f32.mrb[0].mxu0
        %4280 = vmatprep.mubr.bf16.mxu0 0
        %4281 = vmatmul.mubr.bf16.gmra.mrb[0].mxu0 %v4233
        %v4282 = vpop.f32.mrb[0].mxu0
        %v4283 = vadd.f32 0.0, %v4282
        %v4284 = vpop.f32.mrb[0].mxu0
        %v4285 = vpop.f32.mrb[0].mxu0
        %v4286 = vadd.f32 0.0, %v4285
        %v4287 = vpop.f32.mrb[0].mxu0
        %4288 = vmatprep.mubr.bf16.mxu0 0
        %4289 = vmatmul.mubr.bf16.gmra.mrb[0].mxu0 %v4234
        %v4290 = vpop.f32.mrb[0].mxu0
        %v4291 = vadd.f32 0.0, %v4290
        %v4292 = vpop.f32.mrb[0].mxu0
        %v4293 = vpop.f32.mrb[0].mxu0
        %v4294 = vadd.f32 0.0, %v4293
        %v4295 = vpop.f32.mrb[0].mxu0
        %4296 = vmatprep.mubr.bf16.mxu0 0
        %4297 = vmatmul.mubr.bf16.gmra.mrb[0].mxu0 %v4235
        %v4298 = vpop.f32.mrb[0].mxu0
        %v4299 = vadd.f32 0.0, %v4298
        %v4300 = vpop.f32.mrb[0].mxu0
        %v4301 = vpop.f32.mrb[0].mxu0
        %v4302 = vadd.f32 0.0, %v4301
        %v4303 = vpop.f32.mrb[0].mxu0
        %4304 = vdwg.mxu0
        %v4305 = vadd.f32 %v4067, %v4275
        %v4306 = vadd.f32 %v4070, %v4278
        %v4307 = vadd.f32 %v4075, %v4283
        %v4308 = vadd.f32 %v4078, %v4286
        %v4309 = vadd.f32 %v4083, %v4291
        %v4310 = vadd.f32 %v4086, %v4294
        %v4311 = vadd.f32 %v4091, %v4299
        %v4312 = vadd.f32 %v4094, %v4302
        %v4313 = vld [vmem:[%s12] sm:$0xff]
        %v4314 = vld [vmem:[%s12 + $0x8] sm:$0xff]
        %v4315 = vld [vmem:[%s12 + $0x10] sm:$0xff]
        %v4316 = vld [vmem:[%s12 + $0x18] sm:$0xff]
        %v4317 = vld [vmem:[%s12 + $0x20] sm:$0xff]
        %v4318 = vld [vmem:[%s12 + $0x28] sm:$0xff]
        %v4319 = vld [vmem:[%s12 + $0x30] sm:$0xff]
        %v4320 = vld [vmem:[%s12 + $0x38] sm:$0xff]
        %4322 = vset.pattern.permute.xlu0 0
        %4323 = vperm.xlu0 %4322, %v4313
        %v4324 = vpop.permute.xlu0 %4323
        %4327 = vset.pattern.permute.xlu0 0
        %4328 = vperm.xlu0 %4327, %v4314
        %v4329 = vpop.permute.xlu0 %4328
        %4332 = vset.pattern.permute.xlu0 0
        %4333 = vperm.xlu0 %4332, %v4315
        %v4334 = vpop.permute.xlu0 %4333
        %4337 = vset.pattern.permute.xlu0 0
        %4338 = vperm.xlu0 %4337, %v4316
        %v4339 = vpop.permute.xlu0 %4338
        %4342 = vset.pattern.permute.xlu0 0
        %4343 = vperm.xlu0 %4342, %v4317
        %v4344 = vpop.permute.xlu0 %4343
        %4347 = vset.pattern.permute.xlu0 0
        %4348 = vperm.xlu0 %4347, %v4318
        %v4349 = vpop.permute.xlu0 %4348
        %4352 = vset.pattern.permute.xlu0 0
        %4353 = vperm.xlu0 %4352, %v4319
        %v4354 = vpop.permute.xlu0 %4353
        %4357 = vset.pattern.permute.xlu0 0
        %4358 = vperm.xlu0 %4357, %v4320
        %v4359 = vpop.permute.xlu0 %4358
        %v4361 = vadd.f32 %v4305, %v4324
        %v4362 = vadd.f32 %v4306, %v4329
        %v4363 = vadd.f32 %v4307, %v4334
        %v4364 = vadd.f32 %v4308, %v4339
        %v4365 = vadd.f32 %v4309, %v4344
        %v4366 = vadd.f32 %v4310, %v4349
        %v4367 = vadd.f32 %v4311, %v4354
        %v4368 = vadd.f32 %v4312, %v4359
        %v4369 = vmax.f32 %v4361, 0.0
        %v4370 = vmax.f32 %v4362, 0.0
        %v4371 = vmax.f32 %v4363, 0.0
        %v4372 = vmax.f32 %v4364, 0.0
        %v4373 = vmax.f32 %v4365, 0.0
        %v4374 = vmax.f32 %v4366, 0.0
        %v4375 = vmax.f32 %v4367, 0.0
        %v4376 = vmax.f32 %v4368, 0.0
        %4377 = vst.msk [vmem:[%s556] sm:$0xff] %vm2627, %v4369
        %4378 = vst.msk [vmem:[%s556 + $0x8] sm:$0xff] %vm2627, %v4370
        %4379 = vst.msk [vmem:[%s556 + $0x10] sm:$0xff] %vm2627, %v4371
        %4380 = vst.msk [vmem:[%s556 + $0x18] sm:$0xff] %vm2627, %v4372
        %4381 = vst.msk [vmem:[%s556 + $0x20] sm:$0xff] %vm2627, %v4373
        %4382 = vst.msk [vmem:[%s556 + $0x28] sm:$0xff] %vm2627, %v4374
        %4383 = vst.msk [vmem:[%s556 + $0x30] sm:$0xff] %vm2627, %v4375
        %4384 = vst.msk [vmem:[%s556 + $0x38] sm:$0xff] %vm2627, %v4376
        %s4385 = sand.u32 %s317, 1
        %s4386 = scalar_lea.sflag [#allocation3], %s4385
        %s4387 = sand.u32 %s317, 1
        %s4388 = smul.addr %s4387, 128
        %s4389 = scalar_lea.vmem [#allocation2], %s4388
        %p4390 = scmp.lt.s32.totalorder %s31, 1
        %s4391 = scalar_select %p4390, %s31, 1
        %s4392 = smul.addr %s4391, 16
        %s4393 = smul.addr %s4392, 8
        %s4394 = scalar_lea.vmem %s14, %s4393
        %p4395 = scmp.lt.s32.totalorder %s31, 1
        %s4396 = scalar_select %p4395, %s31, 1
        %s4397 = smul.addr %s4396, 16
        %s4398 = smul.addr %s4397, 8
        %s4399 = scalar_lea.vmem %s15, %s4398
        %p4400 = scmp.lt.s32.totalorder %s31, 1
        %s4401 = scalar_select %p4400, %s31, 1
        %s4402 = smul.addr %s4401, 8
        %s4403 = smul.addr %s4402, 8
        %s4404 = scalar_lea.vmem %s16, %s4403
        // Predicated region
        $region73: #{_backbone_fused_forward.1} parent=71 // pred_check
          %p4405 = pneg %p327
        $region74: #{_backbone_fused_forward.1} parent=71 // pred_check_branch
          %4407 = sbr.rel (%p4405) target = $region76
        $region75: #{_backbone_fused_forward.1} parent=71 // pred_region
          %s4409 = ssub.s32 2048, 2048
          %4410 = vsyncadd %s4386, %s4409
          %s4411 = smul.addr %s31, 16
          %s4412 = smul.addr %s4411, 128
          %s4413 = scalar_lea.hbm %s13, %s4412
          %s4414 = sshll.u32 %s4389, 4
          %s4415 = int_to_ptr.vmem [resolvable:$true] %s4414
          %4420 = dma.vmem_to_hbm [thread:$0]  %s4415, 2048, %s4413, %s4386, 128, 128, 8
        $region76: #{_backbone_fused_forward.1} parent=71 // pred_fallthru
          _
        // Predicated region
        $region77: #{_backbone_fused_forward.1} parent=71 // pred_check
          %p4421 = pneg %p353
        $region78: #{_backbone_fused_forward.1} parent=71 // pred_check_branch
          %4423 = sbr.rel (%p4421) target = $region80
        $region79: #{_backbone_fused_forward.1} parent=71 // pred_region
          _
        $region80: #{_backbone_fused_forward.1} parent=71 // pred_fallthru
          _
        // Predicated region
        $region81: #{_backbone_fused_forward.1} parent=71 // pred_check
          %p4424 = pneg %p379
        $region82: #{_backbone_fused_forward.1} parent=71 // pred_check_branch
          %4426 = sbr.rel (%p4424) target = $region84
        $region83: #{_backbone_fused_forward.1} parent=71 // pred_region
          _
        $region84: #{_backbone_fused_forward.1} parent=71 // pred_fallthru
          _
        // Predicated region
        $region85: #{_backbone_fused_forward.1} parent=71 // pred_check
          %p4427 = pneg %p405
        $region86: #{_backbone_fused_forward.1} parent=71 // pred_check_branch
          %4429 = sbr.rel (%p4427) target = $region88
        $region87: #{_backbone_fused_forward.1} parent=71 // pred_region
          _
        $region88: #{_backbone_fused_forward.1} parent=71 // pred_fallthru
          _
      $region72: #{_backbone_fused_forward.1} parent=5 // pred_fallthru
        _
      %p4430 = scmp.le.s32.totalorder 2, %s26
      // Predicated region
      $region89: #{_backbone_fused_forward.1} parent=5 // pred_check
        %p4431 = pneg %p4430
      $region90: #{_backbone_fused_forward.1} parent=5 // pred_check_branch
        %4433 = sbr.rel (%p4431) target = $region92
      $region91: #{_backbone_fused_forward.1} parent=5 // pred_region
        %s4434 = ssub.s32 %s26, 2
        // Predicated region
        $region93: #{_backbone_fused_forward.1} parent=91 // pred_check
          %p4435 = pneg %p333
        $region94: #{_backbone_fused_forward.1} parent=91 // pred_check_branch
          %4437 = sbr.rel (%p4435) target = $region96
        $region95: #{_backbone_fused_forward.1} parent=91 // pred_region
          %s4438 = sand.u32 %s318, 1
          %s4439 = scalar_lea.sflag [#allocation3], %s4438
          %s4440 = sand.u32 %s318, 1
          %s4441 = smul.addr %s4440, 128
          %s4442 = scalar_lea.vmem [#allocation2], %s4441
          %4443 = dma.done %s4439, 2048
        $region96: #{_backbone_fused_forward.1} parent=91 // pred_fallthru
          _
        // Predicated region
        $region97: #{_backbone_fused_forward.1} parent=91 // pred_check
          %p4444 = pneg %p359
        $region98: #{_backbone_fused_forward.1} parent=91 // pred_check_branch
          %4446 = sbr.rel (%p4444) target = $region100
        $region99: #{_backbone_fused_forward.1} parent=91 // pred_region
          %p4447 = scmp.lt.s32.totalorder %s32, 1
          %s4448 = scalar_select %p4447, %s32, 1
          %s4449 = smul.addr %s4448, 16
          %s4450 = smul.addr %s4449, 8
          %s4451 = scalar_lea.vmem %s14, %s4450
        $region100: #{_backbone_fused_forward.1} parent=91 // pred_fallthru
          _
        // Predicated region
        $region101: #{_backbone_fused_forward.1} parent=91 // pred_check
          %p4452 = pneg %p385
        $region102: #{_backbone_fused_forward.1} parent=91 // pred_check_branch
          %4454 = sbr.rel (%p4452) target = $region104
        $region103: #{_backbone_fused_forward.1} parent=91 // pred_region
          %p4455 = scmp.lt.s32.totalorder %s32, 1
          %s4456 = scalar_select %p4455, %s32, 1
          %s4457 = smul.addr %s4456, 16
          %s4458 = smul.addr %s4457, 8
          %s4459 = scalar_lea.vmem %s15, %s4458
        $region104: #{_backbone_fused_forward.1} parent=91 // pred_fallthru
          _
        // Predicated region
        $region105: #{_backbone_fused_forward.1} parent=91 // pred_check
          %p4460 = pneg %p411
        $region106: #{_backbone_fused_forward.1} parent=91 // pred_check_branch
          %4462 = sbr.rel (%p4460) target = $region108
        $region107: #{_backbone_fused_forward.1} parent=91 // pred_region
          %p4463 = scmp.lt.s32.totalorder %s32, 1
          %s4464 = scalar_select %p4463, %s32, 1
          %s4465 = smul.addr %s4464, 8
          %s4466 = smul.addr %s4465, 8
          %s4467 = scalar_lea.vmem %s16, %s4466
        $region108: #{_backbone_fused_forward.1} parent=91 // pred_fallthru
          _
      $region92: #{_backbone_fused_forward.1} parent=5 // pred_fallthru
        _
    $region6: #{_backbone_fused_forward.1} parent=1 // loop_footer
      %s30 = sadd.s32 1, %s26
    $region7: #{_backbone_fused_forward.1} parent=1 // loop_footer_branch
      %25 = sbr.rel target = $region3
    $region8: #{_backbone_fused_forward.1} parent=1 // loop_exit
      _
    %4468 = vsyncpa [#allocation3], 1
    %s4469 = scalar_lea.sflag [#allocation3], 1
    %4470 = vsyncpa %s4469, 1

</llo_original>
